<compile_context>
chip_gen: v7x
topology: tpu7x:2x2x1
jax: 0.10.0
libtpu: 0.0.40
codegen_flags: <defaults>
</compile_context>

<pallas_src>
import functools

import jax
import jax.numpy as jnp
from jax import lax
from jax.experimental import pallas as pl
from jax.experimental.pallas import tpu as pltpu


# ----------------------------------------------------------------------------
# Fused kernel: 1x1 conv (+folded BN) -> SiLU -> global avg pool -> Linear
# ----------------------------------------------------------------------------
def _classify_fused_kernel(x_ref, w1_ref, b1_ref, w2_ref, b2_ref, o_ref,
                           acc_ref, *, inv_hw, hw, masked):
    # grid = (N, n_spatial_tiles); spatial axis (axis 1) is the pooling reduction.
    t = pl.program_id(1)

    @pl.when(t == 0)
    def _init():
        acc_ref[...] = jnp.zeros_like(acc_ref)

    # x tile is (Cin, t_hw): HW on the lane axis (contiguous HBM DMA), Cin on
    # the sublane axis, contracted on the MXU with a transposed-LHS dot in bf16.
    xb = x_ref[0].astype(jnp.bfloat16)                               # (Cin, t_hw)
    y = lax.dot_general(xb, w1_ref[...],
                        dimension_numbers=(((0,), (0,)), ((), ())),
                        preferred_element_type=jnp.float32)          # (t_hw, 1280)
    y = y + b1_ref[...]                  # folded-BN bias, (1, 1280) lane-dense
    y = y * jax.nn.sigmoid(y)            # SiLU (EUP); f32 epilogue (v5e-safe)

    t_hw, c_ = y.shape
    if masked:
        # Spatial axis was zero-padded up to a multiple of 128: drop padded
        # pixels from the pool (they hold SiLU(bias), not zero).
        pix = t * t_hw + lax.broadcasted_iota(jnp.int32, (t_hw, 1), 0)
        y = jnp.where(pix < hw, y, 0.0)

    # Global-average-pool partial sum.  Fold sublane groups of 8 with dense
    # VALU adds; the single cross-sublane (XLU) 8->1 reduce runs once in
    # _finalize instead of on every tile.
    if t_hw % 8 == 0:
        acc_ref[...] += y.reshape(t_hw // 8, 8, c_).sum(axis=0)
    else:  # ragged full-HW block (e.g. 7x7 = 49 pixels)
        acc_ref[0:1, :] += jnp.sum(y, axis=0, keepdims=True)

    @pl.when(t == pl.num_programs(1) - 1)
    def _finalize():
        pooled = jnp.sum(acc_ref[...], axis=0, keepdims=True) * inv_hw  # (1, 1280)
        logits = jnp.dot(pooled.astype(jnp.bfloat16), w2_ref[...],
                         preferred_element_type=jnp.float32) + b2_ref[...]
        o_ref[0] = logits.astype(o_ref.dtype)                           # (1, c2)


def _spatial_tiling(hw, cin, itemsize, *, cap_lanes=512, single_block_budget=4 << 20):
    """Pick the spatial (lane-axis) tile for the (N, Cin, HW) input.

    Returns (t_hw, n_tiles, hw_padded).  t_hw is the *lane* axis of the x tile,
    so it must be a multiple of 128 or cover the full (possibly padded) HW.
    cap_lanes=512 keeps the per-tile VMEM small enough for v7x's 64 MiB VMEM
    even at Cin=1024 while still giving v5e/v6e multi-step pipelining.
    """
    cap = min(cap_lanes, hw)
    for cand in range((cap // 128) * 128, 0, -128):
        if hw % cand == 0:
            return cand, hw // cand, hw                   # aligned, no padding
    if hw * cin * itemsize <= single_block_budget:
        return hw, 1, hw                                  # small ragged HW: one block
    # Large, non-128-divisible HW: zero-pad + mask in-kernel (graceful on VMEM).
    hw_pad = pl.cdiv(hw, 128) * 128
    t_hw = 128
    for cand in range((min(cap_lanes, hw_pad) // 128) * 128, 0, -128):
        if hw_pad % cand == 0:
            t_hw = cand
            break
    return t_hw, hw_pad // t_hw, hw_pad


def classify_forward(x_nchw, params, *, single_block_budget=4 << 20):
    """YOLOv5 Classify forward. Accepts NCHW (or a list of NCHW tensors, which
    are concatenated on channels, matching the PyTorch module)."""
    if isinstance(x_nchw, (list, tuple)):
        x_nchw = jnp.concatenate(list(x_nchw), axis=1)

    N, Cin, H, W = x_nchw.shape
    HW = H * W
    w1, b1, w2, b2 = params["w1"], params["b1"], params["w2"], params["b2"]
    C_ = w1.shape[1]
    c2 = w2.shape[1]

    # (N, Cin, HW) is a free reshape of NCHW — no HBM transpose.  The kernel
    # casts each tile to bf16 for the MXU, so bf16 x from upstream also works.
    x3 = x_nchw.reshape(N, Cin, HW)
    t_hw, n_t, hw_pad = _spatial_tiling(HW, Cin, x3.dtype.itemsize,
                                        single_block_budget=single_block_budget)
    if hw_pad != HW:
        x3 = jnp.pad(x3, ((0, 0), (0, 0), (0, hw_pad - HW)))

    kernel = functools.partial(_classify_fused_kernel, inv_hw=1.0 / float(HW),
                               hw=HW, masked=(hw_pad != HW))

    cost = pl.CostEstimate(
        flops=2 * N * HW * Cin * C_ + 2 * N * C_ * c2,
        transcendentals=N * HW * C_,
        bytes_accessed=int(x3.size) * x3.dtype.itemsize
        + sum(int(p.size) * p.dtype.itemsize for p in (w1, b1, w2, b2))
        + N * c2 * 4)

    const = lambda n, t: (0, 0)   # weights / biases: block index never changes
    out = pl.pallas_call(
        kernel,
        out_shape=jax.ShapeDtypeStruct((N, 1, c2), jnp.float32),
        grid=(N, n_t),
        in_specs=[
            pl.BlockSpec((1, Cin, t_hw), lambda n, t: (n, 0, t)),           # x tile
            pl.BlockSpec((Cin, C_), const, pipeline_mode=pl.Buffered(1)),   # conv w (bf16)
            pl.BlockSpec((1, C_), const, pipeline_mode=pl.Buffered(1)),     # BN bias (f32)
            pl.BlockSpec((C_, c2), const, pipeline_mode=pl.Buffered(1)),    # linear w (bf16)
            pl.BlockSpec((1, c2), const, pipeline_mode=pl.Buffered(1)),     # linear bias
        ],
        out_specs=pl.BlockSpec((1, 1, c2), lambda n, t: (n, 0, 0)),
        scratch_shapes=[pltpu.VMEM((8, C_), jnp.float32)],   # pool accumulator (f32)
        compiler_params=pltpu.CompilerParams(
            dimension_semantics=("parallel", "arbitrary"),
            vmem_limit_bytes=48 * 1024 * 1024),
        cost_estimate=cost,
    )(x3, w1, b1, w2, b2)
    return out.reshape(N, c2)


# ----------------------------------------------------------------------------
# Deterministic synthetic parameters (BN folded into scale/bias, scale into w1,
# then the matmul weights are stored in bf16 for the MXU).
# ----------------------------------------------------------------------------
def init_classify_params(key, c1, c2, c_=1280):
    eps = 1e-5  # nn.BatchNorm2d default
    ks = jax.random.split(key, 7)

    w_conv = 0.2 * jax.random.normal(ks[0], (c1, c_), jnp.float32)  # (Cin, Cout), 1x1 kernel
    gamma = 1.0 + 0.1 * jax.random.normal(ks[1], (c_,), jnp.float32)
    beta = 0.1 * jax.random.normal(ks[2], (c_,), jnp.float32)
    mean = 0.1 * jax.random.normal(ks[3], (c_,), jnp.float32)
    var = jax.nn.softplus(jax.random.normal(ks[4], (c_,), jnp.float32)) + 0.5

    scale = gamma / jnp.sqrt(var + eps)
    w1 = (w_conv * scale[None, :]).astype(jnp.bfloat16)   # fold BN scale, then bf16
    b1 = (beta - mean * scale).reshape(1, c_)              # folded BN bias (f32)

    w_lin = (0.05 * jax.random.normal(ks[5], (c_, c2), jnp.float32)).astype(jnp.bfloat16)
    b_lin = 0.1 * jax.random.normal(ks[6], (c2,), jnp.float32)
    return dict(w1=w1, b1=b1, w2=w_lin, b2=b_lin.reshape(1, c2))


# ----------------------------------------------------------------------------
# Pure-JAX reference (models the intended bf16-MXU / f32-accumulate numerics)
# ----------------------------------------------------------------------------
def _ref_classify(x_nchw, params):
    if isinstance(x_nchw, (list, tuple)):
        x_nchw = jnp.concatenate(list(x_nchw), axis=1)
    x = jnp.transpose(x_nchw, (0, 2, 3, 1)).astype(jnp.bfloat16).astype(jnp.float32)
    w1 = params["w1"].astype(jnp.float32)
    y = jnp.einsum("nhwc,cd->nhwd", x, w1) + params["b1"]            # 1x1 conv + BN
    y = y * jax.nn.sigmoid(y)                                         # SiLU
    pooled = jnp.mean(y, axis=(1, 2))                                 # AdaptiveAvgPool2d(1) + flatten
    return pooled @ params["w2"].astype(jnp.float32) + params["b2"]   # Dropout(p=0) = identity


if __name__ == "__main__":
    key = jax.random.PRNGKey(0)
    k1, k2, k3, k4, k5, k6 = jax.random.split(key, 6)

    def _check(x, params, **kw):
        out = jax.block_until_ready(classify_forward(x, params, **kw))
        ref = _ref_classify(x, params)
        assert out.shape == ref.shape, (out.shape, ref.shape)
        assert bool(jnp.all(jnp.isfinite(out)))
        err = float(jnp.max(jnp.abs(out - ref)))
        # bf16 MXU operands + bf16 pooled cast vs f32 reference accumulation
        assert bool(jnp.allclose(out, ref, rtol=1e-2, atol=5e-3)), err
        return out

    # 1) main case: batch=2, c1=4, 16x16 spatial (HW=256 -> one 256-lane tile)
    params_a = init_classify_params(k2, c1=4, c2=8)
    _check(jax.random.normal(k1, (2, 4, 16, 16), jnp.float32), params_a)

    # 2) multi-tile spatial reduction: 32x32 (HW=1024 -> two 512-lane tiles)
    _check(jax.random.normal(k3, (2, 4, 32, 32), jnp.float32), params_a)

    # 3) canonical YOLO head spatial size 7x7 (HW=49: ragged full-HW block)
    params_b = init_classify_params(k4, c1=16, c2=5)
    _check(jax.random.normal(k5, (1, 16, 7, 7), jnp.float32), params_b)

    # 4) forced zero-pad + in-kernel mask path (non-128-divisible HW, tiled)
    params_c = init_classify_params(k6, c1=8, c2=5)
    _check(jax.random.normal(k1, (1, 8, 7, 7), jnp.float32), params_c,
           single_block_budget=0)

    print("KERNEL_OK")
</pallas_src>

<mosaic_0001>
module attributes {stable_mosaic.version = 11 : i64} {
  func.func @_classify_fused_kernel(%arg0: i32, %arg1: i32, %arg2: memref<1x4x256xf32, #tpu.memory_space<vmem>>, %arg3: memref<4x1280xbf16, #tpu.memory_space<vmem>>, %arg4: memref<1x1280xf32, #tpu.memory_space<vmem>>, %arg5: memref<1280x8xbf16, #tpu.memory_space<vmem>>, %arg6: memref<1x8xf32, #tpu.memory_space<vmem>>, %arg7: memref<1x1x8xf32, #tpu.memory_space<vmem>>, %arg8: memref<8x1280xf32, #tpu.memory_space<vmem>>) attributes {dimension_semantics = [#tpu.dimension_semantics<parallel>, #tpu.dimension_semantics<arbitrary>], iteration_bounds = array<i64: 2, 1>, scalar_prefetch = 0 : i64, scratch_operands = 1 : i64, tpu.core_type = #tpu.core_type<tc>, window_params = [{transform_indices = @transform_0, window_bounds = array<i64: 1, 4, 256>}, {pipeline_mode = #tpu.pipeline_mode<synchronous>, transform_indices = @transform_1, window_bounds = array<i64: 4, 1280>}, {pipeline_mode = #tpu.pipeline_mode<synchronous>, transform_indices = @transform_2, window_bounds = array<i64: 1, 1280>}, {pipeline_mode = #tpu.pipeline_mode<synchronous>, transform_indices = @transform_3, window_bounds = array<i64: 1280, 8>}, {pipeline_mode = #tpu.pipeline_mode<synchronous>, transform_indices = @transform_4, window_bounds = array<i64: 1, 8>}, {transform_indices = @transform_5, window_bounds = array<i64: 1, 1, 8>}]} {
    %c0_i32 = arith.constant 0 : i32
    %0 = arith.cmpi eq, %arg1, %c0_i32 : i32
    %1 = arith.extui %0 : i1 to i32
    %c0_i32_0 = arith.constant 0 : i32
    %2 = arith.cmpi ne, %1, %c0_i32_0 : i32
    scf.if %2 {
      %cst_15 = arith.constant 0.000000e+00 : f32
      %25 = vector.broadcast %cst_15 : f32 to vector<8x1280xf32>
      %c0_16 = arith.constant 0 : index
      %c0_17 = arith.constant 0 : index
      %26 = vector.load %arg8[%c0_16, %c0_17] : memref<8x1280xf32, #tpu.memory_space<vmem>>, vector<8x1280xf32>
      tpu.vector_store %arg8[%c0_16, %c0_17], %25 {strides = array<i32>} : memref<8x1280xf32, #tpu.memory_space<vmem>>, vector<8x1280xf32>,
    } else {
    }
    %c0 = arith.constant 0 : index
    %c0_1 = arith.constant 0 : index
    %c0_2 = arith.constant 0 : index
    %3 = vector.load %arg2[%c0, %c0_1, %c0_2] : memref<1x4x256xf32, #tpu.memory_space<vmem>>, vector<1x4x256xf32>
    %4 = vector.shape_cast %3 : vector<1x4x256xf32> to vector<4x256xf32>
    %5 = arith.truncf %4 : vector<4x256xf32> to vector<4x256xbf16>
    %c0_3 = arith.constant 0 : index
    %c0_4 = arith.constant 0 : index
    %6 = vector.load %arg3[%c0_3, %c0_4] : memref<4x1280xbf16, #tpu.memory_space<vmem>>, vector<4x1280xbf16>
    %cst = arith.constant dense<0.000000e+00> : vector<256x1280xf32>
    %7 = tpu.matmul %5, %6, %cst {dimension_numbers = #tpu.dot_dimension_numbers<[0], [0], [1], [1], [0, 1, 1, 1], [], []>} : vector<4x256xbf16>, vector<4x1280xbf16>, vector<256x1280xf32> -> vector<256x1280xf32>
    %c0_5 = arith.constant 0 : index
    %c0_6 = arith.constant 0 : index
    %8 = vector.load %arg4[%c0_5, %c0_6] : memref<1x1280xf32, #tpu.memory_space<vmem>>, vector<1x1280xf32>
    %9 = vector.broadcast %8 : vector<1x1280xf32> to vector<256x1280xf32>
    %10 = arith.addf %7, %9 : vector<256x1280xf32>
    %11 = arith.negf %10 : vector<256x1280xf32>
    %12 = math.exp %11 : vector<256x1280xf32>
    %cst_7 = arith.constant 1.000000e+00 : f32
    %13 = vector.broadcast %cst_7 : f32 to vector<256x1280xf32>
    %14 = arith.addf %13, %12 : vector<256x1280xf32>
    %15 = arith.divf %13, %14 : vector<256x1280xf32>
    %16 = arith.mulf %10, %15 : vector<256x1280xf32>
    %c0_8 = arith.constant 0 : index
    %c0_9 = arith.constant 0 : index
    %17 = vector.load %arg8[%c0_8, %c0_9] : memref<8x1280xf32, #tpu.memory_space<vmem>>, vector<8x1280xf32>
    %18 = vector.shape_cast %16 : vector<256x1280xf32> to vector<32x8x1280xf32>
    %cst_10 = arith.constant dense<0.000000e+00> : vector<8x1280xf32>
    %19 = vector.multi_reduction <add>, %18, %cst_10 [0] : vector<32x8x1280xf32> to vector<8x1280xf32>
    %20 = arith.addf %17, %19 : vector<8x1280xf32>
    %c0_11 = arith.constant 0 : index
    %c0_12 = arith.constant 0 : index
    %21 = vector.load %arg8[%c0_11, %c0_12] : memref<8x1280xf32, #tpu.memory_space<vmem>>, vector<8x1280xf32>
    tpu.vector_store %arg8[%c0_11, %c0_12], %20 {strides = array<i32>} : memref<8x1280xf32, #tpu.memory_space<vmem>>, vector<8x1280xf32>,
    %c0_i32_13 = arith.constant 0 : i32
    %22 = arith.cmpi eq, %arg1, %c0_i32_13 : i32
    %23 = arith.extui %22 : i1 to i32
    %c0_i32_14 = arith.constant 0 : i32
    %24 = arith.cmpi ne, %23, %c0_i32_14 : i32
    scf.if %24 {
      %c0_15 = arith.constant 0 : index
      %c0_16 = arith.constant 0 : index
      %25 = vector.load %arg8[%c0_15, %c0_16] : memref<8x1280xf32, #tpu.memory_space<vmem>>, vector<8x1280xf32>
      %cst_17 = arith.constant dense<0.000000e+00> : vector<1280xf32>
      %26 = vector.multi_reduction <add>, %25, %cst_17 [0] : vector<8x1280xf32> to vector<1280xf32>
      %27 = vector.shape_cast %26 : vector<1280xf32> to vector<1x1280xf32>
      %cst_18 = arith.constant 3.906250e-03 : f32
      %28 = vector.broadcast %cst_18 : f32 to vector<1x1280xf32>
      %29 = arith.mulf %27, %28 : vector<1x1280xf32>
      %30 = arith.truncf %29 : vector<1x1280xf32> to vector<1x1280xbf16>
      %c0_19 = arith.constant 0 : index
      %c0_20 = arith.constant 0 : index
      %31 = vector.load %arg5[%c0_19, %c0_20] : memref<1280x8xbf16, #tpu.memory_space<vmem>>, vector<1280x8xbf16>
      %cst_21 = arith.constant dense<0.000000e+00> : vector<1x8xf32>
      %32 = tpu.matmul %30, %31, %cst_21 {dimension_numbers = #tpu.dot_dimension_numbers<[1], [0], [0], [1], [0, 0, 1, 1], [], []>} : vector<1x1280xbf16>, vector<1280x8xbf16>, vector<1x8xf32> -> vector<1x8xf32>
      %c0_22 = arith.constant 0 : index
      %c0_23 = arith.constant 0 : index
      %33 = vector.load %arg6[%c0_22, %c0_23] : memref<1x8xf32, #tpu.memory_space<vmem>>, vector<1x8xf32>
      %34 = arith.addf %32, %33 : vector<1x8xf32>
      %c0_24 = arith.constant 0 : index
      %c0_25 = arith.constant 0 : index
      %c0_26 = arith.constant 0 : index
      %35 = vector.load %arg7[%c0_24, %c0_25, %c0_26] : memref<1x1x8xf32, #tpu.memory_space<vmem>>, vector<1x1x8xf32>
      %36 = vector.shape_cast %35 : vector<1x1x8xf32> to vector<1x8xf32>
      %37 = vector.shape_cast %34 : vector<1x8xf32> to vector<1x1x8xf32>
      tpu.vector_store %arg7[%c0_24, %c0_25, %c0_26], %37 {strides = array<i32>} : memref<1x1x8xf32, #tpu.memory_space<vmem>>, vector<1x1x8xf32>,
    } else {
    }
    return
  }
  func.func @transform_0(%arg0: i32, %arg1: i32) -> (i32, i32, i32) {
    %c0_i32 = arith.constant 0 : i32
    %c0_i32_0 = arith.constant 0 : i32
    return %arg0, %c0_i32, %arg1 : i32, i32, i32
  }
  func.func @transform_1(%arg0: i32, %arg1: i32) -> (i32, i32) {
    %c0_i32 = arith.constant 0 : i32
    %c0_i32_0 = arith.constant 0 : i32
    %c0_i32_1 = arith.constant 0 : i32
    return %c0_i32, %c0_i32_0 : i32, i32
  }
  func.func @transform_2(%arg0: i32, %arg1: i32) -> (i32, i32) {
    %c0_i32 = arith.constant 0 : i32
    %c0_i32_0 = arith.constant 0 : i32
    %c0_i32_1 = arith.constant 0 : i32
    return %c0_i32, %c0_i32_0 : i32, i32
  }
  func.func @transform_3(%arg0: i32, %arg1: i32) -> (i32, i32) {
    %c0_i32 = arith.constant 0 : i32
    %c0_i32_0 = arith.constant 0 : i32
    %c0_i32_1 = arith.constant 0 : i32
    return %c0_i32, %c0_i32_0 : i32, i32
  }
  func.func @transform_4(%arg0: i32, %arg1: i32) -> (i32, i32) {
    %c0_i32 = arith.constant 0 : i32
    %c0_i32_0 = arith.constant 0 : i32
    %c0_i32_1 = arith.constant 0 : i32
    return %c0_i32, %c0_i32_0 : i32, i32
  }
  func.func @transform_5(%arg0: i32, %arg1: i32) -> (i32, i32, i32) {
    %c0_i32 = arith.constant 0 : i32
    %c0_i32_0 = arith.constant 0 : i32
    %c0_i32_1 = arith.constant 0 : i32
    return %arg0, %c0_i32, %c0_i32_0 : i32, i32, i32
  }
}

</mosaic_0001>

<llo_original>
// kernel: tpu_custom_call.1
$region0: #{tpu_custom_call.1}
  #allocation0 [shape = 'u32[]', space=smem, size = 0x4, offset = 0x4, fixed_abs, tag = 'smem constant byte address 0x4 - core index']
  #allocation1 [shape = 'u32[144,128]{1,0:T(1,128)}', space=vmem, size = 0x12000, scoped, tag = 'internal scratch']
  #allocation2 [shape = 'f32[8,1280]{1,0:T(8,128)}', space=vmem, size = 0xa000, scoped, tag = 'scratch operand']
  %s0 = inlined_call_operand.vmem [shape: f32[2,4,256], index: 0, kind: input, shape index: {}]
  %s1 = inlined_call_operand.vmem [shape: bf16[4,1280], index: 1, kind: input, shape index: {}]
  %s2 = inlined_call_operand.vmem [shape: f32[1,1280], index: 2, kind: input, shape index: {}]
  %s3 = inlined_call_operand.vmem [shape: bf16[1280,8], index: 3, kind: input, shape index: {}]
  %s4 = inlined_call_operand.vmem [shape: f32[1,8], index: 4, kind: input, shape index: {}]
  %s5 = inlined_call_operand.hbm [shape: f32[2,1,8], index: 5, kind: output, shape index: {}]
  %s6 = sld [smem:[#allocation0]]
  $region61: #{tpu_custom_call.1} parent=0
    _
  %s8 = ssub.s32 1, %s6
  %s9 = scalar_select 0, %s8, %s6
  $region1: #{tpu_custom_call.1} parent=0
    #allocation3 [shape = 'u8[1024]{0}', space=vmem, size = 0x400, scoped, tag = 'output window, operand 0']
    #allocation4 [shape = 's32[2]{0}', space=sflag, size = 0x8, scoped, tag = 'scoped memory for tpu_custom_call.1']
    %10 = vsyncpa [#allocation4], 0
    %s11 = scalar_lea.sflag [#allocation4], 1
    %12 = vsyncpa %s11, 0
    loop: start=0, step=1, limit=4
    $region2: #{tpu_custom_call.1} parent=1 // loop_pre_header
      _
    $region3: #{tpu_custom_call.1} parent=1 // loop_header
      %s14 = sphi 0, %s18
      %p15 = scmp.ge.s32.totalorder %s14, 4
      %s21 = sphi 0, %s33
      %s22 = sphi 0, %s29
      %s23 = sphi 0, %s21
      %s24 = sphi 0, %s22
      %s25 = sphi 0, %s23
      %s26 = sphi 0, %s24
      %s38 = sphi 0, %s40
      %s41 = sphi 0, %s38
      %s42 = sphi 0, %s41
      %s58 = sphi 0, %s42
      %s62 = sphi 0, %s62
      %s64 = sphi 0, %s62
      %s65 = sphi 0, %s64
      %s79 = sphi 0, %s65
      %s83 = sphi 0, %s83
      %s85 = sphi 0, %s83
      %s86 = sphi 0, %s85
      %s100 = sphi 0, %s86
      %s104 = sphi 0, %s104
      %s106 = sphi 0, %s104
      %s107 = sphi 0, %s106
      %s121 = sphi 0, %s107
      %s125 = sphi 0, %s125
      %s127 = sphi 0, %s125
      %s128 = sphi 0, %s127
      %s142 = sphi 0, %s128
      %s148 = sphi 0, %s150
      %s151 = sphi 0, %s148
      %s152 = sphi 0, %s151
      %s168 = sphi 0, %s152
    $region4: #{tpu_custom_call.1} parent=1 // loop_header_branch
      %17 = sbr.rel (%p15) target = $region8
    $region5: #{tpu_custom_call.1} parent=1 // loop_body
      %s19 = ssub.s32 %s14, 1
      %s20 = ssub.s32 %s14, 2
      %s27 = sadd.s32 1, %s22
      %p28 = scmp.ge.s32.totalorder %s27, 1
      %s29 = scalar_select %p28, 0, %s27
      %s30 = sadd.s32 1, %s21
      %s31 = scalar_select %p28, %s30, %s21
      %p32 = scmp.ge.s32.totalorder %s31, 2
      %s33 = scalar_select %p32, 0, %s31
      %s34 = ssub.s32 %s21, %s33
      %s35 = ssub.s32 %s22, %s29
      %s36 = sor.u32 %s34, %s35
      %p37 = scmp.eq.s32.totalorder %s36, 0
      %s39 = sadd.s32 %s38, 1
      %s40 = scalar_select %p37, %s38, %s39
      %p43 = pneg %p37
      %p44 = scmp.eq.s32.totalorder %s14, 1
      %p45 = por %p43, %p44
      %p46 = scmp.ne.s32.totalorder %s38, %s41
      %p47 = scmp.eq.s32.totalorder %s14, 0
      %p48 = por %p46, %p47
      %p49 = scmp.ne.s32.totalorder %s38, %s41
      %p50 = scmp.eq.s32.totalorder %s19, 1
      %p51 = por %p49, %p50
      %p52 = scmp.ne.s32.totalorder %s41, %s42
      %p53 = scmp.eq.s32.totalorder %s19, 0
      %p54 = por %p52, %p53
      %p55 = scmp.ne.s32.totalorder %s41, %s42
      %p56 = scmp.eq.s32.totalorder %s20, 1
      %p57 = por %p55, %p56
      %p59 = scmp.ne.s32.totalorder %s42, %s58
      %p60 = scmp.eq.s32.totalorder %s20, 0
      %p61 = por %p59, %p60
      %s63 = sadd.s32 %s62, 1
      %p66 = scmp.eq.s32.totalorder %s14, 1
      %p67 = scmp.ne.s32.totalorder %s62, %s64
      %p68 = scmp.eq.s32.totalorder %s14, 0
      %p69 = por %p67, %p68
      %p70 = scmp.ne.s32.totalorder %s62, %s64
      %p71 = scmp.eq.s32.totalorder %s19, 1
      %p72 = por %p70, %p71
      %p73 = scmp.ne.s32.totalorder %s64, %s65
      %p74 = scmp.eq.s32.totalorder %s19, 0
      %p75 = por %p73, %p74
      %p76 = scmp.ne.s32.totalorder %s64, %s65
      %p77 = scmp.eq.s32.totalorder %s20, 1
      %p78 = por %p76, %p77
      %p80 = scmp.ne.s32.totalorder %s65, %s79
      %p81 = scmp.eq.s32.totalorder %s20, 0
      %p82 = por %p80, %p81
      %s84 = sadd.s32 %s83, 1
      %p87 = scmp.eq.s32.totalorder %s14, 1
      %p88 = scmp.ne.s32.totalorder %s83, %s85
      %p89 = scmp.eq.s32.totalorder %s14, 0
      %p90 = por %p88, %p89
      %p91 = scmp.ne.s32.totalorder %s83, %s85
      %p92 = scmp.eq.s32.totalorder %s19, 1
      %p93 = por %p91, %p92
      %p94 = scmp.ne.s32.totalorder %s85, %s86
      %p95 = scmp.eq.s32.totalorder %s19, 0
      %p96 = por %p94, %p95
      %p97 = scmp.ne.s32.totalorder %s85, %s86
      %p98 = scmp.eq.s32.totalorder %s20, 1
      %p99 = por %p97, %p98
      %p101 = scmp.ne.s32.totalorder %s86, %s100
      %p102 = scmp.eq.s32.totalorder %s20, 0
      %p103 = por %p101, %p102
      %s105 = sadd.s32 %s104, 1
      %p108 = scmp.eq.s32.totalorder %s14, 1
      %p109 = scmp.ne.s32.totalorder %s104, %s106
      %p110 = scmp.eq.s32.totalorder %s14, 0
      %p111 = por %p109, %p110
      %p112 = scmp.ne.s32.totalorder %s104, %s106
      %p113 = scmp.eq.s32.totalorder %s19, 1
      %p114 = por %p112, %p113
      %p115 = scmp.ne.s32.totalorder %s106, %s107
      %p116 = scmp.eq.s32.totalorder %s19, 0
      %p117 = por %p115, %p116
      %p118 = scmp.ne.s32.totalorder %s106, %s107
      %p119 = scmp.eq.s32.totalorder %s20, 1
      %p120 = por %p118, %p119
      %p122 = scmp.ne.s32.totalorder %s107, %s121
      %p123 = scmp.eq.s32.totalorder %s20, 0
      %p124 = por %p122, %p123
      %s126 = sadd.s32 %s125, 1
      %p129 = scmp.eq.s32.totalorder %s14, 1
      %p130 = scmp.ne.s32.totalorder %s125, %s127
      %p131 = scmp.eq.s32.totalorder %s14, 0
      %p132 = por %p130, %p131
      %p133 = scmp.ne.s32.totalorder %s125, %s127
      %p134 = scmp.eq.s32.totalorder %s19, 1
      %p135 = por %p133, %p134
      %p136 = scmp.ne.s32.totalorder %s127, %s128
      %p137 = scmp.eq.s32.totalorder %s19, 0
      %p138 = por %p136, %p137
      %p139 = scmp.ne.s32.totalorder %s127, %s128
      %p140 = scmp.eq.s32.totalorder %s20, 1
      %p141 = por %p139, %p140
      %p143 = scmp.ne.s32.totalorder %s128, %s142
      %p144 = scmp.eq.s32.totalorder %s20, 0
      %p145 = por %p143, %p144
      %s146 = ssub.s32 %s21, %s33
      %p147 = scmp.eq.s32.totalorder %s146, 0
      %s149 = sadd.s32 %s148, 1
      %s150 = scalar_select %p147, %s148, %s149
      %p153 = pneg %p147
      %p154 = scmp.eq.s32.totalorder %s14, 1
      %p155 = por %p153, %p154
      %p156 = scmp.ne.s32.totalorder %s148, %s151
      %p157 = scmp.eq.s32.totalorder %s14, 0
      %p158 = por %p156, %p157
      %p159 = scmp.ne.s32.totalorder %s148, %s151
      %p160 = scmp.eq.s32.totalorder %s19, 1
      %p161 = por %p159, %p160
      %p162 = scmp.ne.s32.totalorder %s151, %s152
      %p163 = scmp.eq.s32.totalorder %s19, 0
      %p164 = por %p162, %p163
      %p165 = scmp.ne.s32.totalorder %s151, %s152
      %p166 = scmp.eq.s32.totalorder %s20, 1
      %p167 = por %p165, %p166
      %p169 = scmp.ne.s32.totalorder %s152, %s168
      %p170 = scmp.eq.s32.totalorder %s20, 0
      %p171 = por %p169, %p170
      %p172 = scmp.le.s32.totalorder 1, %s14
      %p173 = scmp.lt.s32.totalorder %s14, 3
      %p174 = pnand %p172, %p173
      %p175 = pneg %p174
      // Predicated region
      $region9: #{tpu_custom_call.1} parent=5 // pred_check
        _
      $region10: #{tpu_custom_call.1} parent=5 // pred_check_branch
        %177 = sbr.rel (%p174) target = $region12
      $region11: #{tpu_custom_call.1} parent=5 // pred_region
        %s178 = ssub.s32 %s14, 1
        // Predicated region
        $region13: #{tpu_custom_call.1} parent=11 // pred_check
          %p179 = pneg %p75
        $region14: #{tpu_custom_call.1} parent=11 // pred_check_branch
          %181 = sbr.rel (%p179) target = $region16
        $region15: #{tpu_custom_call.1} parent=11 // pred_region
          _
        $region16: #{tpu_custom_call.1} parent=11 // pred_fallthru
          _
        // Predicated region
        $region17: #{tpu_custom_call.1} parent=11 // pred_check
          %p182 = pneg %p96
        $region18: #{tpu_custom_call.1} parent=11 // pred_check_branch
          %184 = sbr.rel (%p182) target = $region20
        $region19: #{tpu_custom_call.1} parent=11 // pred_region
          _
        $region20: #{tpu_custom_call.1} parent=11 // pred_fallthru
          _
        // Predicated region
        $region21: #{tpu_custom_call.1} parent=11 // pred_check
          %p185 = pneg %p117
        $region22: #{tpu_custom_call.1} parent=11 // pred_check_branch
          %187 = sbr.rel (%p185) target = $region24
        $region23: #{tpu_custom_call.1} parent=11 // pred_region
          _
        $region24: #{tpu_custom_call.1} parent=11 // pred_fallthru
          _
        // Predicated region
        $region25: #{tpu_custom_call.1} parent=11 // pred_check
          %p188 = pneg %p138
        $region26: #{tpu_custom_call.1} parent=11 // pred_check_branch
          %190 = sbr.rel (%p188) target = $region28
        $region27: #{tpu_custom_call.1} parent=11 // pred_region
          _
        $region28: #{tpu_custom_call.1} parent=11 // pred_fallthru
          _
      $region12: #{tpu_custom_call.1} parent=5 // pred_fallthru
        _
      %p191 = scmp.lt.s32.totalorder %s14, 2
      // Predicated region
      $region29: #{tpu_custom_call.1} parent=5 // pred_check
        %p192 = pneg %p191
      $region30: #{tpu_custom_call.1} parent=5 // pred_check_branch
        %194 = sbr.rel (%p192) target = $region32
      $region31: #{tpu_custom_call.1} parent=5 // pred_region
        // Predicated region
        $region33: #{tpu_custom_call.1} parent=31 // pred_check
          %p195 = pneg %p48
        $region34: #{tpu_custom_call.1} parent=31 // pred_check_branch
          %197 = sbr.rel (%p195) target = $region36
        $region35: #{tpu_custom_call.1} parent=31 // pred_region
          %s198 = smul.u32 2, %s22
          %p199 = scmp.lt.s32.totalorder %s21, 1
          %s200 = scalar_select %p199, %s21, 1
          %p201 = scmp.lt.s32.totalorder %s198, 1
          %s202 = scalar_select %p201, %s198, 1
          %s203 = smul.addr %s200, 2
          %s204 = sadd.s32 %s202, %s203
          %s205 = smul.addr %s204, 4
          %s206 = scalar_lea.vmem %s0, %s205
          %s207 = smul.u32 2, %s22
        $region36: #{tpu_custom_call.1} parent=31 // pred_fallthru
          _
      $region32: #{tpu_custom_call.1} parent=5 // pred_fallthru
        _
      %p208 = scmp.le.s32.totalorder 1, %s14
      %p209 = scmp.lt.s32.totalorder %s14, 3
      %p210 = pnand %p208, %p209
      %p211 = pneg %p210
      // Predicated region
      $region37: #{tpu_custom_call.1} parent=5 // pred_check
        _
      $region38: #{tpu_custom_call.1} parent=5 // pred_check_branch
        %213 = sbr.rel (%p210) target = $region40
      $region39: #{tpu_custom_call.1} parent=5 // pred_region
        %s214 = ssub.s32 %s14, 1
        %s215 = smul.u32 2, %s24
        %p216 = scmp.lt.s32.totalorder %s23, 1
        %s217 = scalar_select %p216, %s23, 1
        %p218 = scmp.lt.s32.totalorder %s215, 1
        %s219 = scalar_select %p218, %s215, 1
        %s220 = smul.addr %s217, 2
        %s221 = sadd.s32 %s219, %s220
        %s222 = smul.addr %s221, 4
        %s223 = scalar_lea.vmem %s0, %s222
        %p224 = pneg %p54
        %p225 = pneg %p51
        %p226 = pneg %p75
        %p227 = pneg %p72
        %p228 = pneg %p96
        %p229 = pneg %p93
        %p230 = pneg %p117
        %p231 = pneg %p114
        %p232 = pneg %p138
        %p233 = pneg %p135
        %p234 = pneg %p164
        %p235 = pneg %p161
        %s236 = sand.u32 %s151, 1
        %s237 = scalar_lea.sflag [#allocation4], %s236
        %s238 = sand.u32 %s151, 1
        %s239 = scalar_lea.vmem [#allocation3], %s238
        %s240 = smul.u32 2, %s24
        %p241 = scmp.lt.s32.totalorder %s23, 1
        %s242 = scalar_select %p241, %s23, 1
        %p243 = scmp.lt.s32.totalorder %s240, 1
        %s244 = scalar_select %p243, %s240, 1
        %s245 = smul.addr %s242, 2
        %s246 = sadd.s32 %s244, %s245
        %s247 = smul.addr %s246, 4
        %s248 = scalar_lea.vmem %s0, %s247
        %s249 = smul.u32 2, %s24
        %p251 = scmp.eq.s32.totalorder %s24, 0
        // Predicated region
        $region41: #{tpu_custom_call.1} parent=39 // pred_check
          %p252 = pneg %p251
        $region42: #{tpu_custom_call.1} parent=39 // pred_check_branch
          %254 = sbr.rel (%p252) target = $region44
        $region43: #{tpu_custom_call.1} parent=39 // pred_region
          %255 = vst [vmem:[#allocation2] sm:$0xff] 0.0
          %256 = vst [vmem:[#allocation2 + $0x8] sm:$0xff] 0.0
          %257 = vst [vmem:[#allocation2 + $0x10] sm:$0xff] 0.0
          %258 = vst [vmem:[#allocation2 + $0x18] sm:$0xff] 0.0
          %259 = vst [vmem:[#allocation2 + $0x20] sm:$0xff] 0.0
          %260 = vst [vmem:[#allocation2 + $0x28] sm:$0xff] 0.0
          %261 = vst [vmem:[#allocation2 + $0x30] sm:$0xff] 0.0
          %262 = vst [vmem:[#allocation2 + $0x38] sm:$0xff] 0.0
          %263 = vst [vmem:[#allocation2 + $0x40] sm:$0xff] 0.0
          %264 = vst [vmem:[#allocation2 + $0x48] sm:$0xff] 0.0
        $region44: #{tpu_custom_call.1} parent=39 // pred_fallthru
          _
        %v265 = vld [vmem:[%s248] sm:$0xff]
        %v267 = vcombine.high %v265, %v265
        %v269 = vpack.c.bf16 %v265, %v265
        %v270 = vpack.c.bf16 %v267, %v267
        %v271 = vld [vmem:[%s1] sm:$0xff]
        %v272 = vld [vmem:[%s1 + $0x8] sm:$0xff]
        %v273 = vld [vmem:[%s1 + $0x10] sm:$0xf]
        %v274 = vld [vmem:[%s2] sm:$0xff]
        %v275 = vld [vmem:[%s2 + $0x8] sm:$0x3]
        %v278 = vlaneseq
        %v279 = vshrl.u32 %v278, 7
        %v280 = vsub.s32 0, %v279
        %v281 = vrot.slane %v274, %v280
        %v282 = vlaneseq
        %v283 = vshrl.u32 %v282, 7
        %v284 = vsub.s32 1, %v283
        %v285 = vrot.slane %v274, %v284
        %v286 = vlaneseq
        %v287 = vshrl.u32 %v286, 7
        %v288 = vsub.s32 2, %v287
        %v289 = vrot.slane %v274, %v288
        %v290 = vlaneseq
        %v291 = vshrl.u32 %v290, 7
        %v292 = vsub.s32 3, %v291
        %v293 = vrot.slane %v274, %v292
        %v294 = vlaneseq
        %v295 = vshrl.u32 %v294, 7
        %v296 = vsub.s32 4, %v295
        %v297 = vrot.slane %v274, %v296
        %v298 = vlaneseq
        %v299 = vshrl.u32 %v298, 7
        %v300 = vsub.s32 5, %v299
        %v301 = vrot.slane %v274, %v300
        %v302 = vlaneseq
        %v303 = vshrl.u32 %v302, 7
        %v304 = vsub.s32 6, %v303
        %v305 = vrot.slane %v274, %v304
        %v306 = vlaneseq
        %v307 = vshrl.u32 %v306, 7
        %v308 = vsub.s32 7, %v307
        %v309 = vrot.slane %v274, %v308
        %v310 = vlaneseq
        %v311 = vshrl.u32 %v310, 7
        %v312 = vsub.s32 0, %v311
        %v313 = vrot.slane %v275, %v312
        %v314 = vlaneseq
        %v315 = vshrl.u32 %v314, 7
        %v316 = vsub.s32 1, %v315
        %v317 = vrot.slane %v275, %v316
        %328 = vxpose.xlu0.c.b16.start [1/8] %v269, 128
        %329 = vxpose.xlu0.c.b16.cont [2/8] 0, 128
        %330 = vxpose.xlu0.c.b16.cont [3/8] 0, 128
        %331 = vxpose.xlu0.c.b16.cont [4/8] 0, 128
        %332 = vxpose.xlu0.c.b16.cont [5/8] 0, 128
        %333 = vxpose.xlu0.c.b16.cont [6/8] 0, 128
        %334 = vxpose.xlu0.c.b16.cont [7/8] 0, 128
        %335 = vxpose.xlu0.c.b16.end [8/8] 0, 128
        %v336 = vpop.trf.xlu0
        %v337 = vpop.trf.xlu0
        %v338 = vpop.trf.xlu0
        %v339 = vpop.trf.xlu0
        %v340 = vpop.trf.xlu0
        %v341 = vpop.trf.xlu0
        %v342 = vpop.trf.xlu0
        %v343 = vpop.trf.xlu0
        %344 = vxpose.xlu0.c.b16.start [1/8] %v270, 128
        %345 = vxpose.xlu0.c.b16.cont [2/8] 0, 128
        %346 = vxpose.xlu0.c.b16.cont [3/8] 0, 128
        %347 = vxpose.xlu0.c.b16.cont [4/8] 0, 128
        %348 = vxpose.xlu0.c.b16.cont [5/8] 0, 128
        %349 = vxpose.xlu0.c.b16.cont [6/8] 0, 128
        %350 = vxpose.xlu0.c.b16.cont [7/8] 0, 128
        %351 = vxpose.xlu0.c.b16.end [8/8] 0, 128
        %v352 = vpop.trf.xlu0
        %v353 = vpop.trf.xlu0
        %v354 = vpop.trf.xlu0
        %v355 = vpop.trf.xlu0
        %v356 = vpop.trf.xlu0
        %v357 = vpop.trf.xlu0
        %v358 = vpop.trf.xlu0
        %v359 = vpop.trf.xlu0
        %v363 = vcombine.high %v271, %v271
        %v365 = vunpack.c.l.s4 1983009808
        %v366 = vunpack.c.0.s8 %v365
        %v367 = vlaneseq
        %v368 = vshrl.u32 %v367, 7
        %v369 = vsub.s32 %v366, %v368
        %v370 = vrot.slane %v271, %v369
        %v372 = vunpack.c.l.s4 1983009808
        %v373 = vunpack.c.0.s8 %v372
        %v374 = vlaneseq
        %v375 = vshrl.u32 %v374, 7
        %v376 = vsub.s32 %v373, %v375
        %v377 = vrot.slane %v363, %v376
        %v378 = vcombine.high %v370, %v370
        %v379 = vcombine.high %v377, %v377
        %v380 = vcombine.high %v272, %v272
        %v382 = vunpack.c.l.s4 1983009808
        %v383 = vunpack.c.0.s8 %v382
        %v384 = vlaneseq
        %v385 = vshrl.u32 %v384, 7
        %v386 = vsub.s32 %v383, %v385
        %v387 = vrot.slane %v272, %v386
        %v389 = vunpack.c.l.s4 1983009808
        %v390 = vunpack.c.0.s8 %v389
        %v391 = vlaneseq
        %v392 = vshrl.u32 %v391, 7
        %v393 = vsub.s32 %v390, %v392
        %v394 = vrot.slane %v380, %v393
        %v395 = vcombine.high %v387, %v387
        %v396 = vcombine.high %v394, %v394
        %v398 = vunpack.c.l.s4 1983009808
        %v399 = vunpack.c.0.s8 %v398
        %v400 = vlaneseq
        %v401 = vshrl.u32 %v400, 7
        %v402 = vsub.s32 %v399, %v401
        %v403 = vrot.slane %v273, %v402
        %v404 = vcombine.high %v403, %v403
        %vm405 = vcmask 31744
        %v407 = vsel %vm405, %v336, 0
        %v410 = vsel %vm405, %v337, 0
        %v413 = vsel %vm405, %v338, 0
        %v416 = vsel %vm405, %v339, 0
        %v419 = vsel %vm405, %v340, 0
        %v422 = vsel %vm405, %v341, 0
        %v425 = vsel %vm405, %v342, 0
        %v428 = vsel %vm405, %v343, 0
        %v431 = vsel %vm405, %v352, 0
        %v434 = vsel %vm405, %v353, 0
        %v437 = vsel %vm405, %v354, 0
        %v440 = vsel %vm405, %v355, 0
        %v443 = vsel %vm405, %v356, 0
        %v446 = vsel %vm405, %v357, 0
        %v449 = vsel %vm405, %v358, 0
        %v452 = vsel %vm405, %v359, 0
        %vm454 = vcmask 1041408
        %v456 = vsel %vm454, %v370, 0
        %v459 = vsel %vm454, %v378, 0
        %v462 = vsel %vm454, %v377, 0
        %v465 = vsel %vm454, %v379, 0
        %v468 = vsel %vm454, %v387, 0
        %v471 = vsel %vm454, %v395, 0
        %v474 = vsel %vm454, %v394, 0
        %v477 = vsel %vm454, %v396, 0
        %v480 = vsel %vm454, %v403, 0
        %v483 = vsel %vm454, %v404, 0
        %485 = vmatprep.subr.bf16.mxu0 %v459
        %486 = vmatpush1.bf16.msra.mxu0 %v456
        %487 = vmatprep.subr.bf16.mxu0 0
        %488 = vmatpush1.bf16.msra.mxu0 0
        %489 = vmatprep.subr.bf16.mxu0 0
        %490 = vmatpush1.bf16.msra.mxu0 0
        %491 = vmatprep.subr.bf16.mxu0 0
        %492 = vmatpush1.bf16.msra.mxu0 0
        %493 = vmatprep.subr.bf16.mxu0 0
        %494 = vmatpush1.bf16.msra.mxu0 0
        %495 = vmatprep.subr.bf16.mxu0 0
        %496 = vmatpush1.bf16.msra.mxu0 0
        %497 = vmatprep.subr.bf16.mxu0 0
        %498 = vmatpush1.bf16.msra.mxu0 0
        %499 = vmatprep.subr.bf16.mxu0 0
        %500 = vmatpush1.bf16.msra.mxu0 0
        %501 = vmatprep.subr.bf16.mxu0 0
        %502 = vmatpush1.bf16.msra.mxu0 0
        %503 = vmatprep.subr.bf16.mxu0 0
        %504 = vmatpush1.bf16.msra.mxu0 0
        %505 = vmatprep.subr.bf16.mxu0 0
        %506 = vmatpush1.bf16.msra.mxu0 0
        %507 = vmatprep.subr.bf16.mxu0 0
        %508 = vmatpush1.bf16.msra.mxu0 0
        %509 = vmatprep.subr.bf16.mxu0 0
        %510 = vmatpush1.bf16.msra.mxu0 0
        %511 = vmatprep.subr.bf16.mxu0 0
        %512 = vmatpush1.bf16.msra.mxu0 0
        %513 = vmatprep.subr.bf16.mxu0 0
        %514 = vmatpush1.bf16.msra.mxu0 0
        %515 = vmatprep.subr.bf16.mxu0 0
        %516 = vmatpush1.bf16.msra.mxu0 0
        %517 = vmatprep.mubr.bf16.mxu0 0
        %518 = vmatmul.mubr.bf16.gmra.mrb[0].mxu0 %v407
        %v519 = vpop.f32.mrb[0].mxu0
        %v520 = vadd.f32 %v281, %v519
        %v521 = vpop.f32.mrb[0].mxu0
        %v522 = vadd.f32 %v285, %v521
        %v523 = vpop.f32.mrb[0].mxu0
        %v524 = vadd.f32 %v281, %v523
        %v525 = vpop.f32.mrb[0].mxu0
        %v526 = vadd.f32 %v285, %v525
        %527 = vmatprep.mubr.bf16.mxu0 0
        %528 = vmatmul.mubr.bf16.gmra.mrb[0].mxu0 %v410
        %v529 = vpop.f32.mrb[0].mxu0
        %v530 = vadd.f32 %v281, %v529
        %v531 = vpop.f32.mrb[0].mxu0
        %v532 = vadd.f32 %v285, %v531
        %v533 = vpop.f32.mrb[0].mxu0
        %v534 = vadd.f32 %v281, %v533
        %v535 = vpop.f32.mrb[0].mxu0
        %v536 = vadd.f32 %v285, %v535
        %537 = vmatprep.mubr.bf16.mxu0 0
        %538 = vmatmul.mubr.bf16.gmra.mrb[0].mxu0 %v413
        %v539 = vpop.f32.mrb[0].mxu0
        %v540 = vadd.f32 %v281, %v539
        %v541 = vpop.f32.mrb[0].mxu0
        %v542 = vadd.f32 %v285, %v541
        %v543 = vpop.f32.mrb[0].mxu0
        %v544 = vadd.f32 %v281, %v543
        %v545 = vpop.f32.mrb[0].mxu0
        %v546 = vadd.f32 %v285, %v545
        %547 = vmatprep.mubr.bf16.mxu0 0
        %548 = vmatmul.mubr.bf16.gmra.mrb[0].mxu0 %v416
        %v549 = vpop.f32.mrb[0].mxu0
        %v550 = vadd.f32 %v281, %v549
        %v551 = vpop.f32.mrb[0].mxu0
        %v552 = vadd.f32 %v285, %v551
        %v553 = vpop.f32.mrb[0].mxu0
        %v554 = vadd.f32 %v281, %v553
        %v555 = vpop.f32.mrb[0].mxu0
        %v556 = vadd.f32 %v285, %v555
        %557 = vmatprep.mubr.bf16.mxu0 0
        %558 = vmatmul.mubr.bf16.gmra.mrb[0].mxu0 %v419
        %v559 = vpop.f32.mrb[0].mxu0
        %v560 = vadd.f32 %v281, %v559
        %v561 = vpop.f32.mrb[0].mxu0
        %v562 = vadd.f32 %v285, %v561
        %v563 = vpop.f32.mrb[0].mxu0
        %v564 = vadd.f32 %v281, %v563
        %v565 = vpop.f32.mrb[0].mxu0
        %v566 = vadd.f32 %v285, %v565
        %567 = vmatprep.mubr.bf16.mxu0 0
        %568 = vmatmul.mubr.bf16.gmra.mrb[0].mxu0 %v422
        %v569 = vpop.f32.mrb[0].mxu0
        %v570 = vadd.f32 %v281, %v569
        %v571 = vpop.f32.mrb[0].mxu0
        %v572 = vadd.f32 %v285, %v571
        %v573 = vpop.f32.mrb[0].mxu0
        %v574 = vadd.f32 %v281, %v573
        %v575 = vpop.f32.mrb[0].mxu0
        %v576 = vadd.f32 %v285, %v575
        %577 = vmatprep.mubr.bf16.mxu0 0
        %578 = vmatmul.mubr.bf16.gmra.mrb[0].mxu0 %v425
        %v579 = vpop.f32.mrb[0].mxu0
        %v580 = vadd.f32 %v281, %v579
        %v581 = vpop.f32.mrb[0].mxu0
        %v582 = vadd.f32 %v285, %v581
        %v583 = vpop.f32.mrb[0].mxu0
        %v584 = vadd.f32 %v281, %v583
        %v585 = vpop.f32.mrb[0].mxu0
        %v586 = vadd.f32 %v285, %v585
        %587 = vmatprep.mubr.bf16.mxu0 0
        %588 = vmatmul.mubr.bf16.gmra.mrb[0].mxu0 %v428
        %v589 = vpop.f32.mrb[0].mxu0
        %v590 = vadd.f32 %v281, %v589
        %v591 = vpop.f32.mrb[0].mxu0
        %v592 = vadd.f32 %v285, %v591
        %v593 = vpop.f32.mrb[0].mxu0
        %v594 = vadd.f32 %v281, %v593
        %v595 = vpop.f32.mrb[0].mxu0
        %v596 = vadd.f32 %v285, %v595
        %597 = vmatprep.mubr.bf16.mxu0 0
        %598 = vmatmul.mubr.bf16.gmra.mrb[0].mxu0 %v431
        %v599 = vpop.f32.mrb[0].mxu0
        %v600 = vadd.f32 %v281, %v599
        %v601 = vpop.f32.mrb[0].mxu0
        %v602 = vadd.f32 %v285, %v601
        %v603 = vpop.f32.mrb[0].mxu0
        %v604 = vadd.f32 %v281, %v603
        %v605 = vpop.f32.mrb[0].mxu0
        %v606 = vadd.f32 %v285, %v605
        %607 = vmatprep.mubr.bf16.mxu0 0
        %608 = vmatmul.mubr.bf16.gmra.mrb[0].mxu0 %v434
        %v609 = vpop.f32.mrb[0].mxu0
        %v610 = vadd.f32 %v281, %v609
        %v611 = vpop.f32.mrb[0].mxu0
        %v612 = vadd.f32 %v285, %v611
        %v613 = vpop.f32.mrb[0].mxu0
        %v614 = vadd.f32 %v281, %v613
        %v615 = vpop.f32.mrb[0].mxu0
        %v616 = vadd.f32 %v285, %v615
        %617 = vmatprep.mubr.bf16.mxu0 0
        %618 = vmatmul.mubr.bf16.gmra.mrb[0].mxu0 %v437
        %v619 = vpop.f32.mrb[0].mxu0
        %v620 = vadd.f32 %v281, %v619
        %v621 = vpop.f32.mrb[0].mxu0
        %v622 = vadd.f32 %v285, %v621
        %v623 = vpop.f32.mrb[0].mxu0
        %v624 = vadd.f32 %v281, %v623
        %v625 = vpop.f32.mrb[0].mxu0
        %v626 = vadd.f32 %v285, %v625
        %627 = vmatprep.mubr.bf16.mxu0 0
        %628 = vmatmul.mubr.bf16.gmra.mrb[0].mxu0 %v440
        %v629 = vpop.f32.mrb[0].mxu0
        %v630 = vadd.f32 %v281, %v629
        %v631 = vpop.f32.mrb[0].mxu0
        %v632 = vadd.f32 %v285, %v631
        %v633 = vpop.f32.mrb[0].mxu0
        %v634 = vadd.f32 %v281, %v633
        %v635 = vpop.f32.mrb[0].mxu0
        %v636 = vadd.f32 %v285, %v635
        %637 = vmatprep.mubr.bf16.mxu0 0
        %638 = vmatmul.mubr.bf16.gmra.mrb[0].mxu0 %v443
        %v639 = vpop.f32.mrb[0].mxu0
        %v640 = vadd.f32 %v281, %v639
        %v641 = vpop.f32.mrb[0].mxu0
        %v642 = vadd.f32 %v285, %v641
        %v643 = vpop.f32.mrb[0].mxu0
        %v644 = vadd.f32 %v281, %v643
        %v645 = vpop.f32.mrb[0].mxu0
        %v646 = vadd.f32 %v285, %v645
        %647 = vmatprep.mubr.bf16.mxu0 0
        %648 = vmatmul.mubr.bf16.gmra.mrb[0].mxu0 %v446
        %v649 = vpop.f32.mrb[0].mxu0
        %v650 = vadd.f32 %v281, %v649
        %v651 = vpop.f32.mrb[0].mxu0
        %v652 = vadd.f32 %v285, %v651
        %v653 = vpop.f32.mrb[0].mxu0
        %v654 = vadd.f32 %v281, %v653
        %v655 = vpop.f32.mrb[0].mxu0
        %v656 = vadd.f32 %v285, %v655
        %657 = vmatprep.mubr.bf16.mxu0 0
        %658 = vmatmul.mubr.bf16.gmra.mrb[0].mxu0 %v449
        %v659 = vpop.f32.mrb[0].mxu0
        %v660 = vadd.f32 %v281, %v659
        %v661 = vpop.f32.mrb[0].mxu0
        %v662 = vadd.f32 %v285, %v661
        %v663 = vpop.f32.mrb[0].mxu0
        %v664 = vadd.f32 %v281, %v663
        %v665 = vpop.f32.mrb[0].mxu0
        %v666 = vadd.f32 %v285, %v665
        %667 = vmatprep.mubr.bf16.mxu0 0
        %668 = vmatmul.mubr.bf16.gmra.mrb[0].mxu0 %v452
        %v669 = vpop.f32.mrb[0].mxu0
        %v670 = vadd.f32 %v281, %v669
        %v671 = vpop.f32.mrb[0].mxu0
        %v672 = vadd.f32 %v285, %v671
        %v673 = vpop.f32.mrb[0].mxu0
        %v674 = vadd.f32 %v281, %v673
        %v675 = vpop.f32.mrb[0].mxu0
        %v676 = vadd.f32 %v285, %v675
        %677 = vdwg.mxu0
        %678 = vmatprep.subr.bf16.mxu0 %v465
        %679 = vmatpush1.bf16.msra.mxu0 %v462
        %680 = vmatprep.subr.bf16.mxu0 0
        %681 = vmatpush1.bf16.msra.mxu0 0
        %682 = vmatprep.subr.bf16.mxu0 0
        %683 = vmatpush1.bf16.msra.mxu0 0
        %684 = vmatprep.subr.bf16.mxu0 0
        %685 = vmatpush1.bf16.msra.mxu0 0
        %686 = vmatprep.subr.bf16.mxu0 0
        %687 = vmatpush1.bf16.msra.mxu0 0
        %688 = vmatprep.subr.bf16.mxu0 0
        %689 = vmatpush1.bf16.msra.mxu0 0
        %690 = vmatprep.subr.bf16.mxu0 0
        %691 = vmatpush1.bf16.msra.mxu0 0
        %692 = vmatprep.subr.bf16.mxu0 0
        %693 = vmatpush1.bf16.msra.mxu0 0
        %694 = vmatprep.subr.bf16.mxu0 0
        %695 = vmatpush1.bf16.msra.mxu0 0
        %696 = vmatprep.subr.bf16.mxu0 0
        %697 = vmatpush1.bf16.msra.mxu0 0
        %698 = vmatprep.subr.bf16.mxu0 0
        %699 = vmatpush1.bf16.msra.mxu0 0
        %700 = vmatprep.subr.bf16.mxu0 0
        %701 = vmatpush1.bf16.msra.mxu0 0
        %702 = vmatprep.subr.bf16.mxu0 0
        %703 = vmatpush1.bf16.msra.mxu0 0
        %704 = vmatprep.subr.bf16.mxu0 0
        %705 = vmatpush1.bf16.msra.mxu0 0
        %706 = vmatprep.subr.bf16.mxu0 0
        %707 = vmatpush1.bf16.msra.mxu0 0
        %708 = vmatprep.subr.bf16.mxu0 0
        %709 = vmatpush1.bf16.msra.mxu0 0
        %710 = vmatprep.mubr.bf16.mxu0 0
        %711 = vmatmul.mubr.bf16.gmra.mrb[0].mxu0 %v407
        %v712 = vpop.f32.mrb[0].mxu0
        %v713 = vadd.f32 %v289, %v712
        %v714 = vpop.f32.mrb[0].mxu0
        %v715 = vadd.f32 %v293, %v714
        %v716 = vpop.f32.mrb[0].mxu0
        %v717 = vadd.f32 %v289, %v716
        %v718 = vpop.f32.mrb[0].mxu0
        %v719 = vadd.f32 %v293, %v718
        %720 = vmatprep.mubr.bf16.mxu0 0
        %721 = vmatmul.mubr.bf16.gmra.mrb[0].mxu0 %v410
        %v722 = vpop.f32.mrb[0].mxu0
        %v723 = vadd.f32 %v289, %v722
        %v724 = vpop.f32.mrb[0].mxu0
        %v725 = vadd.f32 %v293, %v724
        %v726 = vpop.f32.mrb[0].mxu0
        %v727 = vadd.f32 %v289, %v726
        %v728 = vpop.f32.mrb[0].mxu0
        %v729 = vadd.f32 %v293, %v728
        %730 = vmatprep.mubr.bf16.mxu0 0
        %731 = vmatmul.mubr.bf16.gmra.mrb[0].mxu0 %v413
        %v732 = vpop.f32.mrb[0].mxu0
        %v733 = vadd.f32 %v289, %v732
        %v734 = vpop.f32.mrb[0].mxu0
        %v735 = vadd.f32 %v293, %v734
        %v736 = vpop.f32.mrb[0].mxu0
        %v737 = vadd.f32 %v289, %v736
        %v738 = vpop.f32.mrb[0].mxu0
        %v739 = vadd.f32 %v293, %v738
        %740 = vmatprep.mubr.bf16.mxu0 0
        %741 = vmatmul.mubr.bf16.gmra.mrb[0].mxu0 %v416
        %v742 = vpop.f32.mrb[0].mxu0
        %v743 = vadd.f32 %v289, %v742
        %v744 = vpop.f32.mrb[0].mxu0
        %v745 = vadd.f32 %v293, %v744
        %v746 = vpop.f32.mrb[0].mxu0
        %v747 = vadd.f32 %v289, %v746
        %v748 = vpop.f32.mrb[0].mxu0
        %v749 = vadd.f32 %v293, %v748
        %750 = vmatprep.mubr.bf16.mxu0 0
        %751 = vmatmul.mubr.bf16.gmra.mrb[0].mxu0 %v419
        %v752 = vpop.f32.mrb[0].mxu0
        %v753 = vadd.f32 %v289, %v752
        %v754 = vpop.f32.mrb[0].mxu0
        %v755 = vadd.f32 %v293, %v754
        %v756 = vpop.f32.mrb[0].mxu0
        %v757 = vadd.f32 %v289, %v756
        %v758 = vpop.f32.mrb[0].mxu0
        %v759 = vadd.f32 %v293, %v758
        %760 = vmatprep.mubr.bf16.mxu0 0
        %761 = vmatmul.mubr.bf16.gmra.mrb[0].mxu0 %v422
        %v762 = vpop.f32.mrb[0].mxu0
        %v763 = vadd.f32 %v289, %v762
        %v764 = vpop.f32.mrb[0].mxu0
        %v765 = vadd.f32 %v293, %v764
        %v766 = vpop.f32.mrb[0].mxu0
        %v767 = vadd.f32 %v289, %v766
        %v768 = vpop.f32.mrb[0].mxu0
        %v769 = vadd.f32 %v293, %v768
        %770 = vmatprep.mubr.bf16.mxu0 0
        %771 = vmatmul.mubr.bf16.gmra.mrb[0].mxu0 %v425
        %v772 = vpop.f32.mrb[0].mxu0
        %v773 = vadd.f32 %v289, %v772
        %v774 = vpop.f32.mrb[0].mxu0
        %v775 = vadd.f32 %v293, %v774
        %v776 = vpop.f32.mrb[0].mxu0
        %v777 = vadd.f32 %v289, %v776
        %v778 = vpop.f32.mrb[0].mxu0
        %v779 = vadd.f32 %v293, %v778
        %780 = vmatprep.mubr.bf16.mxu0 0
        %781 = vmatmul.mubr.bf16.gmra.mrb[0].mxu0 %v428
        %v782 = vpop.f32.mrb[0].mxu0
        %v783 = vadd.f32 %v289, %v782
        %v784 = vpop.f32.mrb[0].mxu0
        %v785 = vadd.f32 %v293, %v784
        %v786 = vpop.f32.mrb[0].mxu0
        %v787 = vadd.f32 %v289, %v786
        %v788 = vpop.f32.mrb[0].mxu0
        %v789 = vadd.f32 %v293, %v788
        %790 = vmatprep.mubr.bf16.mxu0 0
        %791 = vmatmul.mubr.bf16.gmra.mrb[0].mxu0 %v431
        %v792 = vpop.f32.mrb[0].mxu0
        %v793 = vadd.f32 %v289, %v792
        %v794 = vpop.f32.mrb[0].mxu0
        %v795 = vadd.f32 %v293, %v794
        %v796 = vpop.f32.mrb[0].mxu0
        %v797 = vadd.f32 %v289, %v796
        %v798 = vpop.f32.mrb[0].mxu0
        %v799 = vadd.f32 %v293, %v798
        %800 = vmatprep.mubr.bf16.mxu0 0
        %801 = vmatmul.mubr.bf16.gmra.mrb[0].mxu0 %v434
        %v802 = vpop.f32.mrb[0].mxu0
        %v803 = vadd.f32 %v289, %v802
        %v804 = vpop.f32.mrb[0].mxu0
        %v805 = vadd.f32 %v293, %v804
        %v806 = vpop.f32.mrb[0].mxu0
        %v807 = vadd.f32 %v289, %v806
        %v808 = vpop.f32.mrb[0].mxu0
        %v809 = vadd.f32 %v293, %v808
        %810 = vmatprep.mubr.bf16.mxu0 0
        %811 = vmatmul.mubr.bf16.gmra.mrb[0].mxu0 %v437
        %v812 = vpop.f32.mrb[0].mxu0
        %v813 = vadd.f32 %v289, %v812
        %v814 = vpop.f32.mrb[0].mxu0
        %v815 = vadd.f32 %v293, %v814
        %v816 = vpop.f32.mrb[0].mxu0
        %v817 = vadd.f32 %v289, %v816
        %v818 = vpop.f32.mrb[0].mxu0
        %v819 = vadd.f32 %v293, %v818
        %820 = vmatprep.mubr.bf16.mxu0 0
        %821 = vmatmul.mubr.bf16.gmra.mrb[0].mxu0 %v440
        %v822 = vpop.f32.mrb[0].mxu0
        %v823 = vadd.f32 %v289, %v822
        %v824 = vpop.f32.mrb[0].mxu0
        %v825 = vadd.f32 %v293, %v824
        %v826 = vpop.f32.mrb[0].mxu0
        %v827 = vadd.f32 %v289, %v826
        %v828 = vpop.f32.mrb[0].mxu0
        %v829 = vadd.f32 %v293, %v828
        %830 = vmatprep.mubr.bf16.mxu0 0
        %831 = vmatmul.mubr.bf16.gmra.mrb[0].mxu0 %v443
        %v832 = vpop.f32.mrb[0].mxu0
        %v833 = vadd.f32 %v289, %v832
        %v834 = vpop.f32.mrb[0].mxu0
        %v835 = vadd.f32 %v293, %v834
        %v836 = vpop.f32.mrb[0].mxu0
        %v837 = vadd.f32 %v289, %v836
        %v838 = vpop.f32.mrb[0].mxu0
        %v839 = vadd.f32 %v293, %v838
        %840 = vmatprep.mubr.bf16.mxu0 0
        %841 = vmatmul.mubr.bf16.gmra.mrb[0].mxu0 %v446
        %v842 = vpop.f32.mrb[0].mxu0
        %v843 = vadd.f32 %v289, %v842
        %v844 = vpop.f32.mrb[0].mxu0
        %v845 = vadd.f32 %v293, %v844
        %v846 = vpop.f32.mrb[0].mxu0
        %v847 = vadd.f32 %v289, %v846
        %v848 = vpop.f32.mrb[0].mxu0
        %v849 = vadd.f32 %v293, %v848
        %850 = vmatprep.mubr.bf16.mxu0 0
        %851 = vmatmul.mubr.bf16.gmra.mrb[0].mxu0 %v449
        %v852 = vpop.f32.mrb[0].mxu0
        %v853 = vadd.f32 %v289, %v852
        %v854 = vpop.f32.mrb[0].mxu0
        %v855 = vadd.f32 %v293, %v854
        %v856 = vpop.f32.mrb[0].mxu0
        %v857 = vadd.f32 %v289, %v856
        %v858 = vpop.f32.mrb[0].mxu0
        %v859 = vadd.f32 %v293, %v858
        %860 = vmatprep.mubr.bf16.mxu0 0
        %861 = vmatmul.mubr.bf16.gmra.mrb[0].mxu0 %v452
        %v862 = vpop.f32.mrb[0].mxu0
        %v863 = vadd.f32 %v289, %v862
        %v864 = vpop.f32.mrb[0].mxu0
        %v865 = vadd.f32 %v293, %v864
        %v866 = vpop.f32.mrb[0].mxu0
        %v867 = vadd.f32 %v289, %v866
        %v868 = vpop.f32.mrb[0].mxu0
        %v869 = vadd.f32 %v293, %v868
        %870 = vdwg.mxu0
        %871 = vmatprep.subr.bf16.mxu0 %v471
        %872 = vmatpush1.bf16.msra.mxu0 %v468
        %873 = vmatprep.subr.bf16.mxu0 0
        %874 = vmatpush1.bf16.msra.mxu0 0
        %875 = vmatprep.subr.bf16.mxu0 0
        %876 = vmatpush1.bf16.msra.mxu0 0
        %877 = vmatprep.subr.bf16.mxu0 0
        %878 = vmatpush1.bf16.msra.mxu0 0
        %879 = vmatprep.subr.bf16.mxu0 0
        %880 = vmatpush1.bf16.msra.mxu0 0
        %881 = vmatprep.subr.bf16.mxu0 0
        %882 = vmatpush1.bf16.msra.mxu0 0
        %883 = vmatprep.subr.bf16.mxu0 0
        %884 = vmatpush1.bf16.msra.mxu0 0
        %885 = vmatprep.subr.bf16.mxu0 0
        %886 = vmatpush1.bf16.msra.mxu0 0
        %887 = vmatprep.subr.bf16.mxu0 0
        %888 = vmatpush1.bf16.msra.mxu0 0
        %889 = vmatprep.subr.bf16.mxu0 0
        %890 = vmatpush1.bf16.msra.mxu0 0
        %891 = vmatprep.subr.bf16.mxu0 0
        %892 = vmatpush1.bf16.msra.mxu0 0
        %893 = vmatprep.subr.bf16.mxu0 0
        %894 = vmatpush1.bf16.msra.mxu0 0
        %895 = vmatprep.subr.bf16.mxu0 0
        %896 = vmatpush1.bf16.msra.mxu0 0
        %897 = vmatprep.subr.bf16.mxu0 0
        %898 = vmatpush1.bf16.msra.mxu0 0
        %899 = vmatprep.subr.bf16.mxu0 0
        %900 = vmatpush1.bf16.msra.mxu0 0
        %901 = vmatprep.subr.bf16.mxu0 0
        %902 = vmatpush1.bf16.msra.mxu0 0
        %903 = vmatprep.mubr.bf16.mxu0 0
        %904 = vmatmul.mubr.bf16.gmra.mrb[0].mxu0 %v407
        %v905 = vpop.f32.mrb[0].mxu0
        %v906 = vadd.f32 %v297, %v905
        %v907 = vpop.f32.mrb[0].mxu0
        %v908 = vadd.f32 %v301, %v907
        %v909 = vpop.f32.mrb[0].mxu0
        %v910 = vadd.f32 %v297, %v909
        %v911 = vpop.f32.mrb[0].mxu0
        %v912 = vadd.f32 %v301, %v911
        %913 = vmatprep.mubr.bf16.mxu0 0
        %914 = vmatmul.mubr.bf16.gmra.mrb[0].mxu0 %v410
        %v915 = vpop.f32.mrb[0].mxu0
        %v916 = vadd.f32 %v297, %v915
        %v917 = vpop.f32.mrb[0].mxu0
        %v918 = vadd.f32 %v301, %v917
        %v919 = vpop.f32.mrb[0].mxu0
        %v920 = vadd.f32 %v297, %v919
        %v921 = vpop.f32.mrb[0].mxu0
        %v922 = vadd.f32 %v301, %v921
        %923 = vmatprep.mubr.bf16.mxu0 0
        %924 = vmatmul.mubr.bf16.gmra.mrb[0].mxu0 %v413
        %v925 = vpop.f32.mrb[0].mxu0
        %v926 = vadd.f32 %v297, %v925
        %v927 = vpop.f32.mrb[0].mxu0
        %v928 = vadd.f32 %v301, %v927
        %v929 = vpop.f32.mrb[0].mxu0
        %v930 = vadd.f32 %v297, %v929
        %v931 = vpop.f32.mrb[0].mxu0
        %v932 = vadd.f32 %v301, %v931
        %933 = vmatprep.mubr.bf16.mxu0 0
        %934 = vmatmul.mubr.bf16.gmra.mrb[0].mxu0 %v416
        %v935 = vpop.f32.mrb[0].mxu0
        %v936 = vadd.f32 %v297, %v935
        %v937 = vpop.f32.mrb[0].mxu0
        %v938 = vadd.f32 %v301, %v937
        %v939 = vpop.f32.mrb[0].mxu0
        %v940 = vadd.f32 %v297, %v939
        %v941 = vpop.f32.mrb[0].mxu0
        %v942 = vadd.f32 %v301, %v941
        %943 = vmatprep.mubr.bf16.mxu0 0
        %944 = vmatmul.mubr.bf16.gmra.mrb[0].mxu0 %v419
        %v945 = vpop.f32.mrb[0].mxu0
        %v946 = vadd.f32 %v297, %v945
        %v947 = vpop.f32.mrb[0].mxu0
        %v948 = vadd.f32 %v301, %v947
        %v949 = vpop.f32.mrb[0].mxu0
        %v950 = vadd.f32 %v297, %v949
        %v951 = vpop.f32.mrb[0].mxu0
        %v952 = vadd.f32 %v301, %v951
        %953 = vmatprep.mubr.bf16.mxu0 0
        %954 = vmatmul.mubr.bf16.gmra.mrb[0].mxu0 %v422
        %v955 = vpop.f32.mrb[0].mxu0
        %v956 = vadd.f32 %v297, %v955
        %v957 = vpop.f32.mrb[0].mxu0
        %v958 = vadd.f32 %v301, %v957
        %v959 = vpop.f32.mrb[0].mxu0
        %v960 = vadd.f32 %v297, %v959
        %v961 = vpop.f32.mrb[0].mxu0
        %v962 = vadd.f32 %v301, %v961
        %963 = vmatprep.mubr.bf16.mxu0 0
        %964 = vmatmul.mubr.bf16.gmra.mrb[0].mxu0 %v425
        %v965 = vpop.f32.mrb[0].mxu0
        %v966 = vadd.f32 %v297, %v965
        %v967 = vpop.f32.mrb[0].mxu0
        %v968 = vadd.f32 %v301, %v967
        %v969 = vpop.f32.mrb[0].mxu0
        %v970 = vadd.f32 %v297, %v969
        %v971 = vpop.f32.mrb[0].mxu0
        %v972 = vadd.f32 %v301, %v971
        %973 = vmatprep.mubr.bf16.mxu0 0
        %974 = vmatmul.mubr.bf16.gmra.mrb[0].mxu0 %v428
        %v975 = vpop.f32.mrb[0].mxu0
        %v976 = vadd.f32 %v297, %v975
        %v977 = vpop.f32.mrb[0].mxu0
        %v978 = vadd.f32 %v301, %v977
        %v979 = vpop.f32.mrb[0].mxu0
        %v980 = vadd.f32 %v297, %v979
        %v981 = vpop.f32.mrb[0].mxu0
        %v982 = vadd.f32 %v301, %v981
        %983 = vmatprep.mubr.bf16.mxu0 0
        %984 = vmatmul.mubr.bf16.gmra.mrb[0].mxu0 %v431
        %v985 = vpop.f32.mrb[0].mxu0
        %v986 = vadd.f32 %v297, %v985
        %v987 = vpop.f32.mrb[0].mxu0
        %v988 = vadd.f32 %v301, %v987
        %v989 = vpop.f32.mrb[0].mxu0
        %v990 = vadd.f32 %v297, %v989
        %v991 = vpop.f32.mrb[0].mxu0
        %v992 = vadd.f32 %v301, %v991
        %993 = vmatprep.mubr.bf16.mxu0 0
        %994 = vmatmul.mubr.bf16.gmra.mrb[0].mxu0 %v434
        %v995 = vpop.f32.mrb[0].mxu0
        %v996 = vadd.f32 %v297, %v995
        %v997 = vpop.f32.mrb[0].mxu0
        %v998 = vadd.f32 %v301, %v997
        %v999 = vpop.f32.mrb[0].mxu0
        %v1000 = vadd.f32 %v297, %v999
        %v1001 = vpop.f32.mrb[0].mxu0
        %v1002 = vadd.f32 %v301, %v1001
        %1003 = vmatprep.mubr.bf16.mxu0 0
        %1004 = vmatmul.mubr.bf16.gmra.mrb[0].mxu0 %v437
        %v1005 = vpop.f32.mrb[0].mxu0
        %v1006 = vadd.f32 %v297, %v1005
        %v1007 = vpop.f32.mrb[0].mxu0
        %v1008 = vadd.f32 %v301, %v1007
        %v1009 = vpop.f32.mrb[0].mxu0
        %v1010 = vadd.f32 %v297, %v1009
        %v1011 = vpop.f32.mrb[0].mxu0
        %v1012 = vadd.f32 %v301, %v1011
        %1013 = vmatprep.mubr.bf16.mxu0 0
        %1014 = vmatmul.mubr.bf16.gmra.mrb[0].mxu0 %v440
        %v1015 = vpop.f32.mrb[0].mxu0
        %v1016 = vadd.f32 %v297, %v1015
        %v1017 = vpop.f32.mrb[0].mxu0
        %v1018 = vadd.f32 %v301, %v1017
        %v1019 = vpop.f32.mrb[0].mxu0
        %v1020 = vadd.f32 %v297, %v1019
        %v1021 = vpop.f32.mrb[0].mxu0
        %v1022 = vadd.f32 %v301, %v1021
        %1023 = vmatprep.mubr.bf16.mxu0 0
        %1024 = vmatmul.mubr.bf16.gmra.mrb[0].mxu0 %v443
        %v1025 = vpop.f32.mrb[0].mxu0
        %v1026 = vadd.f32 %v297, %v1025
        %v1027 = vpop.f32.mrb[0].mxu0
        %v1028 = vadd.f32 %v301, %v1027
        %v1029 = vpop.f32.mrb[0].mxu0
        %v1030 = vadd.f32 %v297, %v1029
        %v1031 = vpop.f32.mrb[0].mxu0
        %v1032 = vadd.f32 %v301, %v1031
        %1033 = vmatprep.mubr.bf16.mxu0 0
        %1034 = vmatmul.mubr.bf16.gmra.mrb[0].mxu0 %v446
        %v1035 = vpop.f32.mrb[0].mxu0
        %v1036 = vadd.f32 %v297, %v1035
        %v1037 = vpop.f32.mrb[0].mxu0
        %v1038 = vadd.f32 %v301, %v1037
        %v1039 = vpop.f32.mrb[0].mxu0
        %v1040 = vadd.f32 %v297, %v1039
        %v1041 = vpop.f32.mrb[0].mxu0
        %v1042 = vadd.f32 %v301, %v1041
        %1043 = vmatprep.mubr.bf16.mxu0 0
        %1044 = vmatmul.mubr.bf16.gmra.mrb[0].mxu0 %v449
        %v1045 = vpop.f32.mrb[0].mxu0
        %v1046 = vadd.f32 %v297, %v1045
        %v1047 = vpop.f32.mrb[0].mxu0
        %v1048 = vadd.f32 %v301, %v1047
        %v1049 = vpop.f32.mrb[0].mxu0
        %v1050 = vadd.f32 %v297, %v1049
        %v1051 = vpop.f32.mrb[0].mxu0
        %v1052 = vadd.f32 %v301, %v1051
        %1053 = vmatprep.mubr.bf16.mxu0 0
        %1054 = vmatmul.mubr.bf16.gmra.mrb[0].mxu0 %v452
        %v1055 = vpop.f32.mrb[0].mxu0
        %v1056 = vadd.f32 %v297, %v1055
        %v1057 = vpop.f32.mrb[0].mxu0
        %v1058 = vadd.f32 %v301, %v1057
        %v1059 = vpop.f32.mrb[0].mxu0
        %v1060 = vadd.f32 %v297, %v1059
        %v1061 = vpop.f32.mrb[0].mxu0
        %v1062 = vadd.f32 %v301, %v1061
        %1063 = vdwg.mxu0
        %1064 = vmatprep.subr.bf16.mxu0 %v477
        %1065 = vmatpush1.bf16.msra.mxu0 %v474
        %1066 = vmatprep.subr.bf16.mxu0 0
        %1067 = vmatpush1.bf16.msra.mxu0 0
        %1068 = vmatprep.subr.bf16.mxu0 0
        %1069 = vmatpush1.bf16.msra.mxu0 0
        %1070 = vmatprep.subr.bf16.mxu0 0
        %1071 = vmatpush1.bf16.msra.mxu0 0
        %1072 = vmatprep.subr.bf16.mxu0 0
        %1073 = vmatpush1.bf16.msra.mxu0 0
        %1074 = vmatprep.subr.bf16.mxu0 0
        %1075 = vmatpush1.bf16.msra.mxu0 0
        %1076 = vmatprep.subr.bf16.mxu0 0
        %1077 = vmatpush1.bf16.msra.mxu0 0
        %1078 = vmatprep.subr.bf16.mxu0 0
        %1079 = vmatpush1.bf16.msra.mxu0 0
        %1080 = vmatprep.subr.bf16.mxu0 0
        %1081 = vmatpush1.bf16.msra.mxu0 0
        %1082 = vmatprep.subr.bf16.mxu0 0
        %1083 = vmatpush1.bf16.msra.mxu0 0
        %1084 = vmatprep.subr.bf16.mxu0 0
        %1085 = vmatpush1.bf16.msra.mxu0 0
        %1086 = vmatprep.subr.bf16.mxu0 0
        %1087 = vmatpush1.bf16.msra.mxu0 0
        %1088 = vmatprep.subr.bf16.mxu0 0
        %1089 = vmatpush1.bf16.msra.mxu0 0
        %1090 = vmatprep.subr.bf16.mxu0 0
        %1091 = vmatpush1.bf16.msra.mxu0 0
        %1092 = vmatprep.subr.bf16.mxu0 0
        %1093 = vmatpush1.bf16.msra.mxu0 0
        %1094 = vmatprep.subr.bf16.mxu0 0
        %1095 = vmatpush1.bf16.msra.mxu0 0
        %1096 = vmatprep.mubr.bf16.mxu0 0
        %1097 = vmatmul.mubr.bf16.gmra.mrb[0].mxu0 %v407
        %v1098 = vpop.f32.mrb[0].mxu0
        %v1099 = vadd.f32 %v305, %v1098
        %v1100 = vpop.f32.mrb[0].mxu0
        %v1101 = vadd.f32 %v309, %v1100
        %v1102 = vpop.f32.mrb[0].mxu0
        %v1103 = vadd.f32 %v305, %v1102
        %v1104 = vpop.f32.mrb[0].mxu0
        %v1105 = vadd.f32 %v309, %v1104
        %1106 = vmatprep.mubr.bf16.mxu0 0
        %1107 = vmatmul.mubr.bf16.gmra.mrb[0].mxu0 %v410
        %v1108 = vpop.f32.mrb[0].mxu0
        %v1109 = vadd.f32 %v305, %v1108
        %v1110 = vpop.f32.mrb[0].mxu0
        %v1111 = vadd.f32 %v309, %v1110
        %v1112 = vpop.f32.mrb[0].mxu0
        %v1113 = vadd.f32 %v305, %v1112
        %v1114 = vpop.f32.mrb[0].mxu0
        %v1115 = vadd.f32 %v309, %v1114
        %1116 = vmatprep.mubr.bf16.mxu0 0
        %1117 = vmatmul.mubr.bf16.gmra.mrb[0].mxu0 %v413
        %v1118 = vpop.f32.mrb[0].mxu0
        %v1119 = vadd.f32 %v305, %v1118
        %v1120 = vpop.f32.mrb[0].mxu0
        %v1121 = vadd.f32 %v309, %v1120
        %v1122 = vpop.f32.mrb[0].mxu0
        %v1123 = vadd.f32 %v305, %v1122
        %v1124 = vpop.f32.mrb[0].mxu0
        %v1125 = vadd.f32 %v309, %v1124
        %1126 = vmatprep.mubr.bf16.mxu0 0
        %1127 = vmatmul.mubr.bf16.gmra.mrb[0].mxu0 %v416
        %v1128 = vpop.f32.mrb[0].mxu0
        %v1129 = vadd.f32 %v305, %v1128
        %v1130 = vpop.f32.mrb[0].mxu0
        %v1131 = vadd.f32 %v309, %v1130
        %v1132 = vpop.f32.mrb[0].mxu0
        %v1133 = vadd.f32 %v305, %v1132
        %v1134 = vpop.f32.mrb[0].mxu0
        %v1135 = vadd.f32 %v309, %v1134
        %1136 = vmatprep.mubr.bf16.mxu0 0
        %1137 = vmatmul.mubr.bf16.gmra.mrb[0].mxu0 %v419
        %v1138 = vpop.f32.mrb[0].mxu0
        %v1139 = vadd.f32 %v305, %v1138
        %v1140 = vpop.f32.mrb[0].mxu0
        %v1141 = vadd.f32 %v309, %v1140
        %v1142 = vpop.f32.mrb[0].mxu0
        %v1143 = vadd.f32 %v305, %v1142
        %v1144 = vpop.f32.mrb[0].mxu0
        %v1145 = vadd.f32 %v309, %v1144
        %1146 = vmatprep.mubr.bf16.mxu0 0
        %1147 = vmatmul.mubr.bf16.gmra.mrb[0].mxu0 %v422
        %v1148 = vpop.f32.mrb[0].mxu0
        %v1149 = vadd.f32 %v305, %v1148
        %v1150 = vpop.f32.mrb[0].mxu0
        %v1151 = vadd.f32 %v309, %v1150
        %v1152 = vpop.f32.mrb[0].mxu0
        %v1153 = vadd.f32 %v305, %v1152
        %v1154 = vpop.f32.mrb[0].mxu0
        %v1155 = vadd.f32 %v309, %v1154
        %1156 = vmatprep.mubr.bf16.mxu0 0
        %1157 = vmatmul.mubr.bf16.gmra.mrb[0].mxu0 %v425
        %v1158 = vpop.f32.mrb[0].mxu0
        %v1159 = vadd.f32 %v305, %v1158
        %v1160 = vpop.f32.mrb[0].mxu0
        %v1161 = vadd.f32 %v309, %v1160
        %v1162 = vpop.f32.mrb[0].mxu0
        %v1163 = vadd.f32 %v305, %v1162
        %v1164 = vpop.f32.mrb[0].mxu0
        %v1165 = vadd.f32 %v309, %v1164
        %1166 = vmatprep.mubr.bf16.mxu0 0
        %1167 = vmatmul.mubr.bf16.gmra.mrb[0].mxu0 %v428
        %v1168 = vpop.f32.mrb[0].mxu0
        %v1169 = vadd.f32 %v305, %v1168
        %v1170 = vpop.f32.mrb[0].mxu0
        %v1171 = vadd.f32 %v309, %v1170
        %v1172 = vpop.f32.mrb[0].mxu0
        %v1173 = vadd.f32 %v305, %v1172
        %v1174 = vpop.f32.mrb[0].mxu0
        %v1175 = vadd.f32 %v309, %v1174
        %1176 = vmatprep.mubr.bf16.mxu0 0
        %1177 = vmatmul.mubr.bf16.gmra.mrb[0].mxu0 %v431
        %v1178 = vpop.f32.mrb[0].mxu0
        %v1179 = vadd.f32 %v305, %v1178
        %v1180 = vpop.f32.mrb[0].mxu0
        %v1181 = vadd.f32 %v309, %v1180
        %v1182 = vpop.f32.mrb[0].mxu0
        %v1183 = vadd.f32 %v305, %v1182
        %v1184 = vpop.f32.mrb[0].mxu0
        %v1185 = vadd.f32 %v309, %v1184
        %1186 = vmatprep.mubr.bf16.mxu0 0
        %1187 = vmatmul.mubr.bf16.gmra.mrb[0].mxu0 %v434
        %v1188 = vpop.f32.mrb[0].mxu0
        %v1189 = vadd.f32 %v305, %v1188
        %v1190 = vpop.f32.mrb[0].mxu0
        %v1191 = vadd.f32 %v309, %v1190
        %v1192 = vpop.f32.mrb[0].mxu0
        %v1193 = vadd.f32 %v305, %v1192
        %v1194 = vpop.f32.mrb[0].mxu0
        %v1195 = vadd.f32 %v309, %v1194
        %1196 = vmatprep.mubr.bf16.mxu0 0
        %1197 = vmatmul.mubr.bf16.gmra.mrb[0].mxu0 %v437
        %v1198 = vpop.f32.mrb[0].mxu0
        %v1199 = vadd.f32 %v305, %v1198
        %v1200 = vpop.f32.mrb[0].mxu0
        %v1201 = vadd.f32 %v309, %v1200
        %v1202 = vpop.f32.mrb[0].mxu0
        %v1203 = vadd.f32 %v305, %v1202
        %v1204 = vpop.f32.mrb[0].mxu0
        %v1205 = vadd.f32 %v309, %v1204
        %1206 = vmatprep.mubr.bf16.mxu0 0
        %1207 = vmatmul.mubr.bf16.gmra.mrb[0].mxu0 %v440
        %v1208 = vpop.f32.mrb[0].mxu0
        %v1209 = vadd.f32 %v305, %v1208
        %v1210 = vpop.f32.mrb[0].mxu0
        %v1211 = vadd.f32 %v309, %v1210
        %v1212 = vpop.f32.mrb[0].mxu0
        %v1213 = vadd.f32 %v305, %v1212
        %v1214 = vpop.f32.mrb[0].mxu0
        %v1215 = vadd.f32 %v309, %v1214
        %1216 = vmatprep.mubr.bf16.mxu0 0
        %1217 = vmatmul.mubr.bf16.gmra.mrb[0].mxu0 %v443
        %v1218 = vpop.f32.mrb[0].mxu0
        %v1219 = vadd.f32 %v305, %v1218
        %v1220 = vpop.f32.mrb[0].mxu0
        %v1221 = vadd.f32 %v309, %v1220
        %v1222 = vpop.f32.mrb[0].mxu0
        %v1223 = vadd.f32 %v305, %v1222
        %v1224 = vpop.f32.mrb[0].mxu0
        %v1225 = vadd.f32 %v309, %v1224
        %1226 = vmatprep.mubr.bf16.mxu0 0
        %1227 = vmatmul.mubr.bf16.gmra.mrb[0].mxu0 %v446
        %v1228 = vpop.f32.mrb[0].mxu0
        %v1229 = vadd.f32 %v305, %v1228
        %v1230 = vpop.f32.mrb[0].mxu0
        %v1231 = vadd.f32 %v309, %v1230
        %v1232 = vpop.f32.mrb[0].mxu0
        %v1233 = vadd.f32 %v305, %v1232
        %v1234 = vpop.f32.mrb[0].mxu0
        %v1235 = vadd.f32 %v309, %v1234
        %1236 = vmatprep.mubr.bf16.mxu0 0
        %1237 = vmatmul.mubr.bf16.gmra.mrb[0].mxu0 %v449
        %v1238 = vpop.f32.mrb[0].mxu0
        %v1239 = vadd.f32 %v305, %v1238
        %v1240 = vpop.f32.mrb[0].mxu0
        %v1241 = vadd.f32 %v309, %v1240
        %v1242 = vpop.f32.mrb[0].mxu0
        %v1243 = vadd.f32 %v305, %v1242
        %v1244 = vpop.f32.mrb[0].mxu0
        %v1245 = vadd.f32 %v309, %v1244
        %1246 = vmatprep.mubr.bf16.mxu0 0
        %1247 = vmatmul.mubr.bf16.gmra.mrb[0].mxu0 %v452
        %v1248 = vpop.f32.mrb[0].mxu0
        %v1249 = vadd.f32 %v305, %v1248
        %v1250 = vpop.f32.mrb[0].mxu0
        %v1251 = vadd.f32 %v309, %v1250
        %v1252 = vpop.f32.mrb[0].mxu0
        %v1253 = vadd.f32 %v305, %v1252
        %v1254 = vpop.f32.mrb[0].mxu0
        %v1255 = vadd.f32 %v309, %v1254
        %1256 = vdwg.mxu0
        %1257 = vmatprep.subr.bf16.mxu0 %v483
        %1258 = vmatpush1.bf16.msra.mxu0 %v480
        %1259 = vmatprep.subr.bf16.mxu0 0
        %1260 = vmatpush1.bf16.msra.mxu0 0
        %1261 = vmatprep.subr.bf16.mxu0 0
        %1262 = vmatpush1.bf16.msra.mxu0 0
        %1263 = vmatprep.subr.bf16.mxu0 0
        %1264 = vmatpush1.bf16.msra.mxu0 0
        %1265 = vmatprep.subr.bf16.mxu0 0
        %1266 = vmatpush1.bf16.msra.mxu0 0
        %1267 = vmatprep.subr.bf16.mxu0 0
        %1268 = vmatpush1.bf16.msra.mxu0 0
        %1269 = vmatprep.subr.bf16.mxu0 0
        %1270 = vmatpush1.bf16.msra.mxu0 0
        %1271 = vmatprep.subr.bf16.mxu0 0
        %1272 = vmatpush1.bf16.msra.mxu0 0
        %1273 = vmatprep.subr.bf16.mxu0 0
        %1274 = vmatpush1.bf16.msra.mxu0 0
        %1275 = vmatprep.subr.bf16.mxu0 0
        %1276 = vmatpush1.bf16.msra.mxu0 0
        %1277 = vmatprep.subr.bf16.mxu0 0
        %1278 = vmatpush1.bf16.msra.mxu0 0
        %1279 = vmatprep.subr.bf16.mxu0 0
        %1280 = vmatpush1.bf16.msra.mxu0 0
        %1281 = vmatprep.subr.bf16.mxu0 0
        %1282 = vmatpush1.bf16.msra.mxu0 0
        %1283 = vmatprep.subr.bf16.mxu0 0
        %1284 = vmatpush1.bf16.msra.mxu0 0
        %1285 = vmatprep.subr.bf16.mxu0 0
        %1286 = vmatpush1.bf16.msra.mxu0 0
        %1287 = vmatprep.subr.bf16.mxu0 0
        %1288 = vmatpush1.bf16.msra.mxu0 0
        %1289 = vmatprep.mubr.bf16.mxu0 0
        %1290 = vmatmul.mubr.bf16.gmra.mrb[0].mxu0 %v407
        %v1291 = vpop.f32.mrb[0].mxu0
        %v1292 = vadd.f32 %v313, %v1291
        %v1293 = vpop.f32.mrb[0].mxu0
        %v1294 = vadd.f32 %v317, %v1293
        %v1295 = vpop.f32.mrb[0].mxu0
        %v1296 = vadd.f32 %v313, %v1295
        %v1297 = vpop.f32.mrb[0].mxu0
        %v1298 = vadd.f32 %v317, %v1297
        %1299 = vmatprep.mubr.bf16.mxu0 0
        %1300 = vmatmul.mubr.bf16.gmra.mrb[0].mxu0 %v410
        %v1301 = vpop.f32.mrb[0].mxu0
        %v1302 = vadd.f32 %v313, %v1301
        %v1303 = vpop.f32.mrb[0].mxu0
        %v1304 = vadd.f32 %v317, %v1303
        %v1305 = vpop.f32.mrb[0].mxu0
        %v1306 = vadd.f32 %v313, %v1305
        %v1307 = vpop.f32.mrb[0].mxu0
        %v1308 = vadd.f32 %v317, %v1307
        %1309 = vmatprep.mubr.bf16.mxu0 0
        %1310 = vmatmul.mubr.bf16.gmra.mrb[0].mxu0 %v413
        %v1311 = vpop.f32.mrb[0].mxu0
        %v1312 = vadd.f32 %v313, %v1311
        %v1313 = vpop.f32.mrb[0].mxu0
        %v1314 = vadd.f32 %v317, %v1313
        %v1315 = vpop.f32.mrb[0].mxu0
        %v1316 = vadd.f32 %v313, %v1315
        %v1317 = vpop.f32.mrb[0].mxu0
        %v1318 = vadd.f32 %v317, %v1317
        %1319 = vmatprep.mubr.bf16.mxu0 0
        %1320 = vmatmul.mubr.bf16.gmra.mrb[0].mxu0 %v416
        %v1321 = vpop.f32.mrb[0].mxu0
        %v1322 = vadd.f32 %v313, %v1321
        %v1323 = vpop.f32.mrb[0].mxu0
        %v1324 = vadd.f32 %v317, %v1323
        %v1325 = vpop.f32.mrb[0].mxu0
        %v1326 = vadd.f32 %v313, %v1325
        %v1327 = vpop.f32.mrb[0].mxu0
        %v1328 = vadd.f32 %v317, %v1327
        %1329 = vmatprep.mubr.bf16.mxu0 0
        %1330 = vmatmul.mubr.bf16.gmra.mrb[0].mxu0 %v419
        %v1331 = vpop.f32.mrb[0].mxu0
        %v1332 = vadd.f32 %v313, %v1331
        %v1333 = vpop.f32.mrb[0].mxu0
        %v1334 = vadd.f32 %v317, %v1333
        %v1335 = vpop.f32.mrb[0].mxu0
        %v1336 = vadd.f32 %v313, %v1335
        %v1337 = vpop.f32.mrb[0].mxu0
        %v1338 = vadd.f32 %v317, %v1337
        %1339 = vmatprep.mubr.bf16.mxu0 0
        %1340 = vmatmul.mubr.bf16.gmra.mrb[0].mxu0 %v422
        %v1341 = vpop.f32.mrb[0].mxu0
        %v1342 = vadd.f32 %v313, %v1341
        %v1343 = vpop.f32.mrb[0].mxu0
        %v1344 = vadd.f32 %v317, %v1343
        %v1345 = vpop.f32.mrb[0].mxu0
        %v1346 = vadd.f32 %v313, %v1345
        %v1347 = vpop.f32.mrb[0].mxu0
        %v1348 = vadd.f32 %v317, %v1347
        %1349 = vmatprep.mubr.bf16.mxu0 0
        %1350 = vmatmul.mubr.bf16.gmra.mrb[0].mxu0 %v425
        %v1351 = vpop.f32.mrb[0].mxu0
        %v1352 = vadd.f32 %v313, %v1351
        %v1353 = vpop.f32.mrb[0].mxu0
        %v1354 = vadd.f32 %v317, %v1353
        %v1355 = vpop.f32.mrb[0].mxu0
        %v1356 = vadd.f32 %v313, %v1355
        %v1357 = vpop.f32.mrb[0].mxu0
        %v1358 = vadd.f32 %v317, %v1357
        %1359 = vmatprep.mubr.bf16.mxu0 0
        %1360 = vmatmul.mubr.bf16.gmra.mrb[0].mxu0 %v428
        %v1361 = vpop.f32.mrb[0].mxu0
        %v1362 = vadd.f32 %v313, %v1361
        %v1363 = vpop.f32.mrb[0].mxu0
        %v1364 = vadd.f32 %v317, %v1363
        %v1365 = vpop.f32.mrb[0].mxu0
        %v1366 = vadd.f32 %v313, %v1365
        %v1367 = vpop.f32.mrb[0].mxu0
        %v1368 = vadd.f32 %v317, %v1367
        %1369 = vmatprep.mubr.bf16.mxu0 0
        %1370 = vmatmul.mubr.bf16.gmra.mrb[0].mxu0 %v431
        %v1371 = vpop.f32.mrb[0].mxu0
        %v1372 = vadd.f32 %v313, %v1371
        %v1373 = vpop.f32.mrb[0].mxu0
        %v1374 = vadd.f32 %v317, %v1373
        %v1375 = vpop.f32.mrb[0].mxu0
        %v1376 = vadd.f32 %v313, %v1375
        %v1377 = vpop.f32.mrb[0].mxu0
        %v1378 = vadd.f32 %v317, %v1377
        %1379 = vmatprep.mubr.bf16.mxu0 0
        %1380 = vmatmul.mubr.bf16.gmra.mrb[0].mxu0 %v434
        %v1381 = vpop.f32.mrb[0].mxu0
        %v1382 = vadd.f32 %v313, %v1381
        %v1383 = vpop.f32.mrb[0].mxu0
        %v1384 = vadd.f32 %v317, %v1383
        %v1385 = vpop.f32.mrb[0].mxu0
        %v1386 = vadd.f32 %v313, %v1385
        %v1387 = vpop.f32.mrb[0].mxu0
        %v1388 = vadd.f32 %v317, %v1387
        %1389 = vmatprep.mubr.bf16.mxu0 0
        %1390 = vmatmul.mubr.bf16.gmra.mrb[0].mxu0 %v437
        %v1391 = vpop.f32.mrb[0].mxu0
        %v1392 = vadd.f32 %v313, %v1391
        %v1393 = vpop.f32.mrb[0].mxu0
        %v1394 = vadd.f32 %v317, %v1393
        %v1395 = vpop.f32.mrb[0].mxu0
        %v1396 = vadd.f32 %v313, %v1395
        %v1397 = vpop.f32.mrb[0].mxu0
        %v1398 = vadd.f32 %v317, %v1397
        %1399 = vmatprep.mubr.bf16.mxu0 0
        %1400 = vmatmul.mubr.bf16.gmra.mrb[0].mxu0 %v440
        %v1401 = vpop.f32.mrb[0].mxu0
        %v1402 = vadd.f32 %v313, %v1401
        %v1403 = vpop.f32.mrb[0].mxu0
        %v1404 = vadd.f32 %v317, %v1403
        %v1405 = vpop.f32.mrb[0].mxu0
        %v1406 = vadd.f32 %v313, %v1405
        %v1407 = vpop.f32.mrb[0].mxu0
        %v1408 = vadd.f32 %v317, %v1407
        %1409 = vmatprep.mubr.bf16.mxu0 0
        %1410 = vmatmul.mubr.bf16.gmra.mrb[0].mxu0 %v443
        %v1411 = vpop.f32.mrb[0].mxu0
        %v1412 = vadd.f32 %v313, %v1411
        %v1413 = vpop.f32.mrb[0].mxu0
        %v1414 = vadd.f32 %v317, %v1413
        %v1415 = vpop.f32.mrb[0].mxu0
        %v1416 = vadd.f32 %v313, %v1415
        %v1417 = vpop.f32.mrb[0].mxu0
        %v1418 = vadd.f32 %v317, %v1417
        %1419 = vmatprep.mubr.bf16.mxu0 0
        %1420 = vmatmul.mubr.bf16.gmra.mrb[0].mxu0 %v446
        %v1421 = vpop.f32.mrb[0].mxu0
        %v1422 = vadd.f32 %v313, %v1421
        %v1423 = vpop.f32.mrb[0].mxu0
        %v1424 = vadd.f32 %v317, %v1423
        %v1425 = vpop.f32.mrb[0].mxu0
        %v1426 = vadd.f32 %v313, %v1425
        %v1427 = vpop.f32.mrb[0].mxu0
        %v1428 = vadd.f32 %v317, %v1427
        %1429 = vmatprep.mubr.bf16.mxu0 0
        %1430 = vmatmul.mubr.bf16.gmra.mrb[0].mxu0 %v449
        %v1431 = vpop.f32.mrb[0].mxu0
        %v1432 = vadd.f32 %v313, %v1431
        %v1433 = vpop.f32.mrb[0].mxu0
        %v1434 = vadd.f32 %v317, %v1433
        %v1435 = vpop.f32.mrb[0].mxu0
        %v1436 = vadd.f32 %v313, %v1435
        %v1437 = vpop.f32.mrb[0].mxu0
        %v1438 = vadd.f32 %v317, %v1437
        %1439 = vmatprep.mubr.bf16.mxu0 0
        %1440 = vmatmul.mubr.bf16.gmra.mrb[0].mxu0 %v452
        %v1441 = vpop.f32.mrb[0].mxu0
        %v1442 = vadd.f32 %v313, %v1441
        %v1443 = vpop.f32.mrb[0].mxu0
        %v1444 = vadd.f32 %v317, %v1443
        %v1445 = vpop.f32.mrb[0].mxu0
        %v1446 = vadd.f32 %v313, %v1445
        %v1447 = vpop.f32.mrb[0].mxu0
        %v1448 = vadd.f32 %v317, %v1447
        %1449 = vdwg.mxu0
        %v1450 = vxor.u32 %v520, 2147483648
        %v1451 = vxor.u32 %v522, 2147483648
        %v1452 = vxor.u32 %v713, 2147483648
        %v1453 = vxor.u32 %v715, 2147483648
        %v1454 = vxor.u32 %v906, 2147483648
        %v1455 = vxor.u32 %v908, 2147483648
        %v1456 = vxor.u32 %v1099, 2147483648
        %v1457 = vxor.u32 %v1101, 2147483648
        %v1458 = vxor.u32 %v1292, 2147483648
        %v1459 = vxor.u32 %v1294, 2147483648
        %v1460 = vxor.u32 %v524, 2147483648
        %v1461 = vxor.u32 %v526, 2147483648
        %v1462 = vxor.u32 %v717, 2147483648
        %v1463 = vxor.u32 %v719, 2147483648
        %v1464 = vxor.u32 %v910, 2147483648
        %v1465 = vxor.u32 %v912, 2147483648
        %v1466 = vxor.u32 %v1103, 2147483648
        %v1467 = vxor.u32 %v1105, 2147483648
        %v1468 = vxor.u32 %v1296, 2147483648
        %v1469 = vxor.u32 %v1298, 2147483648
        %v1470 = vxor.u32 %v530, 2147483648
        %v1471 = vxor.u32 %v532, 2147483648
        %v1472 = vxor.u32 %v723, 2147483648
        %v1473 = vxor.u32 %v725, 2147483648
        %v1474 = vxor.u32 %v916, 2147483648
        %v1475 = vxor.u32 %v918, 2147483648
        %v1476 = vxor.u32 %v1109, 2147483648
        %v1477 = vxor.u32 %v1111, 2147483648
        %v1478 = vxor.u32 %v1302, 2147483648
        %v1479 = vxor.u32 %v1304, 2147483648
        %v1480 = vxor.u32 %v534, 2147483648
        %v1481 = vxor.u32 %v536, 2147483648
        %v1482 = vxor.u32 %v727, 2147483648
        %v1483 = vxor.u32 %v729, 2147483648
        %v1484 = vxor.u32 %v920, 2147483648
        %v1485 = vxor.u32 %v922, 2147483648
        %v1486 = vxor.u32 %v1113, 2147483648
        %v1487 = vxor.u32 %v1115, 2147483648
        %v1488 = vxor.u32 %v1306, 2147483648
        %v1489 = vxor.u32 %v1308, 2147483648
        %v1490 = vxor.u32 %v540, 2147483648
        %v1491 = vxor.u32 %v542, 2147483648
        %v1492 = vxor.u32 %v733, 2147483648
        %v1493 = vxor.u32 %v735, 2147483648
        %v1494 = vxor.u32 %v926, 2147483648
        %v1495 = vxor.u32 %v928, 2147483648
        %v1496 = vxor.u32 %v1119, 2147483648
        %v1497 = vxor.u32 %v1121, 2147483648
        %v1498 = vxor.u32 %v1312, 2147483648
        %v1499 = vxor.u32 %v1314, 2147483648
        %v1500 = vxor.u32 %v544, 2147483648
        %v1501 = vxor.u32 %v546, 2147483648
        %v1502 = vxor.u32 %v737, 2147483648
        %v1503 = vxor.u32 %v739, 2147483648
        %v1504 = vxor.u32 %v930, 2147483648
        %v1505 = vxor.u32 %v932, 2147483648
        %v1506 = vxor.u32 %v1123, 2147483648
        %v1507 = vxor.u32 %v1125, 2147483648
        %v1508 = vxor.u32 %v1316, 2147483648
        %v1509 = vxor.u32 %v1318, 2147483648
        %v1510 = vxor.u32 %v550, 2147483648
        %v1511 = vxor.u32 %v552, 2147483648
        %v1512 = vxor.u32 %v743, 2147483648
        %v1513 = vxor.u32 %v745, 2147483648
        %v1514 = vxor.u32 %v936, 2147483648
        %v1515 = vxor.u32 %v938, 2147483648
        %v1516 = vxor.u32 %v1129, 2147483648
        %v1517 = vxor.u32 %v1131, 2147483648
        %v1518 = vxor.u32 %v1322, 2147483648
        %v1519 = vxor.u32 %v1324, 2147483648
        %v1520 = vxor.u32 %v554, 2147483648
        %v1521 = vxor.u32 %v556, 2147483648
        %v1522 = vxor.u32 %v747, 2147483648
        %v1523 = vxor.u32 %v749, 2147483648
        %v1524 = vxor.u32 %v940, 2147483648
        %v1525 = vxor.u32 %v942, 2147483648
        %v1526 = vxor.u32 %v1133, 2147483648
        %v1527 = vxor.u32 %v1135, 2147483648
        %v1528 = vxor.u32 %v1326, 2147483648
        %v1529 = vxor.u32 %v1328, 2147483648
        %v1530 = vxor.u32 %v560, 2147483648
        %v1531 = vxor.u32 %v562, 2147483648
        %v1532 = vxor.u32 %v753, 2147483648
        %v1533 = vxor.u32 %v755, 2147483648
        %v1534 = vxor.u32 %v946, 2147483648
        %v1535 = vxor.u32 %v948, 2147483648
        %v1536 = vxor.u32 %v1139, 2147483648
        %v1537 = vxor.u32 %v1141, 2147483648
        %v1538 = vxor.u32 %v1332, 2147483648
        %v1539 = vxor.u32 %v1334, 2147483648
        %v1540 = vxor.u32 %v564, 2147483648
        %v1541 = vxor.u32 %v566, 2147483648
        %v1542 = vxor.u32 %v757, 2147483648
        %v1543 = vxor.u32 %v759, 2147483648
        %v1544 = vxor.u32 %v950, 2147483648
        %v1545 = vxor.u32 %v952, 2147483648
        %v1546 = vxor.u32 %v1143, 2147483648
        %v1547 = vxor.u32 %v1145, 2147483648
        %v1548 = vxor.u32 %v1336, 2147483648
        %v1549 = vxor.u32 %v1338, 2147483648
        %v1550 = vxor.u32 %v570, 2147483648
        %v1551 = vxor.u32 %v572, 2147483648
        %v1552 = vxor.u32 %v763, 2147483648
        %v1553 = vxor.u32 %v765, 2147483648
        %v1554 = vxor.u32 %v956, 2147483648
        %v1555 = vxor.u32 %v958, 2147483648
        %v1556 = vxor.u32 %v1149, 2147483648
        %v1557 = vxor.u32 %v1151, 2147483648
        %v1558 = vxor.u32 %v1342, 2147483648
        %v1559 = vxor.u32 %v1344, 2147483648
        %v1560 = vxor.u32 %v574, 2147483648
        %v1561 = vxor.u32 %v576, 2147483648
        %v1562 = vxor.u32 %v767, 2147483648
        %v1563 = vxor.u32 %v769, 2147483648
        %v1564 = vxor.u32 %v960, 2147483648
        %v1565 = vxor.u32 %v962, 2147483648
        %v1566 = vxor.u32 %v1153, 2147483648
        %v1567 = vxor.u32 %v1155, 2147483648
        %v1568 = vxor.u32 %v1346, 2147483648
        %v1569 = vxor.u32 %v1348, 2147483648
        %v1570 = vxor.u32 %v580, 2147483648
        %v1571 = vxor.u32 %v582, 2147483648
        %v1572 = vxor.u32 %v773, 2147483648
        %v1573 = vxor.u32 %v775, 2147483648
        %v1574 = vxor.u32 %v966, 2147483648
        %v1575 = vxor.u32 %v968, 2147483648
        %v1576 = vxor.u32 %v1159, 2147483648
        %v1577 = vxor.u32 %v1161, 2147483648
        %v1578 = vxor.u32 %v1352, 2147483648
        %v1579 = vxor.u32 %v1354, 2147483648
        %v1580 = vxor.u32 %v584, 2147483648
        %v1581 = vxor.u32 %v586, 2147483648
        %v1582 = vxor.u32 %v777, 2147483648
        %v1583 = vxor.u32 %v779, 2147483648
        %v1584 = vxor.u32 %v970, 2147483648
        %v1585 = vxor.u32 %v972, 2147483648
        %v1586 = vxor.u32 %v1163, 2147483648
        %v1587 = vxor.u32 %v1165, 2147483648
        %v1588 = vxor.u32 %v1356, 2147483648
        %v1589 = vxor.u32 %v1358, 2147483648
        %v1590 = vxor.u32 %v590, 2147483648
        %v1591 = vxor.u32 %v592, 2147483648
        %v1592 = vxor.u32 %v783, 2147483648
        %v1593 = vxor.u32 %v785, 2147483648
        %v1594 = vxor.u32 %v976, 2147483648
        %v1595 = vxor.u32 %v978, 2147483648
        %v1596 = vxor.u32 %v1169, 2147483648
        %v1597 = vxor.u32 %v1171, 2147483648
        %v1598 = vxor.u32 %v1362, 2147483648
        %v1599 = vxor.u32 %v1364, 2147483648
        %v1600 = vxor.u32 %v594, 2147483648
        %v1601 = vxor.u32 %v596, 2147483648
        %v1602 = vxor.u32 %v787, 2147483648
        %v1603 = vxor.u32 %v789, 2147483648
        %v1604 = vxor.u32 %v980, 2147483648
        %v1605 = vxor.u32 %v982, 2147483648
        %v1606 = vxor.u32 %v1173, 2147483648
        %v1607 = vxor.u32 %v1175, 2147483648
        %v1608 = vxor.u32 %v1366, 2147483648
        %v1609 = vxor.u32 %v1368, 2147483648
        %v1610 = vxor.u32 %v600, 2147483648
        %v1611 = vxor.u32 %v602, 2147483648
        %v1612 = vxor.u32 %v793, 2147483648
        %v1613 = vxor.u32 %v795, 2147483648
        %v1614 = vxor.u32 %v986, 2147483648
        %v1615 = vxor.u32 %v988, 2147483648
        %v1616 = vxor.u32 %v1179, 2147483648
        %v1617 = vxor.u32 %v1181, 2147483648
        %v1618 = vxor.u32 %v1372, 2147483648
        %v1619 = vxor.u32 %v1374, 2147483648
        %v1620 = vxor.u32 %v604, 2147483648
        %v1621 = vxor.u32 %v606, 2147483648
        %v1622 = vxor.u32 %v797, 2147483648
        %v1623 = vxor.u32 %v799, 2147483648
        %v1624 = vxor.u32 %v990, 2147483648
        %v1625 = vxor.u32 %v992, 2147483648
        %v1626 = vxor.u32 %v1183, 2147483648
        %v1627 = vxor.u32 %v1185, 2147483648
        %v1628 = vxor.u32 %v1376, 2147483648
        %v1629 = vxor.u32 %v1378, 2147483648
        %v1630 = vxor.u32 %v610, 2147483648
        %v1631 = vxor.u32 %v612, 2147483648
        %v1632 = vxor.u32 %v803, 2147483648
        %v1633 = vxor.u32 %v805, 2147483648
        %v1634 = vxor.u32 %v996, 2147483648
        %v1635 = vxor.u32 %v998, 2147483648
        %v1636 = vxor.u32 %v1189, 2147483648
        %v1637 = vxor.u32 %v1191, 2147483648
        %v1638 = vxor.u32 %v1382, 2147483648
        %v1639 = vxor.u32 %v1384, 2147483648
        %v1640 = vxor.u32 %v614, 2147483648
        %v1641 = vxor.u32 %v616, 2147483648
        %v1642 = vxor.u32 %v807, 2147483648
        %v1643 = vxor.u32 %v809, 2147483648
        %v1644 = vxor.u32 %v1000, 2147483648
        %v1645 = vxor.u32 %v1002, 2147483648
        %v1646 = vxor.u32 %v1193, 2147483648
        %v1647 = vxor.u32 %v1195, 2147483648
        %v1648 = vxor.u32 %v1386, 2147483648
        %v1649 = vxor.u32 %v1388, 2147483648
        %v1650 = vxor.u32 %v620, 2147483648
        %v1651 = vxor.u32 %v622, 2147483648
        %v1652 = vxor.u32 %v813, 2147483648
        %v1653 = vxor.u32 %v815, 2147483648
        %v1654 = vxor.u32 %v1006, 2147483648
        %v1655 = vxor.u32 %v1008, 2147483648
        %v1656 = vxor.u32 %v1199, 2147483648
        %v1657 = vxor.u32 %v1201, 2147483648
        %v1658 = vxor.u32 %v1392, 2147483648
        %v1659 = vxor.u32 %v1394, 2147483648
        %v1660 = vxor.u32 %v624, 2147483648
        %v1661 = vxor.u32 %v626, 2147483648
        %v1662 = vxor.u32 %v817, 2147483648
        %v1663 = vxor.u32 %v819, 2147483648
        %v1664 = vxor.u32 %v1010, 2147483648
        %v1665 = vxor.u32 %v1012, 2147483648
        %v1666 = vxor.u32 %v1203, 2147483648
        %v1667 = vxor.u32 %v1205, 2147483648
        %v1668 = vxor.u32 %v1396, 2147483648
        %v1669 = vxor.u32 %v1398, 2147483648
        %v1670 = vxor.u32 %v630, 2147483648
        %v1671 = vxor.u32 %v632, 2147483648
        %v1672 = vxor.u32 %v823, 2147483648
        %v1673 = vxor.u32 %v825, 2147483648
        %v1674 = vxor.u32 %v1016, 2147483648
        %v1675 = vxor.u32 %v1018, 2147483648
        %v1676 = vxor.u32 %v1209, 2147483648
        %v1677 = vxor.u32 %v1211, 2147483648
        %v1678 = vxor.u32 %v1402, 2147483648
        %v1679 = vxor.u32 %v1404, 2147483648
        %v1680 = vxor.u32 %v634, 2147483648
        %v1681 = vxor.u32 %v636, 2147483648
        %v1682 = vxor.u32 %v827, 2147483648
        %v1683 = vxor.u32 %v829, 2147483648
        %v1684 = vxor.u32 %v1020, 2147483648
        %v1685 = vxor.u32 %v1022, 2147483648
        %v1686 = vxor.u32 %v1213, 2147483648
        %v1687 = vxor.u32 %v1215, 2147483648
        %v1688 = vxor.u32 %v1406, 2147483648
        %v1689 = vxor.u32 %v1408, 2147483648
        %v1690 = vxor.u32 %v640, 2147483648
        %v1691 = vxor.u32 %v642, 2147483648
        %v1692 = vxor.u32 %v833, 2147483648
        %v1693 = vxor.u32 %v835, 2147483648
        %v1694 = vxor.u32 %v1026, 2147483648
        %v1695 = vxor.u32 %v1028, 2147483648
        %v1696 = vxor.u32 %v1219, 2147483648
        %v1697 = vxor.u32 %v1221, 2147483648
        %v1698 = vxor.u32 %v1412, 2147483648
        %v1699 = vxor.u32 %v1414, 2147483648
        %v1700 = vxor.u32 %v644, 2147483648
        %v1701 = vxor.u32 %v646, 2147483648
        %v1702 = vxor.u32 %v837, 2147483648
        %v1703 = vxor.u32 %v839, 2147483648
        %v1704 = vxor.u32 %v1030, 2147483648
        %v1705 = vxor.u32 %v1032, 2147483648
        %v1706 = vxor.u32 %v1223, 2147483648
        %v1707 = vxor.u32 %v1225, 2147483648
        %v1708 = vxor.u32 %v1416, 2147483648
        %v1709 = vxor.u32 %v1418, 2147483648
        %v1710 = vxor.u32 %v650, 2147483648
        %v1711 = vxor.u32 %v652, 2147483648
        %v1712 = vxor.u32 %v843, 2147483648
        %v1713 = vxor.u32 %v845, 2147483648
        %v1714 = vxor.u32 %v1036, 2147483648
        %v1715 = vxor.u32 %v1038, 2147483648
        %v1716 = vxor.u32 %v1229, 2147483648
        %v1717 = vxor.u32 %v1231, 2147483648
        %v1718 = vxor.u32 %v1422, 2147483648
        %v1719 = vxor.u32 %v1424, 2147483648
        %v1720 = vxor.u32 %v654, 2147483648
        %v1721 = vxor.u32 %v656, 2147483648
        %v1722 = vxor.u32 %v847, 2147483648
        %v1723 = vxor.u32 %v849, 2147483648
        %v1724 = vxor.u32 %v1040, 2147483648
        %v1725 = vxor.u32 %v1042, 2147483648
        %v1726 = vxor.u32 %v1233, 2147483648
        %v1727 = vxor.u32 %v1235, 2147483648
        %v1728 = vxor.u32 %v1426, 2147483648
        %v1729 = vxor.u32 %v1428, 2147483648
        %v1730 = vxor.u32 %v660, 2147483648
        %v1731 = vxor.u32 %v662, 2147483648
        %v1732 = vxor.u32 %v853, 2147483648
        %v1733 = vxor.u32 %v855, 2147483648
        %v1734 = vxor.u32 %v1046, 2147483648
        %v1735 = vxor.u32 %v1048, 2147483648
        %v1736 = vxor.u32 %v1239, 2147483648
        %v1737 = vxor.u32 %v1241, 2147483648
        %v1738 = vxor.u32 %v1432, 2147483648
        %v1739 = vxor.u32 %v1434, 2147483648
        %v1740 = vxor.u32 %v664, 2147483648
        %v1741 = vxor.u32 %v666, 2147483648
        %v1742 = vxor.u32 %v857, 2147483648
        %v1743 = vxor.u32 %v859, 2147483648
        %v1744 = vxor.u32 %v1050, 2147483648
        %v1745 = vxor.u32 %v1052, 2147483648
        %v1746 = vxor.u32 %v1243, 2147483648
        %v1747 = vxor.u32 %v1245, 2147483648
        %v1748 = vxor.u32 %v1436, 2147483648
        %v1749 = vxor.u32 %v1438, 2147483648
        %v1750 = vxor.u32 %v670, 2147483648
        %v1751 = vxor.u32 %v672, 2147483648
        %v1752 = vxor.u32 %v863, 2147483648
        %v1753 = vxor.u32 %v865, 2147483648
        %v1754 = vxor.u32 %v1056, 2147483648
        %v1755 = vxor.u32 %v1058, 2147483648
        %v1756 = vxor.u32 %v1249, 2147483648
        %v1757 = vxor.u32 %v1251, 2147483648
        %v1758 = vxor.u32 %v1442, 2147483648
        %v1759 = vxor.u32 %v1444, 2147483648
        %v1760 = vxor.u32 %v674, 2147483648
        %v1761 = vxor.u32 %v676, 2147483648
        %v1762 = vxor.u32 %v867, 2147483648
        %v1763 = vxor.u32 %v869, 2147483648
        %v1764 = vxor.u32 %v1060, 2147483648
        %v1765 = vxor.u32 %v1062, 2147483648
        %v1766 = vxor.u32 %v1253, 2147483648
        %v1767 = vxor.u32 %v1255, 2147483648
        %v1768 = vxor.u32 %v1446, 2147483648
        %v1769 = vxor.u32 %v1448, 2147483648
        %v1770 = vmul.f32 %v1450, 1.442695
        %v1771 = vpow.pop %v1770
        %v1772 = vmul.f32 %v1451, 1.442695
        %v1773 = vpow.pop %v1772
        %v1774 = vmul.f32 %v1452, 1.442695
        %v1775 = vpow.pop %v1774
        %v1776 = vmul.f32 %v1453, 1.442695
        %v1777 = vpow.pop %v1776
        %v1778 = vmul.f32 %v1454, 1.442695
        %v1779 = vpow.pop %v1778
        %v1780 = vmul.f32 %v1455, 1.442695
        %v1781 = vpow.pop %v1780
        %v1782 = vmul.f32 %v1456, 1.442695
        %v1783 = vpow.pop %v1782
        %v1784 = vmul.f32 %v1457, 1.442695
        %v1785 = vpow.pop %v1784
        %v1786 = vmul.f32 %v1458, 1.442695
        %v1787 = vpow.pop %v1786
        %v1788 = vmul.f32 %v1459, 1.442695
        %v1789 = vpow.pop %v1788
        %v1790 = vmul.f32 %v1460, 1.442695
        %v1791 = vpow.pop %v1790
        %v1792 = vmul.f32 %v1461, 1.442695
        %v1793 = vpow.pop %v1792
        %v1794 = vmul.f32 %v1462, 1.442695
        %v1795 = vpow.pop %v1794
        %v1796 = vmul.f32 %v1463, 1.442695
        %v1797 = vpow.pop %v1796
        %v1798 = vmul.f32 %v1464, 1.442695
        %v1799 = vpow.pop %v1798
        %v1800 = vmul.f32 %v1465, 1.442695
        %v1801 = vpow.pop %v1800
        %v1802 = vmul.f32 %v1466, 1.442695
        %v1803 = vpow.pop %v1802
        %v1804 = vmul.f32 %v1467, 1.442695
        %v1805 = vpow.pop %v1804
        %v1806 = vmul.f32 %v1468, 1.442695
        %v1807 = vpow.pop %v1806
        %v1808 = vmul.f32 %v1469, 1.442695
        %v1809 = vpow.pop %v1808
        %v1810 = vmul.f32 %v1470, 1.442695
        %v1811 = vpow.pop %v1810
        %v1812 = vmul.f32 %v1471, 1.442695
        %v1813 = vpow.pop %v1812
        %v1814 = vmul.f32 %v1472, 1.442695
        %v1815 = vpow.pop %v1814
        %v1816 = vmul.f32 %v1473, 1.442695
        %v1817 = vpow.pop %v1816
        %v1818 = vmul.f32 %v1474, 1.442695
        %v1819 = vpow.pop %v1818
        %v1820 = vmul.f32 %v1475, 1.442695
        %v1821 = vpow.pop %v1820
        %v1822 = vmul.f32 %v1476, 1.442695
        %v1823 = vpow.pop %v1822
        %v1824 = vmul.f32 %v1477, 1.442695
        %v1825 = vpow.pop %v1824
        %v1826 = vmul.f32 %v1478, 1.442695
        %v1827 = vpow.pop %v1826
        %v1828 = vmul.f32 %v1479, 1.442695
        %v1829 = vpow.pop %v1828
        %v1830 = vmul.f32 %v1480, 1.442695
        %v1831 = vpow.pop %v1830
        %v1832 = vmul.f32 %v1481, 1.442695
        %v1833 = vpow.pop %v1832
        %v1834 = vmul.f32 %v1482, 1.442695
        %v1835 = vpow.pop %v1834
        %v1836 = vmul.f32 %v1483, 1.442695
        %v1837 = vpow.pop %v1836
        %v1838 = vmul.f32 %v1484, 1.442695
        %v1839 = vpow.pop %v1838
        %v1840 = vmul.f32 %v1485, 1.442695
        %v1841 = vpow.pop %v1840
        %v1842 = vmul.f32 %v1486, 1.442695
        %v1843 = vpow.pop %v1842
        %v1844 = vmul.f32 %v1487, 1.442695
        %v1845 = vpow.pop %v1844
        %v1846 = vmul.f32 %v1488, 1.442695
        %v1847 = vpow.pop %v1846
        %v1848 = vmul.f32 %v1489, 1.442695
        %v1849 = vpow.pop %v1848
        %v1850 = vmul.f32 %v1490, 1.442695
        %v1851 = vpow.pop %v1850
        %v1852 = vmul.f32 %v1491, 1.442695
        %v1853 = vpow.pop %v1852
        %v1854 = vmul.f32 %v1492, 1.442695
        %v1855 = vpow.pop %v1854
        %v1856 = vmul.f32 %v1493, 1.442695
        %v1857 = vpow.pop %v1856
        %v1858 = vmul.f32 %v1494, 1.442695
        %v1859 = vpow.pop %v1858
        %v1860 = vmul.f32 %v1495, 1.442695
        %v1861 = vpow.pop %v1860
        %v1862 = vmul.f32 %v1496, 1.442695
        %v1863 = vpow.pop %v1862
        %v1864 = vmul.f32 %v1497, 1.442695
        %v1865 = vpow.pop %v1864
        %v1866 = vmul.f32 %v1498, 1.442695
        %v1867 = vpow.pop %v1866
        %v1868 = vmul.f32 %v1499, 1.442695
        %v1869 = vpow.pop %v1868
        %v1870 = vmul.f32 %v1500, 1.442695
        %v1871 = vpow.pop %v1870
        %v1872 = vmul.f32 %v1501, 1.442695
        %v1873 = vpow.pop %v1872
        %v1874 = vmul.f32 %v1502, 1.442695
        %v1875 = vpow.pop %v1874
        %v1876 = vmul.f32 %v1503, 1.442695
        %v1877 = vpow.pop %v1876
        %v1878 = vmul.f32 %v1504, 1.442695
        %v1879 = vpow.pop %v1878
        %v1880 = vmul.f32 %v1505, 1.442695
        %v1881 = vpow.pop %v1880
        %v1882 = vmul.f32 %v1506, 1.442695
        %v1883 = vpow.pop %v1882
        %v1884 = vmul.f32 %v1507, 1.442695
        %v1885 = vpow.pop %v1884
        %v1886 = vmul.f32 %v1508, 1.442695
        %v1887 = vpow.pop %v1886
        %v1888 = vmul.f32 %v1509, 1.442695
        %v1889 = vpow.pop %v1888
        %v1890 = vmul.f32 %v1510, 1.442695
        %v1891 = vpow.pop %v1890
        %v1892 = vmul.f32 %v1511, 1.442695
        %v1893 = vpow.pop %v1892
        %v1894 = vmul.f32 %v1512, 1.442695
        %v1895 = vpow.pop %v1894
        %v1896 = vmul.f32 %v1513, 1.442695
        %v1897 = vpow.pop %v1896
        %v1898 = vmul.f32 %v1514, 1.442695
        %v1899 = vpow.pop %v1898
        %v1900 = vmul.f32 %v1515, 1.442695
        %v1901 = vpow.pop %v1900
        %v1902 = vmul.f32 %v1516, 1.442695
        %v1903 = vpow.pop %v1902
        %v1904 = vmul.f32 %v1517, 1.442695
        %v1905 = vpow.pop %v1904
        %v1906 = vmul.f32 %v1518, 1.442695
        %v1907 = vpow.pop %v1906
        %v1908 = vmul.f32 %v1519, 1.442695
        %v1909 = vpow.pop %v1908
        %v1910 = vmul.f32 %v1520, 1.442695
        %v1911 = vpow.pop %v1910
        %v1912 = vmul.f32 %v1521, 1.442695
        %v1913 = vpow.pop %v1912
        %v1914 = vmul.f32 %v1522, 1.442695
        %v1915 = vpow.pop %v1914
        %v1916 = vmul.f32 %v1523, 1.442695
        %v1917 = vpow.pop %v1916
        %v1918 = vmul.f32 %v1524, 1.442695
        %v1919 = vpow.pop %v1918
        %v1920 = vmul.f32 %v1525, 1.442695
        %v1921 = vpow.pop %v1920
        %v1922 = vmul.f32 %v1526, 1.442695
        %v1923 = vpow.pop %v1922
        %v1924 = vmul.f32 %v1527, 1.442695
        %v1925 = vpow.pop %v1924
        %v1926 = vmul.f32 %v1528, 1.442695
        %v1927 = vpow.pop %v1926
        %v1928 = vmul.f32 %v1529, 1.442695
        %v1929 = vpow.pop %v1928
        %v1930 = vmul.f32 %v1530, 1.442695
        %v1931 = vpow.pop %v1930
        %v1932 = vmul.f32 %v1531, 1.442695
        %v1933 = vpow.pop %v1932
        %v1934 = vmul.f32 %v1532, 1.442695
        %v1935 = vpow.pop %v1934
        %v1936 = vmul.f32 %v1533, 1.442695
        %v1937 = vpow.pop %v1936
        %v1938 = vmul.f32 %v1534, 1.442695
        %v1939 = vpow.pop %v1938
        %v1940 = vmul.f32 %v1535, 1.442695
        %v1941 = vpow.pop %v1940
        %v1942 = vmul.f32 %v1536, 1.442695
        %v1943 = vpow.pop %v1942
        %v1944 = vmul.f32 %v1537, 1.442695
        %v1945 = vpow.pop %v1944
        %v1946 = vmul.f32 %v1538, 1.442695
        %v1947 = vpow.pop %v1946
        %v1948 = vmul.f32 %v1539, 1.442695
        %v1949 = vpow.pop %v1948
        %v1950 = vmul.f32 %v1540, 1.442695
        %v1951 = vpow.pop %v1950
        %v1952 = vmul.f32 %v1541, 1.442695
        %v1953 = vpow.pop %v1952
        %v1954 = vmul.f32 %v1542, 1.442695
        %v1955 = vpow.pop %v1954
        %v1956 = vmul.f32 %v1543, 1.442695
        %v1957 = vpow.pop %v1956
        %v1958 = vmul.f32 %v1544, 1.442695
        %v1959 = vpow.pop %v1958
        %v1960 = vmul.f32 %v1545, 1.442695
        %v1961 = vpow.pop %v1960
        %v1962 = vmul.f32 %v1546, 1.442695
        %v1963 = vpow.pop %v1962
        %v1964 = vmul.f32 %v1547, 1.442695
        %v1965 = vpow.pop %v1964
        %v1966 = vmul.f32 %v1548, 1.442695
        %v1967 = vpow.pop %v1966
        %v1968 = vmul.f32 %v1549, 1.442695
        %v1969 = vpow.pop %v1968
        %v1970 = vmul.f32 %v1550, 1.442695
        %v1971 = vpow.pop %v1970
        %v1972 = vmul.f32 %v1551, 1.442695
        %v1973 = vpow.pop %v1972
        %v1974 = vmul.f32 %v1552, 1.442695
        %v1975 = vpow.pop %v1974
        %v1976 = vmul.f32 %v1553, 1.442695
        %v1977 = vpow.pop %v1976
        %v1978 = vmul.f32 %v1554, 1.442695
        %v1979 = vpow.pop %v1978
        %v1980 = vmul.f32 %v1555, 1.442695
        %v1981 = vpow.pop %v1980
        %v1982 = vmul.f32 %v1556, 1.442695
        %v1983 = vpow.pop %v1982
        %v1984 = vmul.f32 %v1557, 1.442695
        %v1985 = vpow.pop %v1984
        %v1986 = vmul.f32 %v1558, 1.442695
        %v1987 = vpow.pop %v1986
        %v1988 = vmul.f32 %v1559, 1.442695
        %v1989 = vpow.pop %v1988
        %v1990 = vmul.f32 %v1560, 1.442695
        %v1991 = vpow.pop %v1990
        %v1992 = vmul.f32 %v1561, 1.442695
        %v1993 = vpow.pop %v1992
        %v1994 = vmul.f32 %v1562, 1.442695
        %v1995 = vpow.pop %v1994
        %v1996 = vmul.f32 %v1563, 1.442695
        %v1997 = vpow.pop %v1996
        %v1998 = vmul.f32 %v1564, 1.442695
        %v1999 = vpow.pop %v1998
        %v2000 = vmul.f32 %v1565, 1.442695
        %v2001 = vpow.pop %v2000
        %v2002 = vmul.f32 %v1566, 1.442695
        %v2003 = vpow.pop %v2002
        %v2004 = vmul.f32 %v1567, 1.442695
        %v2005 = vpow.pop %v2004
        %v2006 = vmul.f32 %v1568, 1.442695
        %v2007 = vpow.pop %v2006
        %v2008 = vmul.f32 %v1569, 1.442695
        %v2009 = vpow.pop %v2008
        %v2010 = vmul.f32 %v1570, 1.442695
        %v2011 = vpow.pop %v2010
        %v2012 = vmul.f32 %v1571, 1.442695
        %v2013 = vpow.pop %v2012
        %v2014 = vmul.f32 %v1572, 1.442695
        %v2015 = vpow.pop %v2014
        %v2016 = vmul.f32 %v1573, 1.442695
        %v2017 = vpow.pop %v2016
        %v2018 = vmul.f32 %v1574, 1.442695
        %v2019 = vpow.pop %v2018
        %v2020 = vmul.f32 %v1575, 1.442695
        %v2021 = vpow.pop %v2020
        %v2022 = vmul.f32 %v1576, 1.442695
        %v2023 = vpow.pop %v2022
        %v2024 = vmul.f32 %v1577, 1.442695
        %v2025 = vpow.pop %v2024
        %v2026 = vmul.f32 %v1578, 1.442695
        %v2027 = vpow.pop %v2026
        %v2028 = vmul.f32 %v1579, 1.442695
        %v2029 = vpow.pop %v2028
        %v2030 = vmul.f32 %v1580, 1.442695
        %v2031 = vpow.pop %v2030
        %v2032 = vmul.f32 %v1581, 1.442695
        %v2033 = vpow.pop %v2032
        %v2034 = vmul.f32 %v1582, 1.442695
        %v2035 = vpow.pop %v2034
        %v2036 = vmul.f32 %v1583, 1.442695
        %v2037 = vpow.pop %v2036
        %v2038 = vmul.f32 %v1584, 1.442695
        %v2039 = vpow.pop %v2038
        %v2040 = vmul.f32 %v1585, 1.442695
        %v2041 = vpow.pop %v2040
        %v2042 = vmul.f32 %v1586, 1.442695
        %v2043 = vpow.pop %v2042
        %v2044 = vmul.f32 %v1587, 1.442695
        %v2045 = vpow.pop %v2044
        %v2046 = vmul.f32 %v1588, 1.442695
        %v2047 = vpow.pop %v2046
        %v2048 = vmul.f32 %v1589, 1.442695
        %v2049 = vpow.pop %v2048
        %v2050 = vmul.f32 %v1590, 1.442695
        %v2051 = vpow.pop %v2050
        %v2052 = vmul.f32 %v1591, 1.442695
        %v2053 = vpow.pop %v2052
        %v2054 = vmul.f32 %v1592, 1.442695
        %v2055 = vpow.pop %v2054
        %v2056 = vmul.f32 %v1593, 1.442695
        %v2057 = vpow.pop %v2056
        %v2058 = vmul.f32 %v1594, 1.442695
        %v2059 = vpow.pop %v2058
        %v2060 = vmul.f32 %v1595, 1.442695
        %v2061 = vpow.pop %v2060
        %v2062 = vmul.f32 %v1596, 1.442695
        %v2063 = vpow.pop %v2062
        %v2064 = vmul.f32 %v1597, 1.442695
        %v2065 = vpow.pop %v2064
        %v2066 = vmul.f32 %v1598, 1.442695
        %v2067 = vpow.pop %v2066
        %v2068 = vmul.f32 %v1599, 1.442695
        %v2069 = vpow.pop %v2068
        %v2070 = vmul.f32 %v1600, 1.442695
        %v2071 = vpow.pop %v2070
        %v2072 = vmul.f32 %v1601, 1.442695
        %v2073 = vpow.pop %v2072
        %v2074 = vmul.f32 %v1602, 1.442695
        %v2075 = vpow.pop %v2074
        %v2076 = vmul.f32 %v1603, 1.442695
        %v2077 = vpow.pop %v2076
        %v2078 = vmul.f32 %v1604, 1.442695
        %v2079 = vpow.pop %v2078
        %v2080 = vmul.f32 %v1605, 1.442695
        %v2081 = vpow.pop %v2080
        %v2082 = vmul.f32 %v1606, 1.442695
        %v2083 = vpow.pop %v2082
        %v2084 = vmul.f32 %v1607, 1.442695
        %v2085 = vpow.pop %v2084
        %v2086 = vmul.f32 %v1608, 1.442695
        %v2087 = vpow.pop %v2086
        %v2088 = vmul.f32 %v1609, 1.442695
        %v2089 = vpow.pop %v2088
        %v2090 = vmul.f32 %v1610, 1.442695
        %v2091 = vpow.pop %v2090
        %v2092 = vmul.f32 %v1611, 1.442695
        %v2093 = vpow.pop %v2092
        %v2094 = vmul.f32 %v1612, 1.442695
        %v2095 = vpow.pop %v2094
        %v2096 = vmul.f32 %v1613, 1.442695
        %v2097 = vpow.pop %v2096
        %v2098 = vmul.f32 %v1614, 1.442695
        %v2099 = vpow.pop %v2098
        %v2100 = vmul.f32 %v1615, 1.442695
        %v2101 = vpow.pop %v2100
        %v2102 = vmul.f32 %v1616, 1.442695
        %v2103 = vpow.pop %v2102
        %v2104 = vmul.f32 %v1617, 1.442695
        %v2105 = vpow.pop %v2104
        %v2106 = vmul.f32 %v1618, 1.442695
        %v2107 = vpow.pop %v2106
        %v2108 = vmul.f32 %v1619, 1.442695
        %v2109 = vpow.pop %v2108
        %v2110 = vmul.f32 %v1620, 1.442695
        %v2111 = vpow.pop %v2110
        %v2112 = vmul.f32 %v1621, 1.442695
        %v2113 = vpow.pop %v2112
        %v2114 = vmul.f32 %v1622, 1.442695
        %v2115 = vpow.pop %v2114
        %v2116 = vmul.f32 %v1623, 1.442695
        %v2117 = vpow.pop %v2116
        %v2118 = vmul.f32 %v1624, 1.442695
        %v2119 = vpow.pop %v2118
        %v2120 = vmul.f32 %v1625, 1.442695
        %v2121 = vpow.pop %v2120
        %v2122 = vmul.f32 %v1626, 1.442695
        %v2123 = vpow.pop %v2122
        %v2124 = vmul.f32 %v1627, 1.442695
        %v2125 = vpow.pop %v2124
        %v2126 = vmul.f32 %v1628, 1.442695
        %v2127 = vpow.pop %v2126
        %v2128 = vmul.f32 %v1629, 1.442695
        %v2129 = vpow.pop %v2128
        %v2130 = vmul.f32 %v1630, 1.442695
        %v2131 = vpow.pop %v2130
        %v2132 = vmul.f32 %v1631, 1.442695
        %v2133 = vpow.pop %v2132
        %v2134 = vmul.f32 %v1632, 1.442695
        %v2135 = vpow.pop %v2134
        %v2136 = vmul.f32 %v1633, 1.442695
        %v2137 = vpow.pop %v2136
        %v2138 = vmul.f32 %v1634, 1.442695
        %v2139 = vpow.pop %v2138
        %v2140 = vmul.f32 %v1635, 1.442695
        %v2141 = vpow.pop %v2140
        %v2142 = vmul.f32 %v1636, 1.442695
        %v2143 = vpow.pop %v2142
        %v2144 = vmul.f32 %v1637, 1.442695
        %v2145 = vpow.pop %v2144
        %v2146 = vmul.f32 %v1638, 1.442695
        %v2147 = vpow.pop %v2146
        %v2148 = vmul.f32 %v1639, 1.442695
        %v2149 = vpow.pop %v2148
        %v2150 = vmul.f32 %v1640, 1.442695
        %v2151 = vpow.pop %v2150
        %v2152 = vmul.f32 %v1641, 1.442695
        %v2153 = vpow.pop %v2152
        %v2154 = vmul.f32 %v1642, 1.442695
        %v2155 = vpow.pop %v2154
        %v2156 = vmul.f32 %v1643, 1.442695
        %v2157 = vpow.pop %v2156
        %v2158 = vmul.f32 %v1644, 1.442695
        %v2159 = vpow.pop %v2158
        %v2160 = vmul.f32 %v1645, 1.442695
        %v2161 = vpow.pop %v2160
        %v2162 = vmul.f32 %v1646, 1.442695
        %v2163 = vpow.pop %v2162
        %v2164 = vmul.f32 %v1647, 1.442695
        %v2165 = vpow.pop %v2164
        %v2166 = vmul.f32 %v1648, 1.442695
        %v2167 = vpow.pop %v2166
        %v2168 = vmul.f32 %v1649, 1.442695
        %v2169 = vpow.pop %v2168
        %v2170 = vmul.f32 %v1650, 1.442695
        %v2171 = vpow.pop %v2170
        %v2172 = vmul.f32 %v1651, 1.442695
        %v2173 = vpow.pop %v2172
        %v2174 = vmul.f32 %v1652, 1.442695
        %v2175 = vpow.pop %v2174
        %v2176 = vmul.f32 %v1653, 1.442695
        %v2177 = vpow.pop %v2176
        %v2178 = vmul.f32 %v1654, 1.442695
        %v2179 = vpow.pop %v2178
        %v2180 = vmul.f32 %v1655, 1.442695
        %v2181 = vpow.pop %v2180
        %v2182 = vmul.f32 %v1656, 1.442695
        %v2183 = vpow.pop %v2182
        %v2184 = vmul.f32 %v1657, 1.442695
        %v2185 = vpow.pop %v2184
        %v2186 = vmul.f32 %v1658, 1.442695
        %v2187 = vpow.pop %v2186
        %v2188 = vmul.f32 %v1659, 1.442695
        %v2189 = vpow.pop %v2188
        %v2190 = vmul.f32 %v1660, 1.442695
        %v2191 = vpow.pop %v2190
        %v2192 = vmul.f32 %v1661, 1.442695
        %v2193 = vpow.pop %v2192
        %v2194 = vmul.f32 %v1662, 1.442695
        %v2195 = vpow.pop %v2194
        %v2196 = vmul.f32 %v1663, 1.442695
        %v2197 = vpow.pop %v2196
        %v2198 = vmul.f32 %v1664, 1.442695
        %v2199 = vpow.pop %v2198
        %v2200 = vmul.f32 %v1665, 1.442695
        %v2201 = vpow.pop %v2200
        %v2202 = vmul.f32 %v1666, 1.442695
        %v2203 = vpow.pop %v2202
        %v2204 = vmul.f32 %v1667, 1.442695
        %v2205 = vpow.pop %v2204
        %v2206 = vmul.f32 %v1668, 1.442695
        %v2207 = vpow.pop %v2206
        %v2208 = vmul.f32 %v1669, 1.442695
        %v2209 = vpow.pop %v2208
        %v2210 = vmul.f32 %v1670, 1.442695
        %v2211 = vpow.pop %v2210
        %v2212 = vmul.f32 %v1671, 1.442695
        %v2213 = vpow.pop %v2212
        %v2214 = vmul.f32 %v1672, 1.442695
        %v2215 = vpow.pop %v2214
        %v2216 = vmul.f32 %v1673, 1.442695
        %v2217 = vpow.pop %v2216
        %v2218 = vmul.f32 %v1674, 1.442695
        %v2219 = vpow.pop %v2218
        %v2220 = vmul.f32 %v1675, 1.442695
        %v2221 = vpow.pop %v2220
        %v2222 = vmul.f32 %v1676, 1.442695
        %v2223 = vpow.pop %v2222
        %v2224 = vmul.f32 %v1677, 1.442695
        %v2225 = vpow.pop %v2224
        %v2226 = vmul.f32 %v1678, 1.442695
        %v2227 = vpow.pop %v2226
        %v2228 = vmul.f32 %v1679, 1.442695
        %v2229 = vpow.pop %v2228
        %v2230 = vmul.f32 %v1680, 1.442695
        %v2231 = vpow.pop %v2230
        %v2232 = vmul.f32 %v1681, 1.442695
        %v2233 = vpow.pop %v2232
        %v2234 = vmul.f32 %v1682, 1.442695
        %v2235 = vpow.pop %v2234
        %v2236 = vmul.f32 %v1683, 1.442695
        %v2237 = vpow.pop %v2236
        %v2238 = vmul.f32 %v1684, 1.442695
        %v2239 = vpow.pop %v2238
        %v2240 = vmul.f32 %v1685, 1.442695
        %v2241 = vpow.pop %v2240
        %v2242 = vmul.f32 %v1686, 1.442695
        %v2243 = vpow.pop %v2242
        %v2244 = vmul.f32 %v1687, 1.442695
        %v2245 = vpow.pop %v2244
        %v2246 = vmul.f32 %v1688, 1.442695
        %v2247 = vpow.pop %v2246
        %v2248 = vmul.f32 %v1689, 1.442695
        %v2249 = vpow.pop %v2248
        %v2250 = vmul.f32 %v1690, 1.442695
        %v2251 = vpow.pop %v2250
        %v2252 = vmul.f32 %v1691, 1.442695
        %v2253 = vpow.pop %v2252
        %v2254 = vmul.f32 %v1692, 1.442695
        %v2255 = vpow.pop %v2254
        %v2256 = vmul.f32 %v1693, 1.442695
        %v2257 = vpow.pop %v2256
        %v2258 = vmul.f32 %v1694, 1.442695
        %v2259 = vpow.pop %v2258
        %v2260 = vmul.f32 %v1695, 1.442695
        %v2261 = vpow.pop %v2260
        %v2262 = vmul.f32 %v1696, 1.442695
        %v2263 = vpow.pop %v2262
        %v2264 = vmul.f32 %v1697, 1.442695
        %v2265 = vpow.pop %v2264
        %v2266 = vmul.f32 %v1698, 1.442695
        %v2267 = vpow.pop %v2266
        %v2268 = vmul.f32 %v1699, 1.442695
        %v2269 = vpow.pop %v2268
        %v2270 = vmul.f32 %v1700, 1.442695
        %v2271 = vpow.pop %v2270
        %v2272 = vmul.f32 %v1701, 1.442695
        %v2273 = vpow.pop %v2272
        %v2274 = vmul.f32 %v1702, 1.442695
        %v2275 = vpow.pop %v2274
        %v2276 = vmul.f32 %v1703, 1.442695
        %v2277 = vpow.pop %v2276
        %v2278 = vmul.f32 %v1704, 1.442695
        %v2279 = vpow.pop %v2278
        %v2280 = vmul.f32 %v1705, 1.442695
        %v2281 = vpow.pop %v2280
        %v2282 = vmul.f32 %v1706, 1.442695
        %v2283 = vpow.pop %v2282
        %v2284 = vmul.f32 %v1707, 1.442695
        %v2285 = vpow.pop %v2284
        %v2286 = vmul.f32 %v1708, 1.442695
        %v2287 = vpow.pop %v2286
        %v2288 = vmul.f32 %v1709, 1.442695
        %v2289 = vpow.pop %v2288
        %v2290 = vmul.f32 %v1710, 1.442695
        %v2291 = vpow.pop %v2290
        %v2292 = vmul.f32 %v1711, 1.442695
        %v2293 = vpow.pop %v2292
        %v2294 = vmul.f32 %v1712, 1.442695
        %v2295 = vpow.pop %v2294
        %v2296 = vmul.f32 %v1713, 1.442695
        %v2297 = vpow.pop %v2296
        %v2298 = vmul.f32 %v1714, 1.442695
        %v2299 = vpow.pop %v2298
        %v2300 = vmul.f32 %v1715, 1.442695
        %v2301 = vpow.pop %v2300
        %v2302 = vmul.f32 %v1716, 1.442695
        %v2303 = vpow.pop %v2302
        %v2304 = vmul.f32 %v1717, 1.442695
        %v2305 = vpow.pop %v2304
        %v2306 = vmul.f32 %v1718, 1.442695
        %v2307 = vpow.pop %v2306
        %v2308 = vmul.f32 %v1719, 1.442695
        %v2309 = vpow.pop %v2308
        %v2310 = vmul.f32 %v1720, 1.442695
        %v2311 = vpow.pop %v2310
        %v2312 = vmul.f32 %v1721, 1.442695
        %v2313 = vpow.pop %v2312
        %v2314 = vmul.f32 %v1722, 1.442695
        %v2315 = vpow.pop %v2314
        %v2316 = vmul.f32 %v1723, 1.442695
        %v2317 = vpow.pop %v2316
        %v2318 = vmul.f32 %v1724, 1.442695
        %v2319 = vpow.pop %v2318
        %v2320 = vmul.f32 %v1725, 1.442695
        %v2321 = vpow.pop %v2320
        %v2322 = vmul.f32 %v1726, 1.442695
        %v2323 = vpow.pop %v2322
        %v2324 = vmul.f32 %v1727, 1.442695
        %v2325 = vpow.pop %v2324
        %v2326 = vmul.f32 %v1728, 1.442695
        %v2327 = vpow.pop %v2326
        %v2328 = vmul.f32 %v1729, 1.442695
        %v2329 = vpow.pop %v2328
        %v2330 = vmul.f32 %v1730, 1.442695
        %v2331 = vpow.pop %v2330
        %v2332 = vmul.f32 %v1731, 1.442695
        %v2333 = vpow.pop %v2332
        %v2334 = vmul.f32 %v1732, 1.442695
        %v2335 = vpow.pop %v2334
        %v2336 = vmul.f32 %v1733, 1.442695
        %v2337 = vpow.pop %v2336
        %v2338 = vmul.f32 %v1734, 1.442695
        %v2339 = vpow.pop %v2338
        %v2340 = vmul.f32 %v1735, 1.442695
        %v2341 = vpow.pop %v2340
        %v2342 = vmul.f32 %v1736, 1.442695
        %v2343 = vpow.pop %v2342
        %v2344 = vmul.f32 %v1737, 1.442695
        %v2345 = vpow.pop %v2344
        %v2346 = vmul.f32 %v1738, 1.442695
        %v2347 = vpow.pop %v2346
        %v2348 = vmul.f32 %v1739, 1.442695
        %v2349 = vpow.pop %v2348
        %v2350 = vmul.f32 %v1740, 1.442695
        %v2351 = vpow.pop %v2350
        %v2352 = vmul.f32 %v1741, 1.442695
        %v2353 = vpow.pop %v2352
        %v2354 = vmul.f32 %v1742, 1.442695
        %v2355 = vpow.pop %v2354
        %v2356 = vmul.f32 %v1743, 1.442695
        %v2357 = vpow.pop %v2356
        %v2358 = vmul.f32 %v1744, 1.442695
        %v2359 = vpow.pop %v2358
        %v2360 = vmul.f32 %v1745, 1.442695
        %v2361 = vpow.pop %v2360
        %v2362 = vmul.f32 %v1746, 1.442695
        %v2363 = vpow.pop %v2362
        %v2364 = vmul.f32 %v1747, 1.442695
        %v2365 = vpow.pop %v2364
        %v2366 = vmul.f32 %v1748, 1.442695
        %v2367 = vpow.pop %v2366
        %v2368 = vmul.f32 %v1749, 1.442695
        %v2369 = vpow.pop %v2368
        %v2370 = vmul.f32 %v1750, 1.442695
        %v2371 = vpow.pop %v2370
        %v2372 = vmul.f32 %v1751, 1.442695
        %v2373 = vpow.pop %v2372
        %v2374 = vmul.f32 %v1752, 1.442695
        %v2375 = vpow.pop %v2374
        %v2376 = vmul.f32 %v1753, 1.442695
        %v2377 = vpow.pop %v2376
        %v2378 = vmul.f32 %v1754, 1.442695
        %v2379 = vpow.pop %v2378
        %v2380 = vmul.f32 %v1755, 1.442695
        %v2381 = vpow.pop %v2380
        %v2382 = vmul.f32 %v1756, 1.442695
        %v2383 = vpow.pop %v2382
        %v2384 = vmul.f32 %v1757, 1.442695
        %v2385 = vpow.pop %v2384
        %v2386 = vmul.f32 %v1758, 1.442695
        %v2387 = vpow.pop %v2386
        %v2388 = vmul.f32 %v1759, 1.442695
        %v2389 = vpow.pop %v2388
        %v2390 = vmul.f32 %v1760, 1.442695
        %v2391 = vpow.pop %v2390
        %v2392 = vmul.f32 %v1761, 1.442695
        %v2393 = vpow.pop %v2392
        %v2394 = vmul.f32 %v1762, 1.442695
        %v2395 = vpow.pop %v2394
        %v2396 = vmul.f32 %v1763, 1.442695
        %v2397 = vpow.pop %v2396
        %v2398 = vmul.f32 %v1764, 1.442695
        %v2399 = vpow.pop %v2398
        %v2400 = vmul.f32 %v1765, 1.442695
        %v2401 = vpow.pop %v2400
        %v2402 = vmul.f32 %v1766, 1.442695
        %v2403 = vpow.pop %v2402
        %v2404 = vmul.f32 %v1767, 1.442695
        %v2405 = vpow.pop %v2404
        %v2406 = vmul.f32 %v1768, 1.442695
        %v2407 = vpow.pop %v2406
        %v2408 = vmul.f32 %v1769, 1.442695
        %v2409 = vpow.pop %v2408
        %v2410 = vadd.f32 %v1771, 1.0
        %v2411 = vadd.f32 %v1773, 1.0
        %v2412 = vadd.f32 %v1775, 1.0
        %v2413 = vadd.f32 %v1777, 1.0
        %v2414 = vadd.f32 %v1779, 1.0
        %v2415 = vadd.f32 %v1781, 1.0
        %v2416 = vadd.f32 %v1783, 1.0
        %v2417 = vadd.f32 %v1785, 1.0
        %v2418 = vadd.f32 %v1787, 1.0
        %v2419 = vadd.f32 %v1789, 1.0
        %v2420 = vadd.f32 %v1791, 1.0
        %v2421 = vadd.f32 %v1793, 1.0
        %v2422 = vadd.f32 %v1795, 1.0
        %v2423 = vadd.f32 %v1797, 1.0
        %v2424 = vadd.f32 %v1799, 1.0
        %v2425 = vadd.f32 %v1801, 1.0
        %v2426 = vadd.f32 %v1803, 1.0
        %v2427 = vadd.f32 %v1805, 1.0
        %v2428 = vadd.f32 %v1807, 1.0
        %v2429 = vadd.f32 %v1809, 1.0
        %v2430 = vadd.f32 %v1811, 1.0
        %v2431 = vadd.f32 %v1813, 1.0
        %v2432 = vadd.f32 %v1815, 1.0
        %v2433 = vadd.f32 %v1817, 1.0
        %v2434 = vadd.f32 %v1819, 1.0
        %v2435 = vadd.f32 %v1821, 1.0
        %v2436 = vadd.f32 %v1823, 1.0
        %v2437 = vadd.f32 %v1825, 1.0
        %v2438 = vadd.f32 %v1827, 1.0
        %v2439 = vadd.f32 %v1829, 1.0
        %v2440 = vadd.f32 %v1831, 1.0
        %v2441 = vadd.f32 %v1833, 1.0
        %v2442 = vadd.f32 %v1835, 1.0
        %v2443 = vadd.f32 %v1837, 1.0
        %v2444 = vadd.f32 %v1839, 1.0
        %v2445 = vadd.f32 %v1841, 1.0
        %v2446 = vadd.f32 %v1843, 1.0
        %v2447 = vadd.f32 %v1845, 1.0
        %v2448 = vadd.f32 %v1847, 1.0
        %v2449 = vadd.f32 %v1849, 1.0
        %v2450 = vadd.f32 %v1851, 1.0
        %v2451 = vadd.f32 %v1853, 1.0
        %v2452 = vadd.f32 %v1855, 1.0
        %v2453 = vadd.f32 %v1857, 1.0
        %v2454 = vadd.f32 %v1859, 1.0
        %v2455 = vadd.f32 %v1861, 1.0
        %v2456 = vadd.f32 %v1863, 1.0
        %v2457 = vadd.f32 %v1865, 1.0
        %v2458 = vadd.f32 %v1867, 1.0
        %v2459 = vadd.f32 %v1869, 1.0
        %v2460 = vadd.f32 %v1871, 1.0
        %v2461 = vadd.f32 %v1873, 1.0
        %v2462 = vadd.f32 %v1875, 1.0
        %v2463 = vadd.f32 %v1877, 1.0
        %v2464 = vadd.f32 %v1879, 1.0
        %v2465 = vadd.f32 %v1881, 1.0
        %v2466 = vadd.f32 %v1883, 1.0
        %v2467 = vadd.f32 %v1885, 1.0
        %v2468 = vadd.f32 %v1887, 1.0
        %v2469 = vadd.f32 %v1889, 1.0
        %v2470 = vadd.f32 %v1891, 1.0
        %v2471 = vadd.f32 %v1893, 1.0
        %v2472 = vadd.f32 %v1895, 1.0
        %v2473 = vadd.f32 %v1897, 1.0
        %v2474 = vadd.f32 %v1899, 1.0
        %v2475 = vadd.f32 %v1901, 1.0
        %v2476 = vadd.f32 %v1903, 1.0
        %v2477 = vadd.f32 %v1905, 1.0
        %v2478 = vadd.f32 %v1907, 1.0
        %v2479 = vadd.f32 %v1909, 1.0
        %v2480 = vadd.f32 %v1911, 1.0
        %v2481 = vadd.f32 %v1913, 1.0
        %v2482 = vadd.f32 %v1915, 1.0
        %v2483 = vadd.f32 %v1917, 1.0
        %v2484 = vadd.f32 %v1919, 1.0
        %v2485 = vadd.f32 %v1921, 1.0
        %v2486 = vadd.f32 %v1923, 1.0
        %v2487 = vadd.f32 %v1925, 1.0
        %v2488 = vadd.f32 %v1927, 1.0
        %v2489 = vadd.f32 %v1929, 1.0
        %v2490 = vadd.f32 %v1931, 1.0
        %v2491 = vadd.f32 %v1933, 1.0
        %v2492 = vadd.f32 %v1935, 1.0
        %v2493 = vadd.f32 %v1937, 1.0
        %v2494 = vadd.f32 %v1939, 1.0
        %v2495 = vadd.f32 %v1941, 1.0
        %v2496 = vadd.f32 %v1943, 1.0
        %v2497 = vadd.f32 %v1945, 1.0
        %v2498 = vadd.f32 %v1947, 1.0
        %v2499 = vadd.f32 %v1949, 1.0
        %v2500 = vadd.f32 %v1951, 1.0
        %v2501 = vadd.f32 %v1953, 1.0
        %v2502 = vadd.f32 %v1955, 1.0
        %v2503 = vadd.f32 %v1957, 1.0
        %v2504 = vadd.f32 %v1959, 1.0
        %v2505 = vadd.f32 %v1961, 1.0
        %v2506 = vadd.f32 %v1963, 1.0
        %v2507 = vadd.f32 %v1965, 1.0
        %v2508 = vadd.f32 %v1967, 1.0
        %v2509 = vadd.f32 %v1969, 1.0
        %v2510 = vadd.f32 %v1971, 1.0
        %v2511 = vadd.f32 %v1973, 1.0
        %v2512 = vadd.f32 %v1975, 1.0
        %v2513 = vadd.f32 %v1977, 1.0
        %v2514 = vadd.f32 %v1979, 1.0
        %v2515 = vadd.f32 %v1981, 1.0
        %v2516 = vadd.f32 %v1983, 1.0
        %v2517 = vadd.f32 %v1985, 1.0
        %v2518 = vadd.f32 %v1987, 1.0
        %v2519 = vadd.f32 %v1989, 1.0
        %v2520 = vadd.f32 %v1991, 1.0
        %v2521 = vadd.f32 %v1993, 1.0
        %v2522 = vadd.f32 %v1995, 1.0
        %v2523 = vadd.f32 %v1997, 1.0
        %v2524 = vadd.f32 %v1999, 1.0
        %v2525 = vadd.f32 %v2001, 1.0
        %v2526 = vadd.f32 %v2003, 1.0
        %v2527 = vadd.f32 %v2005, 1.0
        %v2528 = vadd.f32 %v2007, 1.0
        %v2529 = vadd.f32 %v2009, 1.0
        %v2530 = vadd.f32 %v2011, 1.0
        %v2531 = vadd.f32 %v2013, 1.0
        %v2532 = vadd.f32 %v2015, 1.0
        %v2533 = vadd.f32 %v2017, 1.0
        %v2534 = vadd.f32 %v2019, 1.0
        %v2535 = vadd.f32 %v2021, 1.0
        %v2536 = vadd.f32 %v2023, 1.0
        %v2537 = vadd.f32 %v2025, 1.0
        %v2538 = vadd.f32 %v2027, 1.0
        %v2539 = vadd.f32 %v2029, 1.0
        %v2540 = vadd.f32 %v2031, 1.0
        %v2541 = vadd.f32 %v2033, 1.0
        %v2542 = vadd.f32 %v2035, 1.0
        %v2543 = vadd.f32 %v2037, 1.0
        %v2544 = vadd.f32 %v2039, 1.0
        %v2545 = vadd.f32 %v2041, 1.0
        %v2546 = vadd.f32 %v2043, 1.0
        %v2547 = vadd.f32 %v2045, 1.0
        %v2548 = vadd.f32 %v2047, 1.0
        %v2549 = vadd.f32 %v2049, 1.0
        %v2550 = vadd.f32 %v2051, 1.0
        %v2551 = vadd.f32 %v2053, 1.0
        %v2552 = vadd.f32 %v2055, 1.0
        %v2553 = vadd.f32 %v2057, 1.0
        %v2554 = vadd.f32 %v2059, 1.0
        %v2555 = vadd.f32 %v2061, 1.0
        %v2556 = vadd.f32 %v2063, 1.0
        %v2557 = vadd.f32 %v2065, 1.0
        %v2558 = vadd.f32 %v2067, 1.0
        %v2559 = vadd.f32 %v2069, 1.0
        %v2560 = vadd.f32 %v2071, 1.0
        %v2561 = vadd.f32 %v2073, 1.0
        %v2562 = vadd.f32 %v2075, 1.0
        %v2563 = vadd.f32 %v2077, 1.0
        %v2564 = vadd.f32 %v2079, 1.0
        %v2565 = vadd.f32 %v2081, 1.0
        %v2566 = vadd.f32 %v2083, 1.0
        %v2567 = vadd.f32 %v2085, 1.0
        %v2568 = vadd.f32 %v2087, 1.0
        %v2569 = vadd.f32 %v2089, 1.0
        %v2570 = vadd.f32 %v2091, 1.0
        %v2571 = vadd.f32 %v2093, 1.0
        %v2572 = vadd.f32 %v2095, 1.0
        %v2573 = vadd.f32 %v2097, 1.0
        %v2574 = vadd.f32 %v2099, 1.0
        %v2575 = vadd.f32 %v2101, 1.0
        %v2576 = vadd.f32 %v2103, 1.0
        %v2577 = vadd.f32 %v2105, 1.0
        %v2578 = vadd.f32 %v2107, 1.0
        %v2579 = vadd.f32 %v2109, 1.0
        %v2580 = vadd.f32 %v2111, 1.0
        %v2581 = vadd.f32 %v2113, 1.0
        %v2582 = vadd.f32 %v2115, 1.0
        %v2583 = vadd.f32 %v2117, 1.0
        %v2584 = vadd.f32 %v2119, 1.0
        %v2585 = vadd.f32 %v2121, 1.0
        %v2586 = vadd.f32 %v2123, 1.0
        %v2587 = vadd.f32 %v2125, 1.0
        %v2588 = vadd.f32 %v2127, 1.0
        %v2589 = vadd.f32 %v2129, 1.0
        %v2590 = vadd.f32 %v2131, 1.0
        %v2591 = vadd.f32 %v2133, 1.0
        %v2592 = vadd.f32 %v2135, 1.0
        %v2593 = vadd.f32 %v2137, 1.0
        %v2594 = vadd.f32 %v2139, 1.0
        %v2595 = vadd.f32 %v2141, 1.0
        %v2596 = vadd.f32 %v2143, 1.0
        %v2597 = vadd.f32 %v2145, 1.0
        %v2598 = vadd.f32 %v2147, 1.0
        %v2599 = vadd.f32 %v2149, 1.0
        %v2600 = vadd.f32 %v2151, 1.0
        %v2601 = vadd.f32 %v2153, 1.0
        %v2602 = vadd.f32 %v2155, 1.0
        %v2603 = vadd.f32 %v2157, 1.0
        %v2604 = vadd.f32 %v2159, 1.0
        %v2605 = vadd.f32 %v2161, 1.0
        %v2606 = vadd.f32 %v2163, 1.0
        %v2607 = vadd.f32 %v2165, 1.0
        %v2608 = vadd.f32 %v2167, 1.0
        %v2609 = vadd.f32 %v2169, 1.0
        %v2610 = vadd.f32 %v2171, 1.0
        %v2611 = vadd.f32 %v2173, 1.0
        %v2612 = vadd.f32 %v2175, 1.0
        %v2613 = vadd.f32 %v2177, 1.0
        %v2614 = vadd.f32 %v2179, 1.0
        %v2615 = vadd.f32 %v2181, 1.0
        %v2616 = vadd.f32 %v2183, 1.0
        %v2617 = vadd.f32 %v2185, 1.0
        %v2618 = vadd.f32 %v2187, 1.0
        %v2619 = vadd.f32 %v2189, 1.0
        %v2620 = vadd.f32 %v2191, 1.0
        %v2621 = vadd.f32 %v2193, 1.0
        %v2622 = vadd.f32 %v2195, 1.0
        %v2623 = vadd.f32 %v2197, 1.0
        %v2624 = vadd.f32 %v2199, 1.0
        %v2625 = vadd.f32 %v2201, 1.0
        %v2626 = vadd.f32 %v2203, 1.0
        %v2627 = vadd.f32 %v2205, 1.0
        %v2628 = vadd.f32 %v2207, 1.0
        %v2629 = vadd.f32 %v2209, 1.0
        %v2630 = vadd.f32 %v2211, 1.0
        %v2631 = vadd.f32 %v2213, 1.0
        %v2632 = vadd.f32 %v2215, 1.0
        %v2633 = vadd.f32 %v2217, 1.0
        %v2634 = vadd.f32 %v2219, 1.0
        %v2635 = vadd.f32 %v2221, 1.0
        %v2636 = vadd.f32 %v2223, 1.0
        %v2637 = vadd.f32 %v2225, 1.0
        %v2638 = vadd.f32 %v2227, 1.0
        %v2639 = vadd.f32 %v2229, 1.0
        %v2640 = vadd.f32 %v2231, 1.0
        %v2641 = vadd.f32 %v2233, 1.0
        %v2642 = vadd.f32 %v2235, 1.0
        %v2643 = vadd.f32 %v2237, 1.0
        %v2644 = vadd.f32 %v2239, 1.0
        %v2645 = vadd.f32 %v2241, 1.0
        %v2646 = vadd.f32 %v2243, 1.0
        %v2647 = vadd.f32 %v2245, 1.0
        %v2648 = vadd.f32 %v2247, 1.0
        %v2649 = vadd.f32 %v2249, 1.0
        %v2650 = vadd.f32 %v2251, 1.0
        %v2651 = vadd.f32 %v2253, 1.0
        %v2652 = vadd.f32 %v2255, 1.0
        %v2653 = vadd.f32 %v2257, 1.0
        %v2654 = vadd.f32 %v2259, 1.0
        %v2655 = vadd.f32 %v2261, 1.0
        %v2656 = vadd.f32 %v2263, 1.0
        %v2657 = vadd.f32 %v2265, 1.0
        %v2658 = vadd.f32 %v2267, 1.0
        %v2659 = vadd.f32 %v2269, 1.0
        %v2660 = vadd.f32 %v2271, 1.0
        %v2661 = vadd.f32 %v2273, 1.0
        %v2662 = vadd.f32 %v2275, 1.0
        %v2663 = vadd.f32 %v2277, 1.0
        %v2664 = vadd.f32 %v2279, 1.0
        %v2665 = vadd.f32 %v2281, 1.0
        %v2666 = vadd.f32 %v2283, 1.0
        %v2667 = vadd.f32 %v2285, 1.0
        %v2668 = vadd.f32 %v2287, 1.0
        %v2669 = vadd.f32 %v2289, 1.0
        %v2670 = vadd.f32 %v2291, 1.0
        %v2671 = vadd.f32 %v2293, 1.0
        %v2672 = vadd.f32 %v2295, 1.0
        %v2673 = vadd.f32 %v2297, 1.0
        %v2674 = vadd.f32 %v2299, 1.0
        %v2675 = vadd.f32 %v2301, 1.0
        %v2676 = vadd.f32 %v2303, 1.0
        %v2677 = vadd.f32 %v2305, 1.0
        %v2678 = vadd.f32 %v2307, 1.0
        %v2679 = vadd.f32 %v2309, 1.0
        %v2680 = vadd.f32 %v2311, 1.0
        %v2681 = vadd.f32 %v2313, 1.0
        %v2682 = vadd.f32 %v2315, 1.0
        %v2683 = vadd.f32 %v2317, 1.0
        %v2684 = vadd.f32 %v2319, 1.0
        %v2685 = vadd.f32 %v2321, 1.0
        %v2686 = vadd.f32 %v2323, 1.0
        %v2687 = vadd.f32 %v2325, 1.0
        %v2688 = vadd.f32 %v2327, 1.0
        %v2689 = vadd.f32 %v2329, 1.0
        %v2690 = vadd.f32 %v2331, 1.0
        %v2691 = vadd.f32 %v2333, 1.0
        %v2692 = vadd.f32 %v2335, 1.0
        %v2693 = vadd.f32 %v2337, 1.0
        %v2694 = vadd.f32 %v2339, 1.0
        %v2695 = vadd.f32 %v2341, 1.0
        %v2696 = vadd.f32 %v2343, 1.0
        %v2697 = vadd.f32 %v2345, 1.0
        %v2698 = vadd.f32 %v2347, 1.0
        %v2699 = vadd.f32 %v2349, 1.0
        %v2700 = vadd.f32 %v2351, 1.0
        %v2701 = vadd.f32 %v2353, 1.0
        %v2702 = vadd.f32 %v2355, 1.0
        %v2703 = vadd.f32 %v2357, 1.0
        %v2704 = vadd.f32 %v2359, 1.0
        %v2705 = vadd.f32 %v2361, 1.0
        %v2706 = vadd.f32 %v2363, 1.0
        %v2707 = vadd.f32 %v2365, 1.0
        %v2708 = vadd.f32 %v2367, 1.0
        %v2709 = vadd.f32 %v2369, 1.0
        %v2710 = vadd.f32 %v2371, 1.0
        %v2711 = vadd.f32 %v2373, 1.0
        %v2712 = vadd.f32 %v2375, 1.0
        %v2713 = vadd.f32 %v2377, 1.0
        %v2714 = vadd.f32 %v2379, 1.0
        %v2715 = vadd.f32 %v2381, 1.0
        %v2716 = vadd.f32 %v2383, 1.0
        %v2717 = vadd.f32 %v2385, 1.0
        %v2718 = vadd.f32 %v2387, 1.0
        %v2719 = vadd.f32 %v2389, 1.0
        %v2720 = vadd.f32 %v2391, 1.0
        %v2721 = vadd.f32 %v2393, 1.0
        %v2722 = vadd.f32 %v2395, 1.0
        %v2723 = vadd.f32 %v2397, 1.0
        %v2724 = vadd.f32 %v2399, 1.0
        %v2725 = vadd.f32 %v2401, 1.0
        %v2726 = vadd.f32 %v2403, 1.0
        %v2727 = vadd.f32 %v2405, 1.0
        %v2728 = vadd.f32 %v2407, 1.0
        %v2729 = vadd.f32 %v2409, 1.0
        %v2730 = vrcp.pop %v2410
        %v2731 = vmul.f32 1.0, %v2730
        %v2732 = vrcp.pop %v2411
        %v2733 = vmul.f32 1.0, %v2732
        %v2734 = vrcp.pop %v2412
        %v2735 = vmul.f32 1.0, %v2734
        %v2736 = vrcp.pop %v2413
        %v2737 = vmul.f32 1.0, %v2736
        %v2738 = vrcp.pop %v2414
        %v2739 = vmul.f32 1.0, %v2738
        %v2740 = vrcp.pop %v2415
        %v2741 = vmul.f32 1.0, %v2740
        %v2742 = vrcp.pop %v2416
        %v2743 = vmul.f32 1.0, %v2742
        %v2744 = vrcp.pop %v2417
        %v2745 = vmul.f32 1.0, %v2744
        %v2746 = vrcp.pop %v2418
        %v2747 = vmul.f32 1.0, %v2746
        %v2748 = vrcp.pop %v2419
        %v2749 = vmul.f32 1.0, %v2748
        %v2750 = vrcp.pop %v2420
        %v2751 = vmul.f32 1.0, %v2750
        %v2752 = vrcp.pop %v2421
        %v2753 = vmul.f32 1.0, %v2752
        %v2754 = vrcp.pop %v2422
        %v2755 = vmul.f32 1.0, %v2754
        %v2756 = vrcp.pop %v2423
        %v2757 = vmul.f32 1.0, %v2756
        %v2758 = vrcp.pop %v2424
        %v2759 = vmul.f32 1.0, %v2758
        %v2760 = vrcp.pop %v2425
        %v2761 = vmul.f32 1.0, %v2760
        %v2762 = vrcp.pop %v2426
        %v2763 = vmul.f32 1.0, %v2762
        %v2764 = vrcp.pop %v2427
        %v2765 = vmul.f32 1.0, %v2764
        %v2766 = vrcp.pop %v2428
        %v2767 = vmul.f32 1.0, %v2766
        %v2768 = vrcp.pop %v2429
        %v2769 = vmul.f32 1.0, %v2768
        %v2770 = vrcp.pop %v2430
        %v2771 = vmul.f32 1.0, %v2770
        %v2772 = vrcp.pop %v2431
        %v2773 = vmul.f32 1.0, %v2772
        %v2774 = vrcp.pop %v2432
        %v2775 = vmul.f32 1.0, %v2774
        %v2776 = vrcp.pop %v2433
        %v2777 = vmul.f32 1.0, %v2776
        %v2778 = vrcp.pop %v2434
        %v2779 = vmul.f32 1.0, %v2778
        %v2780 = vrcp.pop %v2435
        %v2781 = vmul.f32 1.0, %v2780
        %v2782 = vrcp.pop %v2436
        %v2783 = vmul.f32 1.0, %v2782
        %v2784 = vrcp.pop %v2437
        %v2785 = vmul.f32 1.0, %v2784
        %v2786 = vrcp.pop %v2438
        %v2787 = vmul.f32 1.0, %v2786
        %v2788 = vrcp.pop %v2439
        %v2789 = vmul.f32 1.0, %v2788
        %v2790 = vrcp.pop %v2440
        %v2791 = vmul.f32 1.0, %v2790
        %v2792 = vrcp.pop %v2441
        %v2793 = vmul.f32 1.0, %v2792
        %v2794 = vrcp.pop %v2442
        %v2795 = vmul.f32 1.0, %v2794
        %v2796 = vrcp.pop %v2443
        %v2797 = vmul.f32 1.0, %v2796
        %v2798 = vrcp.pop %v2444
        %v2799 = vmul.f32 1.0, %v2798
        %v2800 = vrcp.pop %v2445
        %v2801 = vmul.f32 1.0, %v2800
        %v2802 = vrcp.pop %v2446
        %v2803 = vmul.f32 1.0, %v2802
        %v2804 = vrcp.pop %v2447
        %v2805 = vmul.f32 1.0, %v2804
        %v2806 = vrcp.pop %v2448
        %v2807 = vmul.f32 1.0, %v2806
        %v2808 = vrcp.pop %v2449
        %v2809 = vmul.f32 1.0, %v2808
        %v2810 = vrcp.pop %v2450
        %v2811 = vmul.f32 1.0, %v2810
        %v2812 = vrcp.pop %v2451
        %v2813 = vmul.f32 1.0, %v2812
        %v2814 = vrcp.pop %v2452
        %v2815 = vmul.f32 1.0, %v2814
        %v2816 = vrcp.pop %v2453
        %v2817 = vmul.f32 1.0, %v2816
        %v2818 = vrcp.pop %v2454
        %v2819 = vmul.f32 1.0, %v2818
        %v2820 = vrcp.pop %v2455
        %v2821 = vmul.f32 1.0, %v2820
        %v2822 = vrcp.pop %v2456
        %v2823 = vmul.f32 1.0, %v2822
        %v2824 = vrcp.pop %v2457
        %v2825 = vmul.f32 1.0, %v2824
        %v2826 = vrcp.pop %v2458
        %v2827 = vmul.f32 1.0, %v2826
        %v2828 = vrcp.pop %v2459
        %v2829 = vmul.f32 1.0, %v2828
        %v2830 = vrcp.pop %v2460
        %v2831 = vmul.f32 1.0, %v2830
        %v2832 = vrcp.pop %v2461
        %v2833 = vmul.f32 1.0, %v2832
        %v2834 = vrcp.pop %v2462
        %v2835 = vmul.f32 1.0, %v2834
        %v2836 = vrcp.pop %v2463
        %v2837 = vmul.f32 1.0, %v2836
        %v2838 = vrcp.pop %v2464
        %v2839 = vmul.f32 1.0, %v2838
        %v2840 = vrcp.pop %v2465
        %v2841 = vmul.f32 1.0, %v2840
        %v2842 = vrcp.pop %v2466
        %v2843 = vmul.f32 1.0, %v2842
        %v2844 = vrcp.pop %v2467
        %v2845 = vmul.f32 1.0, %v2844
        %v2846 = vrcp.pop %v2468
        %v2847 = vmul.f32 1.0, %v2846
        %v2848 = vrcp.pop %v2469
        %v2849 = vmul.f32 1.0, %v2848
        %v2850 = vrcp.pop %v2470
        %v2851 = vmul.f32 1.0, %v2850
        %v2852 = vrcp.pop %v2471
        %v2853 = vmul.f32 1.0, %v2852
        %v2854 = vrcp.pop %v2472
        %v2855 = vmul.f32 1.0, %v2854
        %v2856 = vrcp.pop %v2473
        %v2857 = vmul.f32 1.0, %v2856
        %v2858 = vrcp.pop %v2474
        %v2859 = vmul.f32 1.0, %v2858
        %v2860 = vrcp.pop %v2475
        %v2861 = vmul.f32 1.0, %v2860
        %v2862 = vrcp.pop %v2476
        %v2863 = vmul.f32 1.0, %v2862
        %v2864 = vrcp.pop %v2477
        %v2865 = vmul.f32 1.0, %v2864
        %v2866 = vrcp.pop %v2478
        %v2867 = vmul.f32 1.0, %v2866
        %v2868 = vrcp.pop %v2479
        %v2869 = vmul.f32 1.0, %v2868
        %v2870 = vrcp.pop %v2480
        %v2871 = vmul.f32 1.0, %v2870
        %v2872 = vrcp.pop %v2481
        %v2873 = vmul.f32 1.0, %v2872
        %v2874 = vrcp.pop %v2482
        %v2875 = vmul.f32 1.0, %v2874
        %v2876 = vrcp.pop %v2483
        %v2877 = vmul.f32 1.0, %v2876
        %v2878 = vrcp.pop %v2484
        %v2879 = vmul.f32 1.0, %v2878
        %v2880 = vrcp.pop %v2485
        %v2881 = vmul.f32 1.0, %v2880
        %v2882 = vrcp.pop %v2486
        %v2883 = vmul.f32 1.0, %v2882
        %v2884 = vrcp.pop %v2487
        %v2885 = vmul.f32 1.0, %v2884
        %v2886 = vrcp.pop %v2488
        %v2887 = vmul.f32 1.0, %v2886
        %v2888 = vrcp.pop %v2489
        %v2889 = vmul.f32 1.0, %v2888
        %v2890 = vrcp.pop %v2490
        %v2891 = vmul.f32 1.0, %v2890
        %v2892 = vrcp.pop %v2491
        %v2893 = vmul.f32 1.0, %v2892
        %v2894 = vrcp.pop %v2492
        %v2895 = vmul.f32 1.0, %v2894
        %v2896 = vrcp.pop %v2493
        %v2897 = vmul.f32 1.0, %v2896
        %v2898 = vrcp.pop %v2494
        %v2899 = vmul.f32 1.0, %v2898
        %v2900 = vrcp.pop %v2495
        %v2901 = vmul.f32 1.0, %v2900
        %v2902 = vrcp.pop %v2496
        %v2903 = vmul.f32 1.0, %v2902
        %v2904 = vrcp.pop %v2497
        %v2905 = vmul.f32 1.0, %v2904
        %v2906 = vrcp.pop %v2498
        %v2907 = vmul.f32 1.0, %v2906
        %v2908 = vrcp.pop %v2499
        %v2909 = vmul.f32 1.0, %v2908
        %v2910 = vrcp.pop %v2500
        %v2911 = vmul.f32 1.0, %v2910
        %v2912 = vrcp.pop %v2501
        %v2913 = vmul.f32 1.0, %v2912
        %v2914 = vrcp.pop %v2502
        %v2915 = vmul.f32 1.0, %v2914
        %v2916 = vrcp.pop %v2503
        %v2917 = vmul.f32 1.0, %v2916
        %v2918 = vrcp.pop %v2504
        %v2919 = vmul.f32 1.0, %v2918
        %v2920 = vrcp.pop %v2505
        %v2921 = vmul.f32 1.0, %v2920
        %v2922 = vrcp.pop %v2506
        %v2923 = vmul.f32 1.0, %v2922
        %v2924 = vrcp.pop %v2507
        %v2925 = vmul.f32 1.0, %v2924
        %v2926 = vrcp.pop %v2508
        %v2927 = vmul.f32 1.0, %v2926
        %v2928 = vrcp.pop %v2509
        %v2929 = vmul.f32 1.0, %v2928
        %v2930 = vrcp.pop %v2510
        %v2931 = vmul.f32 1.0, %v2930
        %v2932 = vrcp.pop %v2511
        %v2933 = vmul.f32 1.0, %v2932
        %v2934 = vrcp.pop %v2512
        %v2935 = vmul.f32 1.0, %v2934
        %v2936 = vrcp.pop %v2513
        %v2937 = vmul.f32 1.0, %v2936
        %v2938 = vrcp.pop %v2514
        %v2939 = vmul.f32 1.0, %v2938
        %v2940 = vrcp.pop %v2515
        %v2941 = vmul.f32 1.0, %v2940
        %v2942 = vrcp.pop %v2516
        %v2943 = vmul.f32 1.0, %v2942
        %v2944 = vrcp.pop %v2517
        %v2945 = vmul.f32 1.0, %v2944
        %v2946 = vrcp.pop %v2518
        %v2947 = vmul.f32 1.0, %v2946
        %v2948 = vrcp.pop %v2519
        %v2949 = vmul.f32 1.0, %v2948
        %v2950 = vrcp.pop %v2520
        %v2951 = vmul.f32 1.0, %v2950
        %v2952 = vrcp.pop %v2521
        %v2953 = vmul.f32 1.0, %v2952
        %v2954 = vrcp.pop %v2522
        %v2955 = vmul.f32 1.0, %v2954
        %v2956 = vrcp.pop %v2523
        %v2957 = vmul.f32 1.0, %v2956
        %v2958 = vrcp.pop %v2524
        %v2959 = vmul.f32 1.0, %v2958
        %v2960 = vrcp.pop %v2525
        %v2961 = vmul.f32 1.0, %v2960
        %v2962 = vrcp.pop %v2526
        %v2963 = vmul.f32 1.0, %v2962
        %v2964 = vrcp.pop %v2527
        %v2965 = vmul.f32 1.0, %v2964
        %v2966 = vrcp.pop %v2528
        %v2967 = vmul.f32 1.0, %v2966
        %v2968 = vrcp.pop %v2529
        %v2969 = vmul.f32 1.0, %v2968
        %v2970 = vrcp.pop %v2530
        %v2971 = vmul.f32 1.0, %v2970
        %v2972 = vrcp.pop %v2531
        %v2973 = vmul.f32 1.0, %v2972
        %v2974 = vrcp.pop %v2532
        %v2975 = vmul.f32 1.0, %v2974
        %v2976 = vrcp.pop %v2533
        %v2977 = vmul.f32 1.0, %v2976
        %v2978 = vrcp.pop %v2534
        %v2979 = vmul.f32 1.0, %v2978
        %v2980 = vrcp.pop %v2535
        %v2981 = vmul.f32 1.0, %v2980
        %v2982 = vrcp.pop %v2536
        %v2983 = vmul.f32 1.0, %v2982
        %v2984 = vrcp.pop %v2537
        %v2985 = vmul.f32 1.0, %v2984
        %v2986 = vrcp.pop %v2538
        %v2987 = vmul.f32 1.0, %v2986
        %v2988 = vrcp.pop %v2539
        %v2989 = vmul.f32 1.0, %v2988
        %v2990 = vrcp.pop %v2540
        %v2991 = vmul.f32 1.0, %v2990
        %v2992 = vrcp.pop %v2541
        %v2993 = vmul.f32 1.0, %v2992
        %v2994 = vrcp.pop %v2542
        %v2995 = vmul.f32 1.0, %v2994
        %v2996 = vrcp.pop %v2543
        %v2997 = vmul.f32 1.0, %v2996
        %v2998 = vrcp.pop %v2544
        %v2999 = vmul.f32 1.0, %v2998
        %v3000 = vrcp.pop %v2545
        %v3001 = vmul.f32 1.0, %v3000
        %v3002 = vrcp.pop %v2546
        %v3003 = vmul.f32 1.0, %v3002
        %v3004 = vrcp.pop %v2547
        %v3005 = vmul.f32 1.0, %v3004
        %v3006 = vrcp.pop %v2548
        %v3007 = vmul.f32 1.0, %v3006
        %v3008 = vrcp.pop %v2549
        %v3009 = vmul.f32 1.0, %v3008
        %v3010 = vrcp.pop %v2550
        %v3011 = vmul.f32 1.0, %v3010
        %v3012 = vrcp.pop %v2551
        %v3013 = vmul.f32 1.0, %v3012
        %v3014 = vrcp.pop %v2552
        %v3015 = vmul.f32 1.0, %v3014
        %v3016 = vrcp.pop %v2553
        %v3017 = vmul.f32 1.0, %v3016
        %v3018 = vrcp.pop %v2554
        %v3019 = vmul.f32 1.0, %v3018
        %v3020 = vrcp.pop %v2555
        %v3021 = vmul.f32 1.0, %v3020
        %v3022 = vrcp.pop %v2556
        %v3023 = vmul.f32 1.0, %v3022
        %v3024 = vrcp.pop %v2557
        %v3025 = vmul.f32 1.0, %v3024
        %v3026 = vrcp.pop %v2558
        %v3027 = vmul.f32 1.0, %v3026
        %v3028 = vrcp.pop %v2559
        %v3029 = vmul.f32 1.0, %v3028
        %v3030 = vrcp.pop %v2560
        %v3031 = vmul.f32 1.0, %v3030
        %v3032 = vrcp.pop %v2561
        %v3033 = vmul.f32 1.0, %v3032
        %v3034 = vrcp.pop %v2562
        %v3035 = vmul.f32 1.0, %v3034
        %v3036 = vrcp.pop %v2563
        %v3037 = vmul.f32 1.0, %v3036
        %v3038 = vrcp.pop %v2564
        %v3039 = vmul.f32 1.0, %v3038
        %v3040 = vrcp.pop %v2565
        %v3041 = vmul.f32 1.0, %v3040
        %v3042 = vrcp.pop %v2566
        %v3043 = vmul.f32 1.0, %v3042
        %v3044 = vrcp.pop %v2567
        %v3045 = vmul.f32 1.0, %v3044
        %v3046 = vrcp.pop %v2568
        %v3047 = vmul.f32 1.0, %v3046
        %v3048 = vrcp.pop %v2569
        %v3049 = vmul.f32 1.0, %v3048
        %v3050 = vrcp.pop %v2570
        %v3051 = vmul.f32 1.0, %v3050
        %v3052 = vrcp.pop %v2571
        %v3053 = vmul.f32 1.0, %v3052
        %v3054 = vrcp.pop %v2572
        %v3055 = vmul.f32 1.0, %v3054
        %v3056 = vrcp.pop %v2573
        %v3057 = vmul.f32 1.0, %v3056
        %v3058 = vrcp.pop %v2574
        %v3059 = vmul.f32 1.0, %v3058
        %v3060 = vrcp.pop %v2575
        %v3061 = vmul.f32 1.0, %v3060
        %v3062 = vrcp.pop %v2576
        %v3063 = vmul.f32 1.0, %v3062
        %v3064 = vrcp.pop %v2577
        %v3065 = vmul.f32 1.0, %v3064
        %v3066 = vrcp.pop %v2578
        %v3067 = vmul.f32 1.0, %v3066
        %v3068 = vrcp.pop %v2579
        %v3069 = vmul.f32 1.0, %v3068
        %v3070 = vrcp.pop %v2580
        %v3071 = vmul.f32 1.0, %v3070
        %v3072 = vrcp.pop %v2581
        %v3073 = vmul.f32 1.0, %v3072
        %v3074 = vrcp.pop %v2582
        %v3075 = vmul.f32 1.0, %v3074
        %v3076 = vrcp.pop %v2583
        %v3077 = vmul.f32 1.0, %v3076
        %v3078 = vrcp.pop %v2584
        %v3079 = vmul.f32 1.0, %v3078
        %v3080 = vrcp.pop %v2585
        %v3081 = vmul.f32 1.0, %v3080
        %v3082 = vrcp.pop %v2586
        %v3083 = vmul.f32 1.0, %v3082
        %v3084 = vrcp.pop %v2587
        %v3085 = vmul.f32 1.0, %v3084
        %v3086 = vrcp.pop %v2588
        %v3087 = vmul.f32 1.0, %v3086
        %v3088 = vrcp.pop %v2589
        %v3089 = vmul.f32 1.0, %v3088
        %v3090 = vrcp.pop %v2590
        %v3091 = vmul.f32 1.0, %v3090
        %v3092 = vrcp.pop %v2591
        %v3093 = vmul.f32 1.0, %v3092
        %v3094 = vrcp.pop %v2592
        %v3095 = vmul.f32 1.0, %v3094
        %v3096 = vrcp.pop %v2593
        %v3097 = vmul.f32 1.0, %v3096
        %v3098 = vrcp.pop %v2594
        %v3099 = vmul.f32 1.0, %v3098
        %v3100 = vrcp.pop %v2595
        %v3101 = vmul.f32 1.0, %v3100
        %v3102 = vrcp.pop %v2596
        %v3103 = vmul.f32 1.0, %v3102
        %v3104 = vrcp.pop %v2597
        %v3105 = vmul.f32 1.0, %v3104
        %v3106 = vrcp.pop %v2598
        %v3107 = vmul.f32 1.0, %v3106
        %v3108 = vrcp.pop %v2599
        %v3109 = vmul.f32 1.0, %v3108
        %v3110 = vrcp.pop %v2600
        %v3111 = vmul.f32 1.0, %v3110
        %v3112 = vrcp.pop %v2601
        %v3113 = vmul.f32 1.0, %v3112
        %v3114 = vrcp.pop %v2602
        %v3115 = vmul.f32 1.0, %v3114
        %v3116 = vrcp.pop %v2603
        %v3117 = vmul.f32 1.0, %v3116
        %v3118 = vrcp.pop %v2604
        %v3119 = vmul.f32 1.0, %v3118
        %v3120 = vrcp.pop %v2605
        %v3121 = vmul.f32 1.0, %v3120
        %v3122 = vrcp.pop %v2606
        %v3123 = vmul.f32 1.0, %v3122
        %v3124 = vrcp.pop %v2607
        %v3125 = vmul.f32 1.0, %v3124
        %v3126 = vrcp.pop %v2608
        %v3127 = vmul.f32 1.0, %v3126
        %v3128 = vrcp.pop %v2609
        %v3129 = vmul.f32 1.0, %v3128
        %v3130 = vrcp.pop %v2610
        %v3131 = vmul.f32 1.0, %v3130
        %v3132 = vrcp.pop %v2611
        %v3133 = vmul.f32 1.0, %v3132
        %v3134 = vrcp.pop %v2612
        %v3135 = vmul.f32 1.0, %v3134
        %v3136 = vrcp.pop %v2613
        %v3137 = vmul.f32 1.0, %v3136
        %v3138 = vrcp.pop %v2614
        %v3139 = vmul.f32 1.0, %v3138
        %v3140 = vrcp.pop %v2615
        %v3141 = vmul.f32 1.0, %v3140
        %v3142 = vrcp.pop %v2616
        %v3143 = vmul.f32 1.0, %v3142
        %v3144 = vrcp.pop %v2617
        %v3145 = vmul.f32 1.0, %v3144
        %v3146 = vrcp.pop %v2618
        %v3147 = vmul.f32 1.0, %v3146
        %v3148 = vrcp.pop %v2619
        %v3149 = vmul.f32 1.0, %v3148
        %v3150 = vrcp.pop %v2620
        %v3151 = vmul.f32 1.0, %v3150
        %v3152 = vrcp.pop %v2621
        %v3153 = vmul.f32 1.0, %v3152
        %v3154 = vrcp.pop %v2622
        %v3155 = vmul.f32 1.0, %v3154
        %v3156 = vrcp.pop %v2623
        %v3157 = vmul.f32 1.0, %v3156
        %v3158 = vrcp.pop %v2624
        %v3159 = vmul.f32 1.0, %v3158
        %v3160 = vrcp.pop %v2625
        %v3161 = vmul.f32 1.0, %v3160
        %v3162 = vrcp.pop %v2626
        %v3163 = vmul.f32 1.0, %v3162
        %v3164 = vrcp.pop %v2627
        %v3165 = vmul.f32 1.0, %v3164
        %v3166 = vrcp.pop %v2628
        %v3167 = vmul.f32 1.0, %v3166
        %v3168 = vrcp.pop %v2629
        %v3169 = vmul.f32 1.0, %v3168
        %v3170 = vrcp.pop %v2630
        %v3171 = vmul.f32 1.0, %v3170
        %v3172 = vrcp.pop %v2631
        %v3173 = vmul.f32 1.0, %v3172
        %v3174 = vrcp.pop %v2632
        %v3175 = vmul.f32 1.0, %v3174
        %v3176 = vrcp.pop %v2633
        %v3177 = vmul.f32 1.0, %v3176
        %v3178 = vrcp.pop %v2634
        %v3179 = vmul.f32 1.0, %v3178
        %v3180 = vrcp.pop %v2635
        %v3181 = vmul.f32 1.0, %v3180
        %v3182 = vrcp.pop %v2636
        %v3183 = vmul.f32 1.0, %v3182
        %v3184 = vrcp.pop %v2637
        %v3185 = vmul.f32 1.0, %v3184
        %v3186 = vrcp.pop %v2638
        %v3187 = vmul.f32 1.0, %v3186
        %v3188 = vrcp.pop %v2639
        %v3189 = vmul.f32 1.0, %v3188
        %v3190 = vrcp.pop %v2640
        %v3191 = vmul.f32 1.0, %v3190
        %v3192 = vrcp.pop %v2641
        %v3193 = vmul.f32 1.0, %v3192
        %v3194 = vrcp.pop %v2642
        %v3195 = vmul.f32 1.0, %v3194
        %v3196 = vrcp.pop %v2643
        %v3197 = vmul.f32 1.0, %v3196
        %v3198 = vrcp.pop %v2644
        %v3199 = vmul.f32 1.0, %v3198
        %v3200 = vrcp.pop %v2645
        %v3201 = vmul.f32 1.0, %v3200
        %v3202 = vrcp.pop %v2646
        %v3203 = vmul.f32 1.0, %v3202
        %v3204 = vrcp.pop %v2647
        %v3205 = vmul.f32 1.0, %v3204
        %v3206 = vrcp.pop %v2648
        %v3207 = vmul.f32 1.0, %v3206
        %v3208 = vrcp.pop %v2649
        %v3209 = vmul.f32 1.0, %v3208
        %v3210 = vrcp.pop %v2650
        %v3211 = vmul.f32 1.0, %v3210
        %v3212 = vrcp.pop %v2651
        %v3213 = vmul.f32 1.0, %v3212
        %v3214 = vrcp.pop %v2652
        %v3215 = vmul.f32 1.0, %v3214
        %v3216 = vrcp.pop %v2653
        %v3217 = vmul.f32 1.0, %v3216
        %v3218 = vrcp.pop %v2654
        %v3219 = vmul.f32 1.0, %v3218
        %v3220 = vrcp.pop %v2655
        %v3221 = vmul.f32 1.0, %v3220
        %v3222 = vrcp.pop %v2656
        %v3223 = vmul.f32 1.0, %v3222
        %v3224 = vrcp.pop %v2657
        %v3225 = vmul.f32 1.0, %v3224
        %v3226 = vrcp.pop %v2658
        %v3227 = vmul.f32 1.0, %v3226
        %v3228 = vrcp.pop %v2659
        %v3229 = vmul.f32 1.0, %v3228
        %v3230 = vrcp.pop %v2660
        %v3231 = vmul.f32 1.0, %v3230
        %v3232 = vrcp.pop %v2661
        %v3233 = vmul.f32 1.0, %v3232
        %v3234 = vrcp.pop %v2662
        %v3235 = vmul.f32 1.0, %v3234
        %v3236 = vrcp.pop %v2663
        %v3237 = vmul.f32 1.0, %v3236
        %v3238 = vrcp.pop %v2664
        %v3239 = vmul.f32 1.0, %v3238
        %v3240 = vrcp.pop %v2665
        %v3241 = vmul.f32 1.0, %v3240
        %v3242 = vrcp.pop %v2666
        %v3243 = vmul.f32 1.0, %v3242
        %v3244 = vrcp.pop %v2667
        %v3245 = vmul.f32 1.0, %v3244
        %v3246 = vrcp.pop %v2668
        %v3247 = vmul.f32 1.0, %v3246
        %v3248 = vrcp.pop %v2669
        %v3249 = vmul.f32 1.0, %v3248
        %v3250 = vrcp.pop %v2670
        %v3251 = vmul.f32 1.0, %v3250
        %v3252 = vrcp.pop %v2671
        %v3253 = vmul.f32 1.0, %v3252
        %v3254 = vrcp.pop %v2672
        %v3255 = vmul.f32 1.0, %v3254
        %v3256 = vrcp.pop %v2673
        %v3257 = vmul.f32 1.0, %v3256
        %v3258 = vrcp.pop %v2674
        %v3259 = vmul.f32 1.0, %v3258
        %v3260 = vrcp.pop %v2675
        %v3261 = vmul.f32 1.0, %v3260
        %v3262 = vrcp.pop %v2676
        %v3263 = vmul.f32 1.0, %v3262
        %v3264 = vrcp.pop %v2677
        %v3265 = vmul.f32 1.0, %v3264
        %v3266 = vrcp.pop %v2678
        %v3267 = vmul.f32 1.0, %v3266
        %v3268 = vrcp.pop %v2679
        %v3269 = vmul.f32 1.0, %v3268
        %v3270 = vrcp.pop %v2680
        %v3271 = vmul.f32 1.0, %v3270
        %v3272 = vrcp.pop %v2681
        %v3273 = vmul.f32 1.0, %v3272
        %v3274 = vrcp.pop %v2682
        %v3275 = vmul.f32 1.0, %v3274
        %v3276 = vrcp.pop %v2683
        %v3277 = vmul.f32 1.0, %v3276
        %v3278 = vrcp.pop %v2684
        %v3279 = vmul.f32 1.0, %v3278
        %v3280 = vrcp.pop %v2685
        %v3281 = vmul.f32 1.0, %v3280
        %v3282 = vrcp.pop %v2686
        %v3283 = vmul.f32 1.0, %v3282
        %v3284 = vrcp.pop %v2687
        %v3285 = vmul.f32 1.0, %v3284
        %v3286 = vrcp.pop %v2688
        %v3287 = vmul.f32 1.0, %v3286
        %v3288 = vrcp.pop %v2689
        %v3289 = vmul.f32 1.0, %v3288
        %v3290 = vrcp.pop %v2690
        %v3291 = vmul.f32 1.0, %v3290
        %v3292 = vrcp.pop %v2691
        %v3293 = vmul.f32 1.0, %v3292
        %v3294 = vrcp.pop %v2692
        %v3295 = vmul.f32 1.0, %v3294
        %v3296 = vrcp.pop %v2693
        %v3297 = vmul.f32 1.0, %v3296
        %v3298 = vrcp.pop %v2694
        %v3299 = vmul.f32 1.0, %v3298
        %v3300 = vrcp.pop %v2695
        %v3301 = vmul.f32 1.0, %v3300
        %v3302 = vrcp.pop %v2696
        %v3303 = vmul.f32 1.0, %v3302
        %v3304 = vrcp.pop %v2697
        %v3305 = vmul.f32 1.0, %v3304
        %v3306 = vrcp.pop %v2698
        %v3307 = vmul.f32 1.0, %v3306
        %v3308 = vrcp.pop %v2699
        %v3309 = vmul.f32 1.0, %v3308
        %v3310 = vrcp.pop %v2700
        %v3311 = vmul.f32 1.0, %v3310
        %v3312 = vrcp.pop %v2701
        %v3313 = vmul.f32 1.0, %v3312
        %v3314 = vrcp.pop %v2702
        %v3315 = vmul.f32 1.0, %v3314
        %v3316 = vrcp.pop %v2703
        %v3317 = vmul.f32 1.0, %v3316
        %v3318 = vrcp.pop %v2704
        %v3319 = vmul.f32 1.0, %v3318
        %v3320 = vrcp.pop %v2705
        %v3321 = vmul.f32 1.0, %v3320
        %v3322 = vrcp.pop %v2706
        %v3323 = vmul.f32 1.0, %v3322
        %v3324 = vrcp.pop %v2707
        %v3325 = vmul.f32 1.0, %v3324
        %v3326 = vrcp.pop %v2708
        %v3327 = vmul.f32 1.0, %v3326
        %v3328 = vrcp.pop %v2709
        %v3329 = vmul.f32 1.0, %v3328
        %v3330 = vrcp.pop %v2710
        %v3331 = vmul.f32 1.0, %v3330
        %v3332 = vrcp.pop %v2711
        %v3333 = vmul.f32 1.0, %v3332
        %v3334 = vrcp.pop %v2712
        %v3335 = vmul.f32 1.0, %v3334
        %v3336 = vrcp.pop %v2713
        %v3337 = vmul.f32 1.0, %v3336
        %v3338 = vrcp.pop %v2714
        %v3339 = vmul.f32 1.0, %v3338
        %v3340 = vrcp.pop %v2715
        %v3341 = vmul.f32 1.0, %v3340
        %v3342 = vrcp.pop %v2716
        %v3343 = vmul.f32 1.0, %v3342
        %v3344 = vrcp.pop %v2717
        %v3345 = vmul.f32 1.0, %v3344
        %v3346 = vrcp.pop %v2718
        %v3347 = vmul.f32 1.0, %v3346
        %v3348 = vrcp.pop %v2719
        %v3349 = vmul.f32 1.0, %v3348
        %v3350 = vrcp.pop %v2720
        %v3351 = vmul.f32 1.0, %v3350
        %v3352 = vrcp.pop %v2721
        %v3353 = vmul.f32 1.0, %v3352
        %v3354 = vrcp.pop %v2722
        %v3355 = vmul.f32 1.0, %v3354
        %v3356 = vrcp.pop %v2723
        %v3357 = vmul.f32 1.0, %v3356
        %v3358 = vrcp.pop %v2724
        %v3359 = vmul.f32 1.0, %v3358
        %v3360 = vrcp.pop %v2725
        %v3361 = vmul.f32 1.0, %v3360
        %v3362 = vrcp.pop %v2726
        %v3363 = vmul.f32 1.0, %v3362
        %v3364 = vrcp.pop %v2727
        %v3365 = vmul.f32 1.0, %v3364
        %v3366 = vrcp.pop %v2728
        %v3367 = vmul.f32 1.0, %v3366
        %v3368 = vrcp.pop %v2729
        %v3369 = vmul.f32 1.0, %v3368
        %v3370 = vmul.f32 %v520, %v2731
        %v3371 = vmul.f32 %v522, %v2733
        %v3372 = vmul.f32 %v713, %v2735
        %v3373 = vmul.f32 %v715, %v2737
        %v3374 = vmul.f32 %v906, %v2739
        %v3375 = vmul.f32 %v908, %v2741
        %v3376 = vmul.f32 %v1099, %v2743
        %v3377 = vmul.f32 %v1101, %v2745
        %v3378 = vmul.f32 %v1292, %v2747
        %v3379 = vmul.f32 %v1294, %v2749
        %v3380 = vmul.f32 %v524, %v2751
        %v3381 = vmul.f32 %v526, %v2753
        %v3382 = vmul.f32 %v717, %v2755
        %v3383 = vmul.f32 %v719, %v2757
        %v3384 = vmul.f32 %v910, %v2759
        %v3385 = vmul.f32 %v912, %v2761
        %v3386 = vmul.f32 %v1103, %v2763
        %v3387 = vmul.f32 %v1105, %v2765
        %v3388 = vmul.f32 %v1296, %v2767
        %v3389 = vmul.f32 %v1298, %v2769
        %v3390 = vmul.f32 %v530, %v2771
        %v3391 = vmul.f32 %v532, %v2773
        %v3392 = vmul.f32 %v723, %v2775
        %v3393 = vmul.f32 %v725, %v2777
        %v3394 = vmul.f32 %v916, %v2779
        %v3395 = vmul.f32 %v918, %v2781
        %v3396 = vmul.f32 %v1109, %v2783
        %v3397 = vmul.f32 %v1111, %v2785
        %v3398 = vmul.f32 %v1302, %v2787
        %v3399 = vmul.f32 %v1304, %v2789
        %v3400 = vmul.f32 %v534, %v2791
        %v3401 = vmul.f32 %v536, %v2793
        %v3402 = vmul.f32 %v727, %v2795
        %v3403 = vmul.f32 %v729, %v2797
        %v3404 = vmul.f32 %v920, %v2799
        %v3405 = vmul.f32 %v922, %v2801
        %v3406 = vmul.f32 %v1113, %v2803
        %v3407 = vmul.f32 %v1115, %v2805
        %v3408 = vmul.f32 %v1306, %v2807
        %v3409 = vmul.f32 %v1308, %v2809
        %v3410 = vmul.f32 %v540, %v2811
        %v3411 = vmul.f32 %v542, %v2813
        %v3412 = vmul.f32 %v733, %v2815
        %v3413 = vmul.f32 %v735, %v2817
        %v3414 = vmul.f32 %v926, %v2819
        %v3415 = vmul.f32 %v928, %v2821
        %v3416 = vmul.f32 %v1119, %v2823
        %v3417 = vmul.f32 %v1121, %v2825
        %v3418 = vmul.f32 %v1312, %v2827
        %v3419 = vmul.f32 %v1314, %v2829
        %v3420 = vmul.f32 %v544, %v2831
        %v3421 = vmul.f32 %v546, %v2833
        %v3422 = vmul.f32 %v737, %v2835
        %v3423 = vmul.f32 %v739, %v2837
        %v3424 = vmul.f32 %v930, %v2839
        %v3425 = vmul.f32 %v932, %v2841
        %v3426 = vmul.f32 %v1123, %v2843
        %v3427 = vmul.f32 %v1125, %v2845
        %v3428 = vmul.f32 %v1316, %v2847
        %v3429 = vmul.f32 %v1318, %v2849
        %v3430 = vmul.f32 %v550, %v2851
        %v3431 = vmul.f32 %v552, %v2853
        %v3432 = vmul.f32 %v743, %v2855
        %v3433 = vmul.f32 %v745, %v2857
        %v3434 = vmul.f32 %v936, %v2859
        %v3435 = vmul.f32 %v938, %v2861
        %v3436 = vmul.f32 %v1129, %v2863
        %v3437 = vmul.f32 %v1131, %v2865
        %v3438 = vmul.f32 %v1322, %v2867
        %v3439 = vmul.f32 %v1324, %v2869
        %v3440 = vmul.f32 %v554, %v2871
        %v3441 = vmul.f32 %v556, %v2873
        %v3442 = vmul.f32 %v747, %v2875
        %v3443 = vmul.f32 %v749, %v2877
        %v3444 = vmul.f32 %v940, %v2879
        %v3445 = vmul.f32 %v942, %v2881
        %v3446 = vmul.f32 %v1133, %v2883
        %v3447 = vmul.f32 %v1135, %v2885
        %v3448 = vmul.f32 %v1326, %v2887
        %v3449 = vmul.f32 %v1328, %v2889
        %v3450 = vmul.f32 %v560, %v2891
        %v3451 = vmul.f32 %v562, %v2893
        %v3452 = vmul.f32 %v753, %v2895
        %v3453 = vmul.f32 %v755, %v2897
        %v3454 = vmul.f32 %v946, %v2899
        %v3455 = vmul.f32 %v948, %v2901
        %v3456 = vmul.f32 %v1139, %v2903
        %v3457 = vmul.f32 %v1141, %v2905
        %v3458 = vmul.f32 %v1332, %v2907
        %v3459 = vmul.f32 %v1334, %v2909
        %v3460 = vmul.f32 %v564, %v2911
        %v3461 = vmul.f32 %v566, %v2913
        %v3462 = vmul.f32 %v757, %v2915
        %v3463 = vmul.f32 %v759, %v2917
        %v3464 = vmul.f32 %v950, %v2919
        %v3465 = vmul.f32 %v952, %v2921
        %v3466 = vmul.f32 %v1143, %v2923
        %v3467 = vmul.f32 %v1145, %v2925
        %v3468 = vmul.f32 %v1336, %v2927
        %v3469 = vmul.f32 %v1338, %v2929
        %v3470 = vmul.f32 %v570, %v2931
        %v3471 = vmul.f32 %v572, %v2933
        %v3472 = vmul.f32 %v763, %v2935
        %v3473 = vmul.f32 %v765, %v2937
        %v3474 = vmul.f32 %v956, %v2939
        %v3475 = vmul.f32 %v958, %v2941
        %v3476 = vmul.f32 %v1149, %v2943
        %v3477 = vmul.f32 %v1151, %v2945
        %v3478 = vmul.f32 %v1342, %v2947
        %v3479 = vmul.f32 %v1344, %v2949
        %v3480 = vmul.f32 %v574, %v2951
        %v3481 = vmul.f32 %v576, %v2953
        %v3482 = vmul.f32 %v767, %v2955
        %v3483 = vmul.f32 %v769, %v2957
        %v3484 = vmul.f32 %v960, %v2959
        %v3485 = vmul.f32 %v962, %v2961
        %v3486 = vmul.f32 %v1153, %v2963
        %v3487 = vmul.f32 %v1155, %v2965
        %v3488 = vmul.f32 %v1346, %v2967
        %v3489 = vmul.f32 %v1348, %v2969
        %v3490 = vmul.f32 %v580, %v2971
        %v3491 = vmul.f32 %v582, %v2973
        %v3492 = vmul.f32 %v773, %v2975
        %v3493 = vmul.f32 %v775, %v2977
        %v3494 = vmul.f32 %v966, %v2979
        %v3495 = vmul.f32 %v968, %v2981
        %v3496 = vmul.f32 %v1159, %v2983
        %v3497 = vmul.f32 %v1161, %v2985
        %v3498 = vmul.f32 %v1352, %v2987
        %v3499 = vmul.f32 %v1354, %v2989
        %v3500 = vmul.f32 %v584, %v2991
        %v3501 = vmul.f32 %v586, %v2993
        %v3502 = vmul.f32 %v777, %v2995
        %v3503 = vmul.f32 %v779, %v2997
        %v3504 = vmul.f32 %v970, %v2999
        %v3505 = vmul.f32 %v972, %v3001
        %v3506 = vmul.f32 %v1163, %v3003
        %v3507 = vmul.f32 %v1165, %v3005
        %v3508 = vmul.f32 %v1356, %v3007
        %v3509 = vmul.f32 %v1358, %v3009
        %v3510 = vmul.f32 %v590, %v3011
        %v3511 = vmul.f32 %v592, %v3013
        %v3512 = vmul.f32 %v783, %v3015
        %v3513 = vmul.f32 %v785, %v3017
        %v3514 = vmul.f32 %v976, %v3019
        %v3515 = vmul.f32 %v978, %v3021
        %v3516 = vmul.f32 %v1169, %v3023
        %v3517 = vmul.f32 %v1171, %v3025
        %v3518 = vmul.f32 %v1362, %v3027
        %v3519 = vmul.f32 %v1364, %v3029
        %v3520 = vmul.f32 %v594, %v3031
        %v3521 = vmul.f32 %v596, %v3033
        %v3522 = vmul.f32 %v787, %v3035
        %v3523 = vmul.f32 %v789, %v3037
        %v3524 = vmul.f32 %v980, %v3039
        %v3525 = vmul.f32 %v982, %v3041
        %v3526 = vmul.f32 %v1173, %v3043
        %v3527 = vmul.f32 %v1175, %v3045
        %v3528 = vmul.f32 %v1366, %v3047
        %v3529 = vmul.f32 %v1368, %v3049
        %v3530 = vmul.f32 %v600, %v3051
        %v3531 = vmul.f32 %v602, %v3053
        %v3532 = vmul.f32 %v793, %v3055
        %v3533 = vmul.f32 %v795, %v3057
        %v3534 = vmul.f32 %v986, %v3059
        %v3535 = vmul.f32 %v988, %v3061
        %v3536 = vmul.f32 %v1179, %v3063
        %v3537 = vmul.f32 %v1181, %v3065
        %v3538 = vmul.f32 %v1372, %v3067
        %v3539 = vmul.f32 %v1374, %v3069
        %v3540 = vmul.f32 %v604, %v3071
        %v3541 = vmul.f32 %v606, %v3073
        %v3542 = vmul.f32 %v797, %v3075
        %v3543 = vmul.f32 %v799, %v3077
        %v3544 = vmul.f32 %v990, %v3079
        %v3545 = vmul.f32 %v992, %v3081
        %v3546 = vmul.f32 %v1183, %v3083
        %v3547 = vmul.f32 %v1185, %v3085
        %v3548 = vmul.f32 %v1376, %v3087
        %v3549 = vmul.f32 %v1378, %v3089
        %v3550 = vmul.f32 %v610, %v3091
        %v3551 = vmul.f32 %v612, %v3093
        %v3552 = vmul.f32 %v803, %v3095
        %v3553 = vmul.f32 %v805, %v3097
        %v3554 = vmul.f32 %v996, %v3099
        %v3555 = vmul.f32 %v998, %v3101
        %v3556 = vmul.f32 %v1189, %v3103
        %v3557 = vmul.f32 %v1191, %v3105
        %v3558 = vmul.f32 %v1382, %v3107
        %v3559 = vmul.f32 %v1384, %v3109
        %v3560 = vmul.f32 %v614, %v3111
        %v3561 = vmul.f32 %v616, %v3113
        %v3562 = vmul.f32 %v807, %v3115
        %v3563 = vmul.f32 %v809, %v3117
        %v3564 = vmul.f32 %v1000, %v3119
        %v3565 = vmul.f32 %v1002, %v3121
        %v3566 = vmul.f32 %v1193, %v3123
        %v3567 = vmul.f32 %v1195, %v3125
        %v3568 = vmul.f32 %v1386, %v3127
        %v3569 = vmul.f32 %v1388, %v3129
        %v3570 = vmul.f32 %v620, %v3131
        %v3571 = vmul.f32 %v622, %v3133
        %v3572 = vmul.f32 %v813, %v3135
        %v3573 = vmul.f32 %v815, %v3137
        %v3574 = vmul.f32 %v1006, %v3139
        %v3575 = vmul.f32 %v1008, %v3141
        %v3576 = vmul.f32 %v1199, %v3143
        %v3577 = vmul.f32 %v1201, %v3145
        %v3578 = vmul.f32 %v1392, %v3147
        %v3579 = vmul.f32 %v1394, %v3149
        %v3580 = vmul.f32 %v624, %v3151
        %v3581 = vmul.f32 %v626, %v3153
        %v3582 = vmul.f32 %v817, %v3155
        %v3583 = vmul.f32 %v819, %v3157
        %v3584 = vmul.f32 %v1010, %v3159
        %v3585 = vmul.f32 %v1012, %v3161
        %v3586 = vmul.f32 %v1203, %v3163
        %v3587 = vmul.f32 %v1205, %v3165
        %v3588 = vmul.f32 %v1396, %v3167
        %v3589 = vmul.f32 %v1398, %v3169
        %v3590 = vmul.f32 %v630, %v3171
        %v3591 = vmul.f32 %v632, %v3173
        %v3592 = vmul.f32 %v823, %v3175
        %v3593 = vmul.f32 %v825, %v3177
        %v3594 = vmul.f32 %v1016, %v3179
        %v3595 = vmul.f32 %v1018, %v3181
        %v3596 = vmul.f32 %v1209, %v3183
        %v3597 = vmul.f32 %v1211, %v3185
        %v3598 = vmul.f32 %v1402, %v3187
        %v3599 = vmul.f32 %v1404, %v3189
        %v3600 = vmul.f32 %v634, %v3191
        %v3601 = vmul.f32 %v636, %v3193
        %v3602 = vmul.f32 %v827, %v3195
        %v3603 = vmul.f32 %v829, %v3197
        %v3604 = vmul.f32 %v1020, %v3199
        %v3605 = vmul.f32 %v1022, %v3201
        %v3606 = vmul.f32 %v1213, %v3203
        %v3607 = vmul.f32 %v1215, %v3205
        %v3608 = vmul.f32 %v1406, %v3207
        %v3609 = vmul.f32 %v1408, %v3209
        %v3610 = vmul.f32 %v640, %v3211
        %v3611 = vmul.f32 %v642, %v3213
        %v3612 = vmul.f32 %v833, %v3215
        %v3613 = vmul.f32 %v835, %v3217
        %v3614 = vmul.f32 %v1026, %v3219
        %v3615 = vmul.f32 %v1028, %v3221
        %v3616 = vmul.f32 %v1219, %v3223
        %v3617 = vmul.f32 %v1221, %v3225
        %v3618 = vmul.f32 %v1412, %v3227
        %v3619 = vmul.f32 %v1414, %v3229
        %v3620 = vmul.f32 %v644, %v3231
        %v3621 = vmul.f32 %v646, %v3233
        %v3622 = vmul.f32 %v837, %v3235
        %v3623 = vmul.f32 %v839, %v3237
        %v3624 = vmul.f32 %v1030, %v3239
        %v3625 = vmul.f32 %v1032, %v3241
        %v3626 = vmul.f32 %v1223, %v3243
        %v3627 = vmul.f32 %v1225, %v3245
        %v3628 = vmul.f32 %v1416, %v3247
        %v3629 = vmul.f32 %v1418, %v3249
        %v3630 = vmul.f32 %v650, %v3251
        %v3631 = vmul.f32 %v652, %v3253
        %v3632 = vmul.f32 %v843, %v3255
        %v3633 = vmul.f32 %v845, %v3257
        %v3634 = vmul.f32 %v1036, %v3259
        %v3635 = vmul.f32 %v1038, %v3261
        %v3636 = vmul.f32 %v1229, %v3263
        %v3637 = vmul.f32 %v1231, %v3265
        %v3638 = vmul.f32 %v1422, %v3267
        %v3639 = vmul.f32 %v1424, %v3269
        %v3640 = vmul.f32 %v654, %v3271
        %v3641 = vmul.f32 %v656, %v3273
        %v3642 = vmul.f32 %v847, %v3275
        %v3643 = vmul.f32 %v849, %v3277
        %v3644 = vmul.f32 %v1040, %v3279
        %v3645 = vmul.f32 %v1042, %v3281
        %v3646 = vmul.f32 %v1233, %v3283
        %v3647 = vmul.f32 %v1235, %v3285
        %v3648 = vmul.f32 %v1426, %v3287
        %v3649 = vmul.f32 %v1428, %v3289
        %v3650 = vmul.f32 %v660, %v3291
        %v3651 = vmul.f32 %v662, %v3293
        %v3652 = vmul.f32 %v853, %v3295
        %v3653 = vmul.f32 %v855, %v3297
        %v3654 = vmul.f32 %v1046, %v3299
        %v3655 = vmul.f32 %v1048, %v3301
        %v3656 = vmul.f32 %v1239, %v3303
        %v3657 = vmul.f32 %v1241, %v3305
        %v3658 = vmul.f32 %v1432, %v3307
        %v3659 = vmul.f32 %v1434, %v3309
        %v3660 = vmul.f32 %v664, %v3311
        %v3661 = vmul.f32 %v666, %v3313
        %v3662 = vmul.f32 %v857, %v3315
        %v3663 = vmul.f32 %v859, %v3317
        %v3664 = vmul.f32 %v1050, %v3319
        %v3665 = vmul.f32 %v1052, %v3321
        %v3666 = vmul.f32 %v1243, %v3323
        %v3667 = vmul.f32 %v1245, %v3325
        %v3668 = vmul.f32 %v1436, %v3327
        %v3669 = vmul.f32 %v1438, %v3329
        %v3670 = vmul.f32 %v670, %v3331
        %v3671 = vmul.f32 %v672, %v3333
        %v3672 = vmul.f32 %v863, %v3335
        %v3673 = vmul.f32 %v865, %v3337
        %v3674 = vmul.f32 %v1056, %v3339
        %v3675 = vmul.f32 %v1058, %v3341
        %v3676 = vmul.f32 %v1249, %v3343
        %v3677 = vmul.f32 %v1251, %v3345
        %v3678 = vmul.f32 %v1442, %v3347
        %v3679 = vmul.f32 %v1444, %v3349
        %v3680 = vmul.f32 %v674, %v3351
        %v3681 = vmul.f32 %v676, %v3353
        %v3682 = vmul.f32 %v867, %v3355
        %v3683 = vmul.f32 %v869, %v3357
        %v3684 = vmul.f32 %v1060, %v3359
        %v3685 = vmul.f32 %v1062, %v3361
        %v3686 = vmul.f32 %v1253, %v3363
        %v3687 = vmul.f32 %v1255, %v3365
        %v3688 = vmul.f32 %v1446, %v3367
        %v3689 = vmul.f32 %v1448, %v3369
        %v3690 = vld [vmem:[#allocation2] sm:$0xff]
        %v3691 = vld [vmem:[#allocation2 + $0x8] sm:$0xff]
        %v3692 = vld [vmem:[#allocation2 + $0x10] sm:$0xff]
        %v3693 = vld [vmem:[#allocation2 + $0x18] sm:$0xff]
        %v3694 = vld [vmem:[#allocation2 + $0x20] sm:$0xff]
        %v3695 = vld [vmem:[#allocation2 + $0x28] sm:$0xff]
        %v3696 = vld [vmem:[#allocation2 + $0x30] sm:$0xff]
        %v3697 = vld [vmem:[#allocation2 + $0x38] sm:$0xff]
        %v3698 = vld [vmem:[#allocation2 + $0x40] sm:$0xff]
        %v3699 = vld [vmem:[#allocation2 + $0x48] sm:$0xff]
        %v3700 = vadd.f32 %v3370, %v3380
        %v3701 = vadd.f32 %v3700, %v3390
        %v3702 = vadd.f32 %v3701, %v3400
        %v3703 = vadd.f32 %v3702, %v3410
        %v3704 = vadd.f32 %v3703, %v3420
        %v3705 = vadd.f32 %v3704, %v3430
        %v3706 = vadd.f32 %v3705, %v3440
        %v3707 = vadd.f32 %v3706, %v3450
        %v3708 = vadd.f32 %v3707, %v3460
        %v3709 = vadd.f32 %v3708, %v3470
        %v3710 = vadd.f32 %v3709, %v3480
        %v3711 = vadd.f32 %v3710, %v3490
        %v3712 = vadd.f32 %v3711, %v3500
        %v3713 = vadd.f32 %v3712, %v3510
        %v3714 = vadd.f32 %v3713, %v3520
        %v3715 = vadd.f32 %v3714, %v3530
        %v3716 = vadd.f32 %v3715, %v3540
        %v3717 = vadd.f32 %v3716, %v3550
        %v3718 = vadd.f32 %v3717, %v3560
        %v3719 = vadd.f32 %v3718, %v3570
        %v3720 = vadd.f32 %v3719, %v3580
        %v3721 = vadd.f32 %v3720, %v3590
        %v3722 = vadd.f32 %v3721, %v3600
        %v3723 = vadd.f32 %v3722, %v3610
        %v3724 = vadd.f32 %v3723, %v3620
        %v3725 = vadd.f32 %v3724, %v3630
        %v3726 = vadd.f32 %v3725, %v3640
        %v3727 = vadd.f32 %v3726, %v3650
        %v3728 = vadd.f32 %v3727, %v3660
        %v3729 = vadd.f32 %v3728, %v3670
        %v3730 = vadd.f32 %v3729, %v3680
        %v3731 = vadd.f32 %v3371, %v3381
        %v3732 = vadd.f32 %v3731, %v3391
        %v3733 = vadd.f32 %v3732, %v3401
        %v3734 = vadd.f32 %v3733, %v3411
        %v3735 = vadd.f32 %v3734, %v3421
        %v3736 = vadd.f32 %v3735, %v3431
        %v3737 = vadd.f32 %v3736, %v3441
        %v3738 = vadd.f32 %v3737, %v3451
        %v3739 = vadd.f32 %v3738, %v3461
        %v3740 = vadd.f32 %v3739, %v3471
        %v3741 = vadd.f32 %v3740, %v3481
        %v3742 = vadd.f32 %v3741, %v3491
        %v3743 = vadd.f32 %v3742, %v3501
        %v3744 = vadd.f32 %v3743, %v3511
        %v3745 = vadd.f32 %v3744, %v3521
        %v3746 = vadd.f32 %v3745, %v3531
        %v3747 = vadd.f32 %v3746, %v3541
        %v3748 = vadd.f32 %v3747, %v3551
        %v3749 = vadd.f32 %v3748, %v3561
        %v3750 = vadd.f32 %v3749, %v3571
        %v3751 = vadd.f32 %v3750, %v3581
        %v3752 = vadd.f32 %v3751, %v3591
        %v3753 = vadd.f32 %v3752, %v3601
        %v3754 = vadd.f32 %v3753, %v3611
        %v3755 = vadd.f32 %v3754, %v3621
        %v3756 = vadd.f32 %v3755, %v3631
        %v3757 = vadd.f32 %v3756, %v3641
        %v3758 = vadd.f32 %v3757, %v3651
        %v3759 = vadd.f32 %v3758, %v3661
        %v3760 = vadd.f32 %v3759, %v3671
        %v3761 = vadd.f32 %v3760, %v3681
        %v3762 = vadd.f32 %v3372, %v3382
        %v3763 = vadd.f32 %v3762, %v3392
        %v3764 = vadd.f32 %v3763, %v3402
        %v3765 = vadd.f32 %v3764, %v3412
        %v3766 = vadd.f32 %v3765, %v3422
        %v3767 = vadd.f32 %v3766, %v3432
        %v3768 = vadd.f32 %v3767, %v3442
        %v3769 = vadd.f32 %v3768, %v3452
        %v3770 = vadd.f32 %v3769, %v3462
        %v3771 = vadd.f32 %v3770, %v3472
        %v3772 = vadd.f32 %v3771, %v3482
        %v3773 = vadd.f32 %v3772, %v3492
        %v3774 = vadd.f32 %v3773, %v3502
        %v3775 = vadd.f32 %v3774, %v3512
        %v3776 = vadd.f32 %v3775, %v3522
        %v3777 = vadd.f32 %v3776, %v3532
        %v3778 = vadd.f32 %v3777, %v3542
        %v3779 = vadd.f32 %v3778, %v3552
        %v3780 = vadd.f32 %v3779, %v3562
        %v3781 = vadd.f32 %v3780, %v3572
        %v3782 = vadd.f32 %v3781, %v3582
        %v3783 = vadd.f32 %v3782, %v3592
        %v3784 = vadd.f32 %v3783, %v3602
        %v3785 = vadd.f32 %v3784, %v3612
        %v3786 = vadd.f32 %v3785, %v3622
        %v3787 = vadd.f32 %v3786, %v3632
        %v3788 = vadd.f32 %v3787, %v3642
        %v3789 = vadd.f32 %v3788, %v3652
        %v3790 = vadd.f32 %v3789, %v3662
        %v3791 = vadd.f32 %v3790, %v3672
        %v3792 = vadd.f32 %v3791, %v3682
        %v3793 = vadd.f32 %v3373, %v3383
        %v3794 = vadd.f32 %v3793, %v3393
        %v3795 = vadd.f32 %v3794, %v3403
        %v3796 = vadd.f32 %v3795, %v3413
        %v3797 = vadd.f32 %v3796, %v3423
        %v3798 = vadd.f32 %v3797, %v3433
        %v3799 = vadd.f32 %v3798, %v3443
        %v3800 = vadd.f32 %v3799, %v3453
        %v3801 = vadd.f32 %v3800, %v3463
        %v3802 = vadd.f32 %v3801, %v3473
        %v3803 = vadd.f32 %v3802, %v3483
        %v3804 = vadd.f32 %v3803, %v3493
        %v3805 = vadd.f32 %v3804, %v3503
        %v3806 = vadd.f32 %v3805, %v3513
        %v3807 = vadd.f32 %v3806, %v3523
        %v3808 = vadd.f32 %v3807, %v3533
        %v3809 = vadd.f32 %v3808, %v3543
        %v3810 = vadd.f32 %v3809, %v3553
        %v3811 = vadd.f32 %v3810, %v3563
        %v3812 = vadd.f32 %v3811, %v3573
        %v3813 = vadd.f32 %v3812, %v3583
        %v3814 = vadd.f32 %v3813, %v3593
        %v3815 = vadd.f32 %v3814, %v3603
        %v3816 = vadd.f32 %v3815, %v3613
        %v3817 = vadd.f32 %v3816, %v3623
        %v3818 = vadd.f32 %v3817, %v3633
        %v3819 = vadd.f32 %v3818, %v3643
        %v3820 = vadd.f32 %v3819, %v3653
        %v3821 = vadd.f32 %v3820, %v3663
        %v3822 = vadd.f32 %v3821, %v3673
        %v3823 = vadd.f32 %v3822, %v3683
        %v3824 = vadd.f32 %v3374, %v3384
        %v3825 = vadd.f32 %v3824, %v3394
        %v3826 = vadd.f32 %v3825, %v3404
        %v3827 = vadd.f32 %v3826, %v3414
        %v3828 = vadd.f32 %v3827, %v3424
        %v3829 = vadd.f32 %v3828, %v3434
        %v3830 = vadd.f32 %v3829, %v3444
        %v3831 = vadd.f32 %v3830, %v3454
        %v3832 = vadd.f32 %v3831, %v3464
        %v3833 = vadd.f32 %v3832, %v3474
        %v3834 = vadd.f32 %v3833, %v3484
        %v3835 = vadd.f32 %v3834, %v3494
        %v3836 = vadd.f32 %v3835, %v3504
        %v3837 = vadd.f32 %v3836, %v3514
        %v3838 = vadd.f32 %v3837, %v3524
        %v3839 = vadd.f32 %v3838, %v3534
        %v3840 = vadd.f32 %v3839, %v3544
        %v3841 = vadd.f32 %v3840, %v3554
        %v3842 = vadd.f32 %v3841, %v3564
        %v3843 = vadd.f32 %v3842, %v3574
        %v3844 = vadd.f32 %v3843, %v3584
        %v3845 = vadd.f32 %v3844, %v3594
        %v3846 = vadd.f32 %v3845, %v3604
        %v3847 = vadd.f32 %v3846, %v3614
        %v3848 = vadd.f32 %v3847, %v3624
        %v3849 = vadd.f32 %v3848, %v3634
        %v3850 = vadd.f32 %v3849, %v3644
        %v3851 = vadd.f32 %v3850, %v3654
        %v3852 = vadd.f32 %v3851, %v3664
        %v3853 = vadd.f32 %v3852, %v3674
        %v3854 = vadd.f32 %v3853, %v3684
        %v3855 = vadd.f32 %v3375, %v3385
        %v3856 = vadd.f32 %v3855, %v3395
        %v3857 = vadd.f32 %v3856, %v3405
        %v3858 = vadd.f32 %v3857, %v3415
        %v3859 = vadd.f32 %v3858, %v3425
        %v3860 = vadd.f32 %v3859, %v3435
        %v3861 = vadd.f32 %v3860, %v3445
        %v3862 = vadd.f32 %v3861, %v3455
        %v3863 = vadd.f32 %v3862, %v3465
        %v3864 = vadd.f32 %v3863, %v3475
        %v3865 = vadd.f32 %v3864, %v3485
        %v3866 = vadd.f32 %v3865, %v3495
        %v3867 = vadd.f32 %v3866, %v3505
        %v3868 = vadd.f32 %v3867, %v3515
        %v3869 = vadd.f32 %v3868, %v3525
        %v3870 = vadd.f32 %v3869, %v3535
        %v3871 = vadd.f32 %v3870, %v3545
        %v3872 = vadd.f32 %v3871, %v3555
        %v3873 = vadd.f32 %v3872, %v3565
        %v3874 = vadd.f32 %v3873, %v3575
        %v3875 = vadd.f32 %v3874, %v3585
        %v3876 = vadd.f32 %v3875, %v3595
        %v3877 = vadd.f32 %v3876, %v3605
        %v3878 = vadd.f32 %v3877, %v3615
        %v3879 = vadd.f32 %v3878, %v3625
        %v3880 = vadd.f32 %v3879, %v3635
        %v3881 = vadd.f32 %v3880, %v3645
        %v3882 = vadd.f32 %v3881, %v3655
        %v3883 = vadd.f32 %v3882, %v3665
        %v3884 = vadd.f32 %v3883, %v3675
        %v3885 = vadd.f32 %v3884, %v3685
        %v3886 = vadd.f32 %v3376, %v3386
        %v3887 = vadd.f32 %v3886, %v3396
        %v3888 = vadd.f32 %v3887, %v3406
        %v3889 = vadd.f32 %v3888, %v3416
        %v3890 = vadd.f32 %v3889, %v3426
        %v3891 = vadd.f32 %v3890, %v3436
        %v3892 = vadd.f32 %v3891, %v3446
        %v3893 = vadd.f32 %v3892, %v3456
        %v3894 = vadd.f32 %v3893, %v3466
        %v3895 = vadd.f32 %v3894, %v3476
        %v3896 = vadd.f32 %v3895, %v3486
        %v3897 = vadd.f32 %v3896, %v3496
        %v3898 = vadd.f32 %v3897, %v3506
        %v3899 = vadd.f32 %v3898, %v3516
        %v3900 = vadd.f32 %v3899, %v3526
        %v3901 = vadd.f32 %v3900, %v3536
        %v3902 = vadd.f32 %v3901, %v3546
        %v3903 = vadd.f32 %v3902, %v3556
        %v3904 = vadd.f32 %v3903, %v3566
        %v3905 = vadd.f32 %v3904, %v3576
        %v3906 = vadd.f32 %v3905, %v3586
        %v3907 = vadd.f32 %v3906, %v3596
        %v3908 = vadd.f32 %v3907, %v3606
        %v3909 = vadd.f32 %v3908, %v3616
        %v3910 = vadd.f32 %v3909, %v3626
        %v3911 = vadd.f32 %v3910, %v3636
        %v3912 = vadd.f32 %v3911, %v3646
        %v3913 = vadd.f32 %v3912, %v3656
        %v3914 = vadd.f32 %v3913, %v3666
        %v3915 = vadd.f32 %v3914, %v3676
        %v3916 = vadd.f32 %v3915, %v3686
        %v3917 = vadd.f32 %v3377, %v3387
        %v3918 = vadd.f32 %v3917, %v3397
        %v3919 = vadd.f32 %v3918, %v3407
        %v3920 = vadd.f32 %v3919, %v3417
        %v3921 = vadd.f32 %v3920, %v3427
        %v3922 = vadd.f32 %v3921, %v3437
        %v3923 = vadd.f32 %v3922, %v3447
        %v3924 = vadd.f32 %v3923, %v3457
        %v3925 = vadd.f32 %v3924, %v3467
        %v3926 = vadd.f32 %v3925, %v3477
        %v3927 = vadd.f32 %v3926, %v3487
        %v3928 = vadd.f32 %v3927, %v3497
        %v3929 = vadd.f32 %v3928, %v3507
        %v3930 = vadd.f32 %v3929, %v3517
        %v3931 = vadd.f32 %v3930, %v3527
        %v3932 = vadd.f32 %v3931, %v3537
        %v3933 = vadd.f32 %v3932, %v3547
        %v3934 = vadd.f32 %v3933, %v3557
        %v3935 = vadd.f32 %v3934, %v3567
        %v3936 = vadd.f32 %v3935, %v3577
        %v3937 = vadd.f32 %v3936, %v3587
        %v3938 = vadd.f32 %v3937, %v3597
        %v3939 = vadd.f32 %v3938, %v3607
        %v3940 = vadd.f32 %v3939, %v3617
        %v3941 = vadd.f32 %v3940, %v3627
        %v3942 = vadd.f32 %v3941, %v3637
        %v3943 = vadd.f32 %v3942, %v3647
        %v3944 = vadd.f32 %v3943, %v3657
        %v3945 = vadd.f32 %v3944, %v3667
        %v3946 = vadd.f32 %v3945, %v3677
        %v3947 = vadd.f32 %v3946, %v3687
        %v3948 = vadd.f32 %v3378, %v3388
        %v3949 = vadd.f32 %v3948, %v3398
        %v3950 = vadd.f32 %v3949, %v3408
        %v3951 = vadd.f32 %v3950, %v3418
        %v3952 = vadd.f32 %v3951, %v3428
        %v3953 = vadd.f32 %v3952, %v3438
        %v3954 = vadd.f32 %v3953, %v3448
        %v3955 = vadd.f32 %v3954, %v3458
        %v3956 = vadd.f32 %v3955, %v3468
        %v3957 = vadd.f32 %v3956, %v3478
        %v3958 = vadd.f32 %v3957, %v3488
        %v3959 = vadd.f32 %v3958, %v3498
        %v3960 = vadd.f32 %v3959, %v3508
        %v3961 = vadd.f32 %v3960, %v3518
        %v3962 = vadd.f32 %v3961, %v3528
        %v3963 = vadd.f32 %v3962, %v3538
        %v3964 = vadd.f32 %v3963, %v3548
        %v3965 = vadd.f32 %v3964, %v3558
        %v3966 = vadd.f32 %v3965, %v3568
        %v3967 = vadd.f32 %v3966, %v3578
        %v3968 = vadd.f32 %v3967, %v3588
        %v3969 = vadd.f32 %v3968, %v3598
        %v3970 = vadd.f32 %v3969, %v3608
        %v3971 = vadd.f32 %v3970, %v3618
        %v3972 = vadd.f32 %v3971, %v3628
        %v3973 = vadd.f32 %v3972, %v3638
        %v3974 = vadd.f32 %v3973, %v3648
        %v3975 = vadd.f32 %v3974, %v3658
        %v3976 = vadd.f32 %v3975, %v3668
        %v3977 = vadd.f32 %v3976, %v3678
        %v3978 = vadd.f32 %v3977, %v3688
        %v3979 = vadd.f32 %v3379, %v3389
        %v3980 = vadd.f32 %v3979, %v3399
        %v3981 = vadd.f32 %v3980, %v3409
        %v3982 = vadd.f32 %v3981, %v3419
        %v3983 = vadd.f32 %v3982, %v3429
        %v3984 = vadd.f32 %v3983, %v3439
        %v3985 = vadd.f32 %v3984, %v3449
        %v3986 = vadd.f32 %v3985, %v3459
        %v3987 = vadd.f32 %v3986, %v3469
        %v3988 = vadd.f32 %v3987, %v3479
        %v3989 = vadd.f32 %v3988, %v3489
        %v3990 = vadd.f32 %v3989, %v3499
        %v3991 = vadd.f32 %v3990, %v3509
        %v3992 = vadd.f32 %v3991, %v3519
        %v3993 = vadd.f32 %v3992, %v3529
        %v3994 = vadd.f32 %v3993, %v3539
        %v3995 = vadd.f32 %v3994, %v3549
        %v3996 = vadd.f32 %v3995, %v3559
        %v3997 = vadd.f32 %v3996, %v3569
        %v3998 = vadd.f32 %v3997, %v3579
        %v3999 = vadd.f32 %v3998, %v3589
        %v4000 = vadd.f32 %v3999, %v3599
        %v4001 = vadd.f32 %v4000, %v3609
        %v4002 = vadd.f32 %v4001, %v3619
        %v4003 = vadd.f32 %v4002, %v3629
        %v4004 = vadd.f32 %v4003, %v3639
        %v4005 = vadd.f32 %v4004, %v3649
        %v4006 = vadd.f32 %v4005, %v3659
        %v4007 = vadd.f32 %v4006, %v3669
        %v4008 = vadd.f32 %v4007, %v3679
        %v4009 = vadd.f32 %v4008, %v3689
        %v4010 = vadd.f32 %v3690, %v3730
        %v4011 = vadd.f32 %v3691, %v3761
        %v4012 = vadd.f32 %v3692, %v3792
        %v4013 = vadd.f32 %v3693, %v3823
        %v4014 = vadd.f32 %v3694, %v3854
        %v4015 = vadd.f32 %v3695, %v3885
        %v4016 = vadd.f32 %v3696, %v3916
        %v4017 = vadd.f32 %v3697, %v3947
        %v4018 = vadd.f32 %v3698, %v3978
        %v4019 = vadd.f32 %v3699, %v4009
        %4020 = vst [vmem:[#allocation2] sm:$0xff] %v4010
        %4021 = vst [vmem:[#allocation2 + $0x8] sm:$0xff] %v4011
        %4022 = vst [vmem:[#allocation2 + $0x10] sm:$0xff] %v4012
        %4023 = vst [vmem:[#allocation2 + $0x18] sm:$0xff] %v4013
        %4024 = vst [vmem:[#allocation2 + $0x20] sm:$0xff] %v4014
        %4025 = vst [vmem:[#allocation2 + $0x28] sm:$0xff] %v4015
        %4026 = vst [vmem:[#allocation2 + $0x30] sm:$0xff] %v4016
        %4027 = vst [vmem:[#allocation2 + $0x38] sm:$0xff] %v4017
        %4028 = vst [vmem:[#allocation2 + $0x40] sm:$0xff] %v4018
        %4029 = vst [vmem:[#allocation2 + $0x48] sm:$0xff] %v4019
        // Predicated region
        $region45: #{tpu_custom_call.1} parent=39 // pred_check
          %p4030 = pneg %p251
        $region46: #{tpu_custom_call.1} parent=39 // pred_check_branch
          %4032 = sbr.rel (%p4030) target = $region48
        $region47: #{tpu_custom_call.1} parent=39 // pred_region
          %v4033 = vld [vmem:[#allocation2] sm:$0xff]
          %v4034 = vld [vmem:[#allocation2 + $0x8] sm:$0xff]
          %v4035 = vld [vmem:[#allocation2 + $0x10] sm:$0xff]
          %v4036 = vld [vmem:[#allocation2 + $0x18] sm:$0xff]
          %v4037 = vld [vmem:[#allocation2 + $0x20] sm:$0xff]
          %v4038 = vld [vmem:[#allocation2 + $0x28] sm:$0xff]
          %v4039 = vld [vmem:[#allocation2 + $0x30] sm:$0xff]
          %v4040 = vld [vmem:[#allocation2 + $0x38] sm:$0xff]
          %v4041 = vld [vmem:[#allocation2 + $0x40] sm:$0xff]
          %v4042 = vld [vmem:[#allocation2 + $0x48] sm:$0xff]
          %v4043 = vrot.slane %v4033, 4
          %v4044 = vadd.f32 %v4033, %v4043
          %v4045 = vrot.slane %v4044, 2
          %v4046 = vadd.f32 %v4044, %v4045
          %v4047 = vrot.slane %v4046, 1
          %v4048 = vadd.f32 %v4046, %v4047
          %v4049 = vrot.slane %v4034, 4
          %v4050 = vadd.f32 %v4034, %v4049
          %v4051 = vrot.slane %v4050, 2
          %v4052 = vadd.f32 %v4050, %v4051
          %v4053 = vrot.slane %v4052, 1
          %v4054 = vadd.f32 %v4052, %v4053
          %v4055 = vrot.slane %v4035, 4
          %v4056 = vadd.f32 %v4035, %v4055
          %v4057 = vrot.slane %v4056, 2
          %v4058 = vadd.f32 %v4056, %v4057
          %v4059 = vrot.slane %v4058, 1
          %v4060 = vadd.f32 %v4058, %v4059
          %v4061 = vrot.slane %v4036, 4
          %v4062 = vadd.f32 %v4036, %v4061
          %v4063 = vrot.slane %v4062, 2
          %v4064 = vadd.f32 %v4062, %v4063
          %v4065 = vrot.slane %v4064, 1
          %v4066 = vadd.f32 %v4064, %v4065
          %v4067 = vrot.slane %v4037, 4
          %v4068 = vadd.f32 %v4037, %v4067
          %v4069 = vrot.slane %v4068, 2
          %v4070 = vadd.f32 %v4068, %v4069
          %v4071 = vrot.slane %v4070, 1
          %v4072 = vadd.f32 %v4070, %v4071
          %v4073 = vrot.slane %v4038, 4
          %v4074 = vadd.f32 %v4038, %v4073
          %v4075 = vrot.slane %v4074, 2
          %v4076 = vadd.f32 %v4074, %v4075
          %v4077 = vrot.slane %v4076, 1
          %v4078 = vadd.f32 %v4076, %v4077
          %v4079 = vrot.slane %v4039, 4
          %v4080 = vadd.f32 %v4039, %v4079
          %v4081 = vrot.slane %v4080, 2
          %v4082 = vadd.f32 %v4080, %v4081
          %v4083 = vrot.slane %v4082, 1
          %v4084 = vadd.f32 %v4082, %v4083
          %v4085 = vrot.slane %v4040, 4
          %v4086 = vadd.f32 %v4040, %v4085
          %v4087 = vrot.slane %v4086, 2
          %v4088 = vadd.f32 %v4086, %v4087
          %v4089 = vrot.slane %v4088, 1
          %v4090 = vadd.f32 %v4088, %v4089
          %v4091 = vrot.slane %v4041, 4
          %v4092 = vadd.f32 %v4041, %v4091
          %v4093 = vrot.slane %v4092, 2
          %v4094 = vadd.f32 %v4092, %v4093
          %v4095 = vrot.slane %v4094, 1
          %v4096 = vadd.f32 %v4094, %v4095
          %v4097 = vrot.slane %v4042, 4
          %v4098 = vadd.f32 %v4042, %v4097
          %v4099 = vrot.slane %v4098, 2
          %v4100 = vadd.f32 %v4098, %v4099
          %v4101 = vrot.slane %v4100, 1
          %v4102 = vadd.f32 %v4100, %v4101
          %v4103 = vmul.f32 %v4048, 0.00390625
          %v4104 = vmul.f32 %v4054, 0.00390625
          %v4105 = vmul.f32 %v4060, 0.00390625
          %v4106 = vmul.f32 %v4066, 0.00390625
          %v4107 = vmul.f32 %v4072, 0.00390625
          %v4108 = vmul.f32 %v4078, 0.00390625
          %v4109 = vmul.f32 %v4084, 0.00390625
          %v4110 = vmul.f32 %v4090, 0.00390625
          %v4111 = vmul.f32 %v4096, 0.00390625
          %v4112 = vmul.f32 %v4102, 0.00390625
          %v4113 = vpack.c.bf16 %v4103, %v4103
          %v4114 = vpack.c.bf16 %v4104, %v4104
          %v4115 = vpack.c.bf16 %v4105, %v4105
          %v4116 = vpack.c.bf16 %v4106, %v4106
          %v4117 = vpack.c.bf16 %v4107, %v4107
          %v4118 = vpack.c.bf16 %v4108, %v4108
          %v4119 = vpack.c.bf16 %v4109, %v4109
          %v4120 = vpack.c.bf16 %v4110, %v4110
          %v4121 = vpack.c.bf16 %v4111, %v4111
          %v4122 = vpack.c.bf16 %v4112, %v4112
          %v4123 = vld [vmem:[%s3] sm:$0xf]
          %v4124 = vld [vmem:[%s3 + $0x4] sm:$0xf]
          %v4125 = vld [vmem:[%s3 + $0x8] sm:$0xf]
          %v4126 = vld [vmem:[%s3 + $0xc] sm:$0xf]
          %v4127 = vld [vmem:[%s3 + $0x10] sm:$0xf]
          %v4128 = vld [vmem:[%s3 + $0x14] sm:$0xf]
          %v4129 = vld [vmem:[%s3 + $0x18] sm:$0xf]
          %v4130 = vld [vmem:[%s3 + $0x1c] sm:$0xf]
          %v4131 = vld [vmem:[%s3 + $0x20] sm:$0xf]
          %v4132 = vld [vmem:[%s3 + $0x24] sm:$0xf]
          %v4133 = vld [vmem:[%s3 + $0x28] sm:$0xf]
          %v4134 = vld [vmem:[%s3 + $0x2c] sm:$0xf]
          %v4135 = vld [vmem:[%s3 + $0x30] sm:$0xf]
          %v4136 = vld [vmem:[%s3 + $0x34] sm:$0xf]
          %v4137 = vld [vmem:[%s3 + $0x38] sm:$0xf]
          %v4138 = vld [vmem:[%s3 + $0x3c] sm:$0xf]
          %v4139 = vld [vmem:[%s3 + $0x40] sm:$0xf]
          %v4140 = vld [vmem:[%s3 + $0x44] sm:$0xf]
          %v4141 = vld [vmem:[%s3 + $0x48] sm:$0xf]
          %v4142 = vld [vmem:[%s3 + $0x4c] sm:$0xf]
          %v4143 = vld [vmem:[%s3 + $0x50] sm:$0xf]
          %v4144 = vld [vmem:[%s3 + $0x54] sm:$0xf]
          %v4145 = vld [vmem:[%s3 + $0x58] sm:$0xf]
          %v4146 = vld [vmem:[%s3 + $0x5c] sm:$0xf]
          %v4147 = vld [vmem:[%s3 + $0x60] sm:$0xf]
          %v4148 = vld [vmem:[%s3 + $0x64] sm:$0xf]
          %v4149 = vld [vmem:[%s3 + $0x68] sm:$0xf]
          %v4150 = vld [vmem:[%s3 + $0x6c] sm:$0xf]
          %v4151 = vld [vmem:[%s3 + $0x70] sm:$0xf]
          %v4152 = vld [vmem:[%s3 + $0x74] sm:$0xf]
          %v4153 = vld [vmem:[%s3 + $0x78] sm:$0xf]
          %v4154 = vld [vmem:[%s3 + $0x7c] sm:$0xf]
          %v4155 = vld [vmem:[%s3 + $0x80] sm:$0xf]
          %v4156 = vld [vmem:[%s3 + $0x84] sm:$0xf]
          %v4157 = vld [vmem:[%s3 + $0x88] sm:$0xf]
          %v4158 = vld [vmem:[%s3 + $0x8c] sm:$0xf]
          %v4159 = vld [vmem:[%s3 + $0x90] sm:$0xf]
          %v4160 = vld [vmem:[%s3 + $0x94] sm:$0xf]
          %v4161 = vld [vmem:[%s3 + $0x98] sm:$0xf]
          %v4162 = vld [vmem:[%s3 + $0x9c] sm:$0xf]
          %v4163 = vld [vmem:[%s3 + $0xa0] sm:$0xf]
          %v4164 = vld [vmem:[%s3 + $0xa4] sm:$0xf]
          %v4165 = vld [vmem:[%s3 + $0xa8] sm:$0xf]
          %v4166 = vld [vmem:[%s3 + $0xac] sm:$0xf]
          %v4167 = vld [vmem:[%s3 + $0xb0] sm:$0xf]
          %v4168 = vld [vmem:[%s3 + $0xb4] sm:$0xf]
          %v4169 = vld [vmem:[%s3 + $0xb8] sm:$0xf]
          %v4170 = vld [vmem:[%s3 + $0xbc] sm:$0xf]
          %v4171 = vld [vmem:[%s3 + $0xc0] sm:$0xf]
          %v4172 = vld [vmem:[%s3 + $0xc4] sm:$0xf]
          %v4173 = vld [vmem:[%s3 + $0xc8] sm:$0xf]
          %v4174 = vld [vmem:[%s3 + $0xcc] sm:$0xf]
          %v4175 = vld [vmem:[%s3 + $0xd0] sm:$0xf]
          %v4176 = vld [vmem:[%s3 + $0xd4] sm:$0xf]
          %v4177 = vld [vmem:[%s3 + $0xd8] sm:$0xf]
          %v4178 = vld [vmem:[%s3 + $0xdc] sm:$0xf]
          %v4179 = vld [vmem:[%s3 + $0xe0] sm:$0xf]
          %v4180 = vld [vmem:[%s3 + $0xe4] sm:$0xf]
          %v4181 = vld [vmem:[%s3 + $0xe8] sm:$0xf]
          %v4182 = vld [vmem:[%s3 + $0xec] sm:$0xf]
          %v4183 = vld [vmem:[%s3 + $0xf0] sm:$0xf]
          %v4184 = vld [vmem:[%s3 + $0xf4] sm:$0xf]
          %v4185 = vld [vmem:[%s3 + $0xf8] sm:$0xf]
          %v4186 = vld [vmem:[%s3 + $0xfc] sm:$0xf]
          %v4187 = vld [vmem:[%s3 + $0x100] sm:$0xf]
          %v4188 = vld [vmem:[%s3 + $0x104] sm:$0xf]
          %v4189 = vld [vmem:[%s3 + $0x108] sm:$0xf]
          %v4190 = vld [vmem:[%s3 + $0x10c] sm:$0xf]
          %v4191 = vld [vmem:[%s3 + $0x110] sm:$0xf]
          %v4192 = vld [vmem:[%s3 + $0x114] sm:$0xf]
          %v4193 = vld [vmem:[%s3 + $0x118] sm:$0xf]
          %v4194 = vld [vmem:[%s3 + $0x11c] sm:$0xf]
          %v4195 = vld [vmem:[%s3 + $0x120] sm:$0xf]
          %v4196 = vld [vmem:[%s3 + $0x124] sm:$0xf]
          %v4197 = vld [vmem:[%s3 + $0x128] sm:$0xf]
          %v4198 = vld [vmem:[%s3 + $0x12c] sm:$0xf]
          %v4199 = vld [vmem:[%s3 + $0x130] sm:$0xf]
          %v4200 = vld [vmem:[%s3 + $0x134] sm:$0xf]
          %v4201 = vld [vmem:[%s3 + $0x138] sm:$0xf]
          %v4202 = vld [vmem:[%s3 + $0x13c] sm:$0xf]
          %v4203 = vld [vmem:[%s3 + $0x140] sm:$0xf]
          %v4204 = vld [vmem:[%s3 + $0x144] sm:$0xf]
          %v4205 = vld [vmem:[%s3 + $0x148] sm:$0xf]
          %v4206 = vld [vmem:[%s3 + $0x14c] sm:$0xf]
          %v4207 = vld [vmem:[%s3 + $0x150] sm:$0xf]
          %v4208 = vld [vmem:[%s3 + $0x154] sm:$0xf]
          %v4209 = vld [vmem:[%s3 + $0x158] sm:$0xf]
          %v4210 = vld [vmem:[%s3 + $0x15c] sm:$0xf]
          %v4211 = vld [vmem:[%s3 + $0x160] sm:$0xf]
          %v4212 = vld [vmem:[%s3 + $0x164] sm:$0xf]
          %v4213 = vld [vmem:[%s3 + $0x168] sm:$0xf]
          %v4214 = vld [vmem:[%s3 + $0x16c] sm:$0xf]
          %v4215 = vld [vmem:[%s3 + $0x170] sm:$0xf]
          %v4216 = vld [vmem:[%s3 + $0x174] sm:$0xf]
          %v4217 = vld [vmem:[%s3 + $0x178] sm:$0xf]
          %v4218 = vld [vmem:[%s3 + $0x17c] sm:$0xf]
          %v4219 = vld [vmem:[%s3 + $0x180] sm:$0xf]
          %v4220 = vld [vmem:[%s3 + $0x184] sm:$0xf]
          %v4221 = vld [vmem:[%s3 + $0x188] sm:$0xf]
          %v4222 = vld [vmem:[%s3 + $0x18c] sm:$0xf]
          %v4223 = vld [vmem:[%s3 + $0x190] sm:$0xf]
          %v4224 = vld [vmem:[%s3 + $0x194] sm:$0xf]
          %v4225 = vld [vmem:[%s3 + $0x198] sm:$0xf]
          %v4226 = vld [vmem:[%s3 + $0x19c] sm:$0xf]
          %v4227 = vld [vmem:[%s3 + $0x1a0] sm:$0xf]
          %v4228 = vld [vmem:[%s3 + $0x1a4] sm:$0xf]
          %v4229 = vld [vmem:[%s3 + $0x1a8] sm:$0xf]
          %v4230 = vld [vmem:[%s3 + $0x1ac] sm:$0xf]
          %v4231 = vld [vmem:[%s3 + $0x1b0] sm:$0xf]
          %v4232 = vld [vmem:[%s3 + $0x1b4] sm:$0xf]
          %v4233 = vld [vmem:[%s3 + $0x1b8] sm:$0xf]
          %v4234 = vld [vmem:[%s3 + $0x1bc] sm:$0xf]
          %v4235 = vld [vmem:[%s3 + $0x1c0] sm:$0xf]
          %v4236 = vld [vmem:[%s3 + $0x1c4] sm:$0xf]
          %v4237 = vld [vmem:[%s3 + $0x1c8] sm:$0xf]
          %v4238 = vld [vmem:[%s3 + $0x1cc] sm:$0xf]
          %v4239 = vld [vmem:[%s3 + $0x1d0] sm:$0xf]
          %v4240 = vld [vmem:[%s3 + $0x1d4] sm:$0xf]
          %v4241 = vld [vmem:[%s3 + $0x1d8] sm:$0xf]
          %v4242 = vld [vmem:[%s3 + $0x1dc] sm:$0xf]
          %v4243 = vld [vmem:[%s3 + $0x1e0] sm:$0xf]
          %v4244 = vld [vmem:[%s3 + $0x1e4] sm:$0xf]
          %v4245 = vld [vmem:[%s3 + $0x1e8] sm:$0xf]
          %v4246 = vld [vmem:[%s3 + $0x1ec] sm:$0xf]
          %v4247 = vld [vmem:[%s3 + $0x1f0] sm:$0xf]
          %v4248 = vld [vmem:[%s3 + $0x1f4] sm:$0xf]
          %v4249 = vld [vmem:[%s3 + $0x1f8] sm:$0xf]
          %v4250 = vld [vmem:[%s3 + $0x1fc] sm:$0xf]
          %v4251 = vld [vmem:[%s3 + $0x200] sm:$0xf]
          %v4252 = vld [vmem:[%s3 + $0x204] sm:$0xf]
          %v4253 = vld [vmem:[%s3 + $0x208] sm:$0xf]
          %v4254 = vld [vmem:[%s3 + $0x20c] sm:$0xf]
          %v4255 = vld [vmem:[%s3 + $0x210] sm:$0xf]
          %v4256 = vld [vmem:[%s3 + $0x214] sm:$0xf]
          %v4257 = vld [vmem:[%s3 + $0x218] sm:$0xf]
          %v4258 = vld [vmem:[%s3 + $0x21c] sm:$0xf]
          %v4259 = vld [vmem:[%s3 + $0x220] sm:$0xf]
          %v4260 = vld [vmem:[%s3 + $0x224] sm:$0xf]
          %v4261 = vld [vmem:[%s3 + $0x228] sm:$0xf]
          %v4262 = vld [vmem:[%s3 + $0x22c] sm:$0xf]
          %v4263 = vld [vmem:[%s3 + $0x230] sm:$0xf]
          %v4264 = vld [vmem:[%s3 + $0x234] sm:$0xf]
          %v4265 = vld [vmem:[%s3 + $0x238] sm:$0xf]
          %v4266 = vld [vmem:[%s3 + $0x23c] sm:$0xf]
          %v4267 = vld [vmem:[%s3 + $0x240] sm:$0xf]
          %v4268 = vld [vmem:[%s3 + $0x244] sm:$0xf]
          %v4269 = vld [vmem:[%s3 + $0x248] sm:$0xf]
          %v4270 = vld [vmem:[%s3 + $0x24c] sm:$0xf]
          %v4271 = vld [vmem:[%s3 + $0x250] sm:$0xf]
          %v4272 = vld [vmem:[%s3 + $0x254] sm:$0xf]
          %v4273 = vld [vmem:[%s3 + $0x258] sm:$0xf]
          %v4274 = vld [vmem:[%s3 + $0x25c] sm:$0xf]
          %v4275 = vld [vmem:[%s3 + $0x260] sm:$0xf]
          %v4276 = vld [vmem:[%s3 + $0x264] sm:$0xf]
          %v4277 = vld [vmem:[%s3 + $0x268] sm:$0xf]
          %v4278 = vld [vmem:[%s3 + $0x26c] sm:$0xf]
          %v4279 = vld [vmem:[%s3 + $0x270] sm:$0xf]
          %v4280 = vld [vmem:[%s3 + $0x274] sm:$0xf]
          %v4281 = vld [vmem:[%s3 + $0x278] sm:$0xf]
          %v4282 = vld [vmem:[%s3 + $0x27c] sm:$0xf]
          %v4283 = vld [vmem:[%s4] sm:$0x1]
          %v4444 = vunpack.c.l.b16 %v4123
          %v4445 = vunpack.c.l.b16 %v4124
          %v4446 = vunpack.c.l.b16 %v4125
          %v4447 = vunpack.c.l.b16 %v4126
          %v4448 = vunpack.c.l.b16 %v4127
          %v4449 = vunpack.c.l.b16 %v4128
          %v4450 = vunpack.c.l.b16 %v4129
          %v4451 = vunpack.c.l.b16 %v4130
          %v4452 = vunpack.c.l.b16 %v4131
          %v4453 = vunpack.c.l.b16 %v4132
          %v4454 = vunpack.c.l.b16 %v4133
          %v4455 = vunpack.c.l.b16 %v4134
          %v4456 = vunpack.c.l.b16 %v4135
          %v4457 = vunpack.c.l.b16 %v4136
          %v4458 = vunpack.c.l.b16 %v4137
          %v4459 = vunpack.c.l.b16 %v4138
          %v4460 = vunpack.c.l.b16 %v4139
          %v4461 = vunpack.c.l.b16 %v4140
          %v4462 = vunpack.c.l.b16 %v4141
          %v4463 = vunpack.c.l.b16 %v4142
          %v4464 = vunpack.c.l.b16 %v4143
          %v4465 = vunpack.c.l.b16 %v4144
          %v4466 = vunpack.c.l.b16 %v4145
          %v4467 = vunpack.c.l.b16 %v4146
          %v4468 = vunpack.c.l.b16 %v4147
          %v4469 = vunpack.c.l.b16 %v4148
          %v4470 = vunpack.c.l.b16 %v4149
          %v4471 = vunpack.c.l.b16 %v4150
          %v4472 = vunpack.c.l.b16 %v4151
          %v4473 = vunpack.c.l.b16 %v4152
          %v4474 = vunpack.c.l.b16 %v4153
          %v4475 = vunpack.c.l.b16 %v4154
          %v4476 = vunpack.c.l.b16 %v4155
          %v4477 = vunpack.c.l.b16 %v4156
          %v4478 = vunpack.c.l.b16 %v4157
          %v4479 = vunpack.c.l.b16 %v4158
          %v4480 = vunpack.c.l.b16 %v4159
          %v4481 = vunpack.c.l.b16 %v4160
          %v4482 = vunpack.c.l.b16 %v4161
          %v4483 = vunpack.c.l.b16 %v4162
          %v4484 = vunpack.c.l.b16 %v4163
          %v4485 = vunpack.c.l.b16 %v4164
          %v4486 = vunpack.c.l.b16 %v4165
          %v4487 = vunpack.c.l.b16 %v4166
          %v4488 = vunpack.c.l.b16 %v4167
          %v4489 = vunpack.c.l.b16 %v4168
          %v4490 = vunpack.c.l.b16 %v4169
          %v4491 = vunpack.c.l.b16 %v4170
          %v4492 = vunpack.c.l.b16 %v4171
          %v4493 = vunpack.c.l.b16 %v4172
          %v4494 = vunpack.c.l.b16 %v4173
          %v4495 = vunpack.c.l.b16 %v4174
          %v4496 = vunpack.c.l.b16 %v4175
          %v4497 = vunpack.c.l.b16 %v4176
          %v4498 = vunpack.c.l.b16 %v4177
          %v4499 = vunpack.c.l.b16 %v4178
          %v4500 = vunpack.c.l.b16 %v4179
          %v4501 = vunpack.c.l.b16 %v4180
          %v4502 = vunpack.c.l.b16 %v4181
          %v4503 = vunpack.c.l.b16 %v4182
          %v4504 = vunpack.c.l.b16 %v4183
          %v4505 = vunpack.c.l.b16 %v4184
          %v4506 = vunpack.c.l.b16 %v4185
          %v4507 = vunpack.c.l.b16 %v4186
          %v4508 = vunpack.c.l.b16 %v4187
          %v4509 = vunpack.c.l.b16 %v4188
          %v4510 = vunpack.c.l.b16 %v4189
          %v4511 = vunpack.c.l.b16 %v4190
          %v4512 = vunpack.c.l.b16 %v4191
          %v4513 = vunpack.c.l.b16 %v4192
          %v4514 = vunpack.c.l.b16 %v4193
          %v4515 = vunpack.c.l.b16 %v4194
          %v4516 = vunpack.c.l.b16 %v4195
          %v4517 = vunpack.c.l.b16 %v4196
          %v4518 = vunpack.c.l.b16 %v4197
          %v4519 = vunpack.c.l.b16 %v4198
          %v4520 = vunpack.c.l.b16 %v4199
          %v4521 = vunpack.c.l.b16 %v4200
          %v4522 = vunpack.c.l.b16 %v4201
          %v4523 = vunpack.c.l.b16 %v4202
          %v4524 = vunpack.c.l.b16 %v4203
          %v4525 = vunpack.c.l.b16 %v4204
          %v4526 = vunpack.c.l.b16 %v4205
          %v4527 = vunpack.c.l.b16 %v4206
          %v4528 = vunpack.c.l.b16 %v4207
          %v4529 = vunpack.c.l.b16 %v4208
          %v4530 = vunpack.c.l.b16 %v4209
          %v4531 = vunpack.c.l.b16 %v4210
          %v4532 = vunpack.c.l.b16 %v4211
          %v4533 = vunpack.c.l.b16 %v4212
          %v4534 = vunpack.c.l.b16 %v4213
          %v4535 = vunpack.c.l.b16 %v4214
          %v4536 = vunpack.c.l.b16 %v4215
          %v4537 = vunpack.c.l.b16 %v4216
          %v4538 = vunpack.c.l.b16 %v4217
          %v4539 = vunpack.c.l.b16 %v4218
          %v4540 = vunpack.c.l.b16 %v4219
          %v4541 = vunpack.c.l.b16 %v4220
          %v4542 = vunpack.c.l.b16 %v4221
          %v4543 = vunpack.c.l.b16 %v4222
          %v4544 = vunpack.c.l.b16 %v4223
          %v4545 = vunpack.c.l.b16 %v4224
          %v4546 = vunpack.c.l.b16 %v4225
          %v4547 = vunpack.c.l.b16 %v4226
          %v4548 = vunpack.c.l.b16 %v4227
          %v4549 = vunpack.c.l.b16 %v4228
          %v4550 = vunpack.c.l.b16 %v4229
          %v4551 = vunpack.c.l.b16 %v4230
          %v4552 = vunpack.c.l.b16 %v4231
          %v4553 = vunpack.c.l.b16 %v4232
          %v4554 = vunpack.c.l.b16 %v4233
          %v4555 = vunpack.c.l.b16 %v4234
          %v4556 = vunpack.c.l.b16 %v4235
          %v4557 = vunpack.c.l.b16 %v4236
          %v4558 = vunpack.c.l.b16 %v4237
          %v4559 = vunpack.c.l.b16 %v4238
          %v4560 = vunpack.c.l.b16 %v4239
          %v4561 = vunpack.c.l.b16 %v4240
          %v4562 = vunpack.c.l.b16 %v4241
          %v4563 = vunpack.c.l.b16 %v4242
          %v4564 = vunpack.c.l.b16 %v4243
          %v4565 = vunpack.c.l.b16 %v4244
          %v4566 = vunpack.c.l.b16 %v4245
          %v4567 = vunpack.c.l.b16 %v4246
          %v4568 = vunpack.c.l.b16 %v4247
          %v4569 = vunpack.c.l.b16 %v4248
          %v4570 = vunpack.c.l.b16 %v4249
          %v4571 = vunpack.c.l.b16 %v4250
          %v4572 = vunpack.c.l.b16 %v4251
          %v4573 = vunpack.c.l.b16 %v4252
          %v4574 = vunpack.c.l.b16 %v4253
          %v4575 = vunpack.c.l.b16 %v4254
          %v4576 = vunpack.c.l.b16 %v4255
          %v4577 = vunpack.c.l.b16 %v4256
          %v4578 = vunpack.c.l.b16 %v4257
          %v4579 = vunpack.c.l.b16 %v4258
          %v4580 = vunpack.c.l.b16 %v4259
          %v4581 = vunpack.c.l.b16 %v4260
          %v4582 = vunpack.c.l.b16 %v4261
          %v4583 = vunpack.c.l.b16 %v4262
          %v4584 = vunpack.c.l.b16 %v4263
          %v4585 = vunpack.c.l.b16 %v4264
          %v4586 = vunpack.c.l.b16 %v4265
          %v4587 = vunpack.c.l.b16 %v4266
          %v4588 = vunpack.c.l.b16 %v4267
          %v4589 = vunpack.c.l.b16 %v4268
          %v4590 = vunpack.c.l.b16 %v4269
          %v4591 = vunpack.c.l.b16 %v4270
          %v4592 = vunpack.c.l.b16 %v4271
          %v4593 = vunpack.c.l.b16 %v4272
          %v4594 = vunpack.c.l.b16 %v4273
          %v4595 = vunpack.c.l.b16 %v4274
          %v4596 = vunpack.c.l.b16 %v4275
          %v4597 = vunpack.c.l.b16 %v4276
          %v4598 = vunpack.c.l.b16 %v4277
          %v4599 = vunpack.c.l.b16 %v4278
          %v4600 = vunpack.c.l.b16 %v4279
          %v4601 = vunpack.c.l.b16 %v4280
          %v4602 = vunpack.c.l.b16 %v4281
          %v4603 = vunpack.c.l.b16 %v4282
          %v4604 = vpack.c.b16 %v4445, %v4444
          %v4605 = vpack.c.b16 %v4447, %v4446
          %v4606 = vpack.c.b16 %v4449, %v4448
          %v4607 = vpack.c.b16 %v4451, %v4450
          %v4608 = vpack.c.b16 %v4453, %v4452
          %v4609 = vpack.c.b16 %v4455, %v4454
          %v4610 = vpack.c.b16 %v4457, %v4456
          %v4611 = vpack.c.b16 %v4459, %v4458
          %v4612 = vpack.c.b16 %v4461, %v4460
          %v4613 = vpack.c.b16 %v4463, %v4462
          %v4614 = vpack.c.b16 %v4465, %v4464
          %v4615 = vpack.c.b16 %v4467, %v4466
          %v4616 = vpack.c.b16 %v4469, %v4468
          %v4617 = vpack.c.b16 %v4471, %v4470
          %v4618 = vpack.c.b16 %v4473, %v4472
          %v4619 = vpack.c.b16 %v4475, %v4474
          %v4620 = vpack.c.b16 %v4477, %v4476
          %v4621 = vpack.c.b16 %v4479, %v4478
          %v4622 = vpack.c.b16 %v4481, %v4480
          %v4623 = vpack.c.b16 %v4483, %v4482
          %v4624 = vpack.c.b16 %v4485, %v4484
          %v4625 = vpack.c.b16 %v4487, %v4486
          %v4626 = vpack.c.b16 %v4489, %v4488
          %v4627 = vpack.c.b16 %v4491, %v4490
          %v4628 = vpack.c.b16 %v4493, %v4492
          %v4629 = vpack.c.b16 %v4495, %v4494
          %v4630 = vpack.c.b16 %v4497, %v4496
          %v4631 = vpack.c.b16 %v4499, %v4498
          %v4632 = vpack.c.b16 %v4501, %v4500
          %v4633 = vpack.c.b16 %v4503, %v4502
          %v4634 = vpack.c.b16 %v4505, %v4504
          %v4635 = vpack.c.b16 %v4507, %v4506
          %v4636 = vpack.c.b16 %v4509, %v4508
          %v4637 = vpack.c.b16 %v4511, %v4510
          %v4638 = vpack.c.b16 %v4513, %v4512
          %v4639 = vpack.c.b16 %v4515, %v4514
          %v4640 = vpack.c.b16 %v4517, %v4516
          %v4641 = vpack.c.b16 %v4519, %v4518
          %v4642 = vpack.c.b16 %v4521, %v4520
          %v4643 = vpack.c.b16 %v4523, %v4522
          %v4644 = vpack.c.b16 %v4525, %v4524
          %v4645 = vpack.c.b16 %v4527, %v4526
          %v4646 = vpack.c.b16 %v4529, %v4528
          %v4647 = vpack.c.b16 %v4531, %v4530
          %v4648 = vpack.c.b16 %v4533, %v4532
          %v4649 = vpack.c.b16 %v4535, %v4534
          %v4650 = vpack.c.b16 %v4537, %v4536
          %v4651 = vpack.c.b16 %v4539, %v4538
          %v4652 = vpack.c.b16 %v4541, %v4540
          %v4653 = vpack.c.b16 %v4543, %v4542
          %v4654 = vpack.c.b16 %v4545, %v4544
          %v4655 = vpack.c.b16 %v4547, %v4546
          %v4656 = vpack.c.b16 %v4549, %v4548
          %v4657 = vpack.c.b16 %v4551, %v4550
          %v4658 = vpack.c.b16 %v4553, %v4552
          %v4659 = vpack.c.b16 %v4555, %v4554
          %v4660 = vpack.c.b16 %v4557, %v4556
          %v4661 = vpack.c.b16 %v4559, %v4558
          %v4662 = vpack.c.b16 %v4561, %v4560
          %v4663 = vpack.c.b16 %v4563, %v4562
          %v4664 = vpack.c.b16 %v4565, %v4564
          %v4665 = vpack.c.b16 %v4567, %v4566
          %v4666 = vpack.c.b16 %v4569, %v4568
          %v4667 = vpack.c.b16 %v4571, %v4570
          %v4668 = vpack.c.b16 %v4573, %v4572
          %v4669 = vpack.c.b16 %v4575, %v4574
          %v4670 = vpack.c.b16 %v4577, %v4576
          %v4671 = vpack.c.b16 %v4579, %v4578
          %v4672 = vpack.c.b16 %v4581, %v4580
          %v4673 = vpack.c.b16 %v4583, %v4582
          %v4674 = vpack.c.b16 %v4585, %v4584
          %v4675 = vpack.c.b16 %v4587, %v4586
          %v4676 = vpack.c.b16 %v4589, %v4588
          %v4677 = vpack.c.b16 %v4591, %v4590
          %v4678 = vpack.c.b16 %v4593, %v4592
          %v4679 = vpack.c.b16 %v4595, %v4594
          %v4680 = vpack.c.b16 %v4597, %v4596
          %v4681 = vpack.c.b16 %v4599, %v4598
          %v4682 = vpack.c.b16 %v4601, %v4600
          %v4683 = vpack.c.b16 %v4603, %v4602
          %4764 = vmatprep.subr.bf16.mxu0 0
          %4765 = vmatpush1.bf16.msra.mxu0 %v4604
          %4766 = vmatprep.subr.bf16.mxu0 0
          %4767 = vmatpush1.bf16.msra.mxu0 %v4605
          %4768 = vmatprep.subr.bf16.mxu0 0
          %4769 = vmatpush1.bf16.msra.mxu0 %v4606
          %4770 = vmatprep.subr.bf16.mxu0 0
          %4771 = vmatpush1.bf16.msra.mxu0 %v4607
          %4772 = vmatprep.subr.bf16.mxu0 0
          %4773 = vmatpush1.bf16.msra.mxu0 %v4608
          %4774 = vmatprep.subr.bf16.mxu0 0
          %4775 = vmatpush1.bf16.msra.mxu0 %v4609
          %4776 = vmatprep.subr.bf16.mxu0 0
          %4777 = vmatpush1.bf16.msra.mxu0 %v4610
          %4778 = vmatprep.subr.bf16.mxu0 0
          %4779 = vmatpush1.bf16.msra.mxu0 %v4611
          %4780 = vmatprep.subr.bf16.mxu0 0
          %4781 = vmatpush1.bf16.msra.mxu0 %v4612
          %4782 = vmatprep.subr.bf16.mxu0 0
          %4783 = vmatpush1.bf16.msra.mxu0 %v4613
          %4784 = vmatprep.subr.bf16.mxu0 0
          %4785 = vmatpush1.bf16.msra.mxu0 %v4614
          %4786 = vmatprep.subr.bf16.mxu0 0
          %4787 = vmatpush1.bf16.msra.mxu0 %v4615
          %4788 = vmatprep.subr.bf16.mxu0 0
          %4789 = vmatpush1.bf16.msra.mxu0 %v4616
          %4790 = vmatprep.subr.bf16.mxu0 0
          %4791 = vmatpush1.bf16.msra.mxu0 %v4617
          %4792 = vmatprep.subr.bf16.mxu0 0
          %4793 = vmatpush1.bf16.msra.mxu0 %v4618
          %4794 = vmatprep.subr.bf16.mxu0 0
          %4795 = vmatpush1.bf16.msra.mxu0 %v4619
          %4796 = vmatprep.mubr.bf16.mxu0 %v4114
          %4797 = vmatmul.mubr.bf16.gmra.mrb[0].mxu0 %v4113
          %v4798 = vpop.f32.mrb[0].mxu0
          %v4799 = vadd.f32 %v4283, %v4798
          %v4800 = vpop.f32.mrb[0].mxu0
          %v4801 = vpop.f32.mrb[0].mxu0
          %v4802 = vpop.f32.mrb[0].mxu0
          %4803 = vdwg.mxu0
          %4804 = vmatprep.subr.bf16.mxu0 0
          %4805 = vmatpush1.bf16.msra.mxu0 %v4620
          %4806 = vmatprep.subr.bf16.mxu0 0
          %4807 = vmatpush1.bf16.msra.mxu0 %v4621
          %4808 = vmatprep.subr.bf16.mxu0 0
          %4809 = vmatpush1.bf16.msra.mxu0 %v4622
          %4810 = vmatprep.subr.bf16.mxu0 0
          %4811 = vmatpush1.bf16.msra.mxu0 %v4623
          %4812 = vmatprep.subr.bf16.mxu0 0
          %4813 = vmatpush1.bf16.msra.mxu0 %v4624
          %4814 = vmatprep.subr.bf16.mxu0 0
          %4815 = vmatpush1.bf16.msra.mxu0 %v4625
          %4816 = vmatprep.subr.bf16.mxu0 0
          %4817 = vmatpush1.bf16.msra.mxu0 %v4626
          %4818 = vmatprep.subr.bf16.mxu0 0
          %4819 = vmatpush1.bf16.msra.mxu0 %v4627
          %4820 = vmatprep.subr.bf16.mxu0 0
          %4821 = vmatpush1.bf16.msra.mxu0 %v4628
          %4822 = vmatprep.subr.bf16.mxu0 0
          %4823 = vmatpush1.bf16.msra.mxu0 %v4629
          %4824 = vmatprep.subr.bf16.mxu0 0
          %4825 = vmatpush1.bf16.msra.mxu0 %v4630
          %4826 = vmatprep.subr.bf16.mxu0 0
          %4827 = vmatpush1.bf16.msra.mxu0 %v4631
          %4828 = vmatprep.subr.bf16.mxu0 0
          %4829 = vmatpush1.bf16.msra.mxu0 %v4632
          %4830 = vmatprep.subr.bf16.mxu0 0
          %4831 = vmatpush1.bf16.msra.mxu0 %v4633
          %4832 = vmatprep.subr.bf16.mxu0 0
          %4833 = vmatpush1.bf16.msra.mxu0 %v4634
          %4834 = vmatprep.subr.bf16.mxu0 0
          %4835 = vmatpush1.bf16.msra.mxu0 %v4635
          %4836 = vmatprep.mubr.bf16.mxu0 %v4116
          %4837 = vmatmul.mubr.bf16.gmra.mrb[0].mxu0 %v4115
          %v4838 = vpop.f32.mrb[0].mxu0
          %v4839 = vadd.f32 %v4799, %v4838
          %v4840 = vpop.f32.mrb[0].mxu0
          %v4841 = vpop.f32.mrb[0].mxu0
          %v4842 = vpop.f32.mrb[0].mxu0
          %4843 = vdwg.mxu0
          %4844 = vmatprep.subr.bf16.mxu0 0
          %4845 = vmatpush1.bf16.msra.mxu0 %v4636
          %4846 = vmatprep.subr.bf16.mxu0 0
          %4847 = vmatpush1.bf16.msra.mxu0 %v4637
          %4848 = vmatprep.subr.bf16.mxu0 0
          %4849 = vmatpush1.bf16.msra.mxu0 %v4638
          %4850 = vmatprep.subr.bf16.mxu0 0
          %4851 = vmatpush1.bf16.msra.mxu0 %v4639
          %4852 = vmatprep.subr.bf16.mxu0 0
          %4853 = vmatpush1.bf16.msra.mxu0 %v4640
          %4854 = vmatprep.subr.bf16.mxu0 0
          %4855 = vmatpush1.bf16.msra.mxu0 %v4641
          %4856 = vmatprep.subr.bf16.mxu0 0
          %4857 = vmatpush1.bf16.msra.mxu0 %v4642
          %4858 = vmatprep.subr.bf16.mxu0 0
          %4859 = vmatpush1.bf16.msra.mxu0 %v4643
          %4860 = vmatprep.subr.bf16.mxu0 0
          %4861 = vmatpush1.bf16.msra.mxu0 %v4644
          %4862 = vmatprep.subr.bf16.mxu0 0
          %4863 = vmatpush1.bf16.msra.mxu0 %v4645
          %4864 = vmatprep.subr.bf16.mxu0 0
          %4865 = vmatpush1.bf16.msra.mxu0 %v4646
          %4866 = vmatprep.subr.bf16.mxu0 0
          %4867 = vmatpush1.bf16.msra.mxu0 %v4647
          %4868 = vmatprep.subr.bf16.mxu0 0
          %4869 = vmatpush1.bf16.msra.mxu0 %v4648
          %4870 = vmatprep.subr.bf16.mxu0 0
          %4871 = vmatpush1.bf16.msra.mxu0 %v4649
          %4872 = vmatprep.subr.bf16.mxu0 0
          %4873 = vmatpush1.bf16.msra.mxu0 %v4650
          %4874 = vmatprep.subr.bf16.mxu0 0
          %4875 = vmatpush1.bf16.msra.mxu0 %v4651
          %4876 = vmatprep.mubr.bf16.mxu0 %v4118
          %4877 = vmatmul.mubr.bf16.gmra.mrb[0].mxu0 %v4117
          %v4878 = vpop.f32.mrb[0].mxu0
          %v4879 = vadd.f32 %v4839, %v4878
          %v4880 = vpop.f32.mrb[0].mxu0
          %v4881 = vpop.f32.mrb[0].mxu0
          %v4882 = vpop.f32.mrb[0].mxu0
          %4883 = vdwg.mxu0
          %4884 = vmatprep.subr.bf16.mxu0 0
          %4885 = vmatpush1.bf16.msra.mxu0 %v4652
          %4886 = vmatprep.subr.bf16.mxu0 0
          %4887 = vmatpush1.bf16.msra.mxu0 %v4653
          %4888 = vmatprep.subr.bf16.mxu0 0
          %4889 = vmatpush1.bf16.msra.mxu0 %v4654
          %4890 = vmatprep.subr.bf16.mxu0 0
          %4891 = vmatpush1.bf16.msra.mxu0 %v4655
          %4892 = vmatprep.subr.bf16.mxu0 0
          %4893 = vmatpush1.bf16.msra.mxu0 %v4656
          %4894 = vmatprep.subr.bf16.mxu0 0
          %4895 = vmatpush1.bf16.msra.mxu0 %v4657
          %4896 = vmatprep.subr.bf16.mxu0 0
          %4897 = vmatpush1.bf16.msra.mxu0 %v4658
          %4898 = vmatprep.subr.bf16.mxu0 0
          %4899 = vmatpush1.bf16.msra.mxu0 %v4659
          %4900 = vmatprep.subr.bf16.mxu0 0
          %4901 = vmatpush1.bf16.msra.mxu0 %v4660
          %4902 = vmatprep.subr.bf16.mxu0 0
          %4903 = vmatpush1.bf16.msra.mxu0 %v4661
          %4904 = vmatprep.subr.bf16.mxu0 0
          %4905 = vmatpush1.bf16.msra.mxu0 %v4662
          %4906 = vmatprep.subr.bf16.mxu0 0
          %4907 = vmatpush1.bf16.msra.mxu0 %v4663
          %4908 = vmatprep.subr.bf16.mxu0 0
          %4909 = vmatpush1.bf16.msra.mxu0 %v4664
          %4910 = vmatprep.subr.bf16.mxu0 0
          %4911 = vmatpush1.bf16.msra.mxu0 %v4665
          %4912 = vmatprep.subr.bf16.mxu0 0
          %4913 = vmatpush1.bf16.msra.mxu0 %v4666
          %4914 = vmatprep.subr.bf16.mxu0 0
          %4915 = vmatpush1.bf16.msra.mxu0 %v4667
          %4916 = vmatprep.mubr.bf16.mxu0 %v4120
          %4917 = vmatmul.mubr.bf16.gmra.mrb[0].mxu0 %v4119
          %v4918 = vpop.f32.mrb[0].mxu0
          %v4919 = vadd.f32 %v4879, %v4918
          %v4920 = vpop.f32.mrb[0].mxu0
          %v4921 = vpop.f32.mrb[0].mxu0
          %v4922 = vpop.f32.mrb[0].mxu0
          %4923 = vdwg.mxu0
          %4924 = vmatprep.subr.bf16.mxu0 0
          %4925 = vmatpush1.bf16.msra.mxu0 %v4668
          %4926 = vmatprep.subr.bf16.mxu0 0
          %4927 = vmatpush1.bf16.msra.mxu0 %v4669
          %4928 = vmatprep.subr.bf16.mxu0 0
          %4929 = vmatpush1.bf16.msra.mxu0 %v4670
          %4930 = vmatprep.subr.bf16.mxu0 0
          %4931 = vmatpush1.bf16.msra.mxu0 %v4671
          %4932 = vmatprep.subr.bf16.mxu0 0
          %4933 = vmatpush1.bf16.msra.mxu0 %v4672
          %4934 = vmatprep.subr.bf16.mxu0 0
          %4935 = vmatpush1.bf16.msra.mxu0 %v4673
          %4936 = vmatprep.subr.bf16.mxu0 0
          %4937 = vmatpush1.bf16.msra.mxu0 %v4674
          %4938 = vmatprep.subr.bf16.mxu0 0
          %4939 = vmatpush1.bf16.msra.mxu0 %v4675
          %4940 = vmatprep.subr.bf16.mxu0 0
          %4941 = vmatpush1.bf16.msra.mxu0 %v4676
          %4942 = vmatprep.subr.bf16.mxu0 0
          %4943 = vmatpush1.bf16.msra.mxu0 %v4677
          %4944 = vmatprep.subr.bf16.mxu0 0
          %4945 = vmatpush1.bf16.msra.mxu0 %v4678
          %4946 = vmatprep.subr.bf16.mxu0 0
          %4947 = vmatpush1.bf16.msra.mxu0 %v4679
          %4948 = vmatprep.subr.bf16.mxu0 0
          %4949 = vmatpush1.bf16.msra.mxu0 %v4680
          %4950 = vmatprep.subr.bf16.mxu0 0
          %4951 = vmatpush1.bf16.msra.mxu0 %v4681
          %4952 = vmatprep.subr.bf16.mxu0 0
          %4953 = vmatpush1.bf16.msra.mxu0 %v4682
          %4954 = vmatprep.subr.bf16.mxu0 0
          %4955 = vmatpush1.bf16.msra.mxu0 %v4683
          %4956 = vmatprep.mubr.bf16.mxu0 %v4122
          %4957 = vmatmul.mubr.bf16.gmra.mrb[0].mxu0 %v4121
          %v4958 = vpop.f32.mrb[0].mxu0
          %v4959 = vadd.f32 %v4919, %v4958
          %v4960 = vpop.f32.mrb[0].mxu0
          %v4961 = vpop.f32.mrb[0].mxu0
          %v4962 = vpop.f32.mrb[0].mxu0
          %4963 = vdwg.mxu0
          %vm4964 = vcmask 57344
          %4965 = vst.msk [vmem:[%s239] sm:$0x1] %vm4964, %v4959
        $region48: #{tpu_custom_call.1} parent=39 // pred_fallthru
          _
        %s4966 = sand.u32 %s151, 1
        %s4967 = scalar_lea.sflag [#allocation4], %s4966
        %s4968 = sand.u32 %s151, 1
        %s4969 = scalar_lea.vmem [#allocation3], %s4968
        // Predicated region
        $region49: #{tpu_custom_call.1} parent=39 // pred_check
          %p4970 = pneg %p161
        $region50: #{tpu_custom_call.1} parent=39 // pred_check_branch
          %4972 = sbr.rel (%p4970) target = $region52
        $region51: #{tpu_custom_call.1} parent=39 // pred_region
          %s4974 = ssub.s32 16, 16
          %4975 = vsyncadd %s4967, %s4974
          %s4976 = smul.addr %s23, 16
          %s4977 = scalar_lea.hbm %s5, %s4976
          %s4979 = sshll.u32 %s4969, 4
          %s4980 = int_to_ptr.vmem [resolvable:$true] %s4979
          %4982 = dma.vmem_to_hbm [thread:$0]  %s4980, 16, %s4977, %s4967
        $region52: #{tpu_custom_call.1} parent=39 // pred_fallthru
          _
      $region40: #{tpu_custom_call.1} parent=5 // pred_fallthru
        _
      %p4983 = scmp.le.s32.totalorder 2, %s14
      // Predicated region
      $region53: #{tpu_custom_call.1} parent=5 // pred_check
        %p4984 = pneg %p4983
      $region54: #{tpu_custom_call.1} parent=5 // pred_check_branch
        %4986 = sbr.rel (%p4984) target = $region56
      $region55: #{tpu_custom_call.1} parent=5 // pred_region
        %s4987 = ssub.s32 %s14, 2
        // Predicated region
        $region57: #{tpu_custom_call.1} parent=55 // pred_check
          %p4988 = pneg %p167
        $region58: #{tpu_custom_call.1} parent=55 // pred_check_branch
          %4990 = sbr.rel (%p4988) target = $region60
        $region59: #{tpu_custom_call.1} parent=55 // pred_region
          %s4991 = sand.u32 %s152, 1
          %s4992 = scalar_lea.sflag [#allocation4], %s4991
          %s4993 = sand.u32 %s152, 1
          %s4994 = scalar_lea.vmem [#allocation3], %s4993
          %4995 = dma.done %s4992, 16
        $region60: #{tpu_custom_call.1} parent=55 // pred_fallthru
          _
      $region56: #{tpu_custom_call.1} parent=5 // pred_fallthru
        _
    $region6: #{tpu_custom_call.1} parent=1 // loop_footer
      %s18 = sadd.s32 1, %s14
    $region7: #{tpu_custom_call.1} parent=1 // loop_footer_branch
      %13 = sbr.rel target = $region3
    $region8: #{tpu_custom_call.1} parent=1 // loop_exit
      _
    %4996 = vsyncpa [#allocation4], 1
    %s4997 = scalar_lea.sflag [#allocation4], 1
    %4998 = vsyncpa %s4997, 1

</llo_original>
